<compile_context>
chip_gen: v5e
topology: v5e:2x2
jax: 0.10.0
libtpu: 0.0.40
codegen_flags: <defaults>
</compile_context>

<pallas_src>
import math

import jax
import jax.numpy as jnp
from jax.experimental import pallas as pl
from jax.experimental.pallas import tpu as pltpu

_BN_EPS = 1e-5
_TAPS = [(dy, dx) for dy in range(3) for dx in range(3)]


# ----------------------------------------------------------------------------
# Fused BasicBlock kernel
# ----------------------------------------------------------------------------

def _make_block_kernel(H, W, Cin, planes, stride, has_downsample):
    Ho, Wo = H // stride, W // stride
    M = Ho * Wo

    def _tap(x_ref, dy, dx):
        # Contiguous slice giving the (dy, dx) conv tap for every output pixel.
        if stride == 1:
            return x_ref[0, dy:dy + Ho, dx:dx + Wo, :]
        p = (dy % 2) * 2 + (dx % 2)          # parity phase of padded input
        r0, c0 = dy // 2, dx // 2
        return x_ref[p, r0:r0 + Ho, c0:c0 + Wo, :]

    def _residual_src(x_ref):
        if stride == 1:
            return x_ref[0, 1:H + 1, 1:W + 1, :]      # interior == x
        return x_ref[3, 0:Ho, 0:Wo, :]                # phase (1,1) == x[::2, ::2]

    def _body(x_ref, w1_ref, s1_ref, b1_ref, w2_ref, s2_ref, b2_ref,
              wd_ref, sd_ref, bd_ref, o_ref, h1p_ref):
        # ---- conv1 (3x3, stride) as 9 accumulated bf16 MXU matmuls, bn1+relu
        acc1 = None
        for t, (dy, dx) in enumerate(_TAPS):
            lhs = _tap(x_ref, dy, dx).reshape(M, Cin).astype(jnp.bfloat16)
            d = jnp.dot(lhs, w1_ref[t], preferred_element_type=jnp.float32)
            acc1 = d if acc1 is None else acc1 + d
        h1 = jnp.maximum(acc1 * s1_ref[...] + b1_ref[...], 0.0)       # (M, P) f32

        # ---- zero-pad h1 into VMEM scratch (stays on-chip, no HBM round trip)
        h1p_ref[...] = jnp.zeros_like(h1p_ref)
        h1p_ref[1:Ho + 1, 1:Wo + 1, :] = h1.reshape(Ho, Wo, planes)

        # ---- conv2 (3x3, stride 1) + bn2
        acc2 = None
        for t, (dy, dx) in enumerate(_TAPS):
            lhs = h1p_ref[dy:dy + Ho, dx:dx + Wo, :].reshape(M, planes)
            d = jnp.dot(lhs.astype(jnp.bfloat16), w2_ref[t],
                        preferred_element_type=jnp.float32)
            acc2 = d if acc2 is None else acc2 + d
        out = acc2 * s2_ref[...] + b2_ref[...]

        # ---- residual (identity or fused 1x1-conv + BN downsample) + relu
        res_src = _residual_src(x_ref).reshape(M, Cin)
        if has_downsample:
            r = jnp.dot(res_src.astype(jnp.bfloat16), wd_ref[...],
                        preferred_element_type=jnp.float32)
            res = r * sd_ref[...] + bd_ref[...]
        else:
            res = res_src                       # identity (Cin == planes)
        o_ref[0] = jnp.maximum(out + res, 0.0)

    if has_downsample:
        return _body

    def _body_no_ds(x_ref, w1_ref, s1_ref, b1_ref, w2_ref, s2_ref, b2_ref,
                    o_ref, h1p_ref):
        return _body(x_ref, w1_ref, s1_ref, b1_ref, w2_ref, s2_ref, b2_ref,
                     None, None, None, o_ref, h1p_ref)

    return _body_no_ds


def basic_block_forward(x_nchw, params):
    """BasicBlock forward. x_nchw: (N, Cin, H, W) f32 -> (N, planes, Ho, Wo)."""
    stride = params["stride"]
    has_ds = params["downsample"] is not None
    x = jnp.transpose(x_nchw, (0, 2, 3, 1)).astype(jnp.float32)     # NHWC
    N, H, W, Cin = x.shape
    planes = params["conv1"].shape[-1]
    assert H % stride == 0 and W % stride == 0
    if not has_ds:
        assert stride == 1 and Cin == planes, "identity residual needs matching shapes"
    Ho, Wo = H // stride, W // stride
    M = Ho * Wo

    # One tiny 1-pixel halo pad in HBM; patch extraction is done in-kernel.
    xp = jnp.pad(x, ((0, 0), (1, 1), (1, 1), (0, 0)))
    if stride == 1:
        x_in = xp                                                    # (N, H+2, W+2, Cin)
        x_block = (1, H + 2, W + 2, Cin)
    else:
        # space-to-depth parity split -> all in-kernel tap slices are contiguous
        phases = [xp[:, ph::2, pw::2, :] for ph in (0, 1) for pw in (0, 1)]
        x_in = jnp.stack(phases, axis=1).reshape(N * 4, Ho + 1, Wo + 1, Cin)
        x_block = (4, Ho + 1, Wo + 1, Cin)

    const2 = lambda n: (0, 0)
    const3 = lambda n: (0, 0, 0)
    in_specs = [
        pl.BlockSpec(x_block, lambda n: (n, 0, 0, 0)),
        pl.BlockSpec((9, Cin, planes), const3),
        pl.BlockSpec((1, planes), const2),
        pl.BlockSpec((1, planes), const2),
        pl.BlockSpec((9, planes, planes), const3),
        pl.BlockSpec((1, planes), const2),
        pl.BlockSpec((1, planes), const2),
    ]
    inputs = [x_in, params["conv1"], params["bn1_scale"], params["bn1_bias"],
              params["conv2"], params["bn2_scale"], params["bn2_bias"]]
    if has_ds:
        ds = params["downsample"]
        in_specs += [pl.BlockSpec((Cin, planes), const2),
                     pl.BlockSpec((1, planes), const2),
                     pl.BlockSpec((1, planes), const2)]
        inputs += [ds["conv"], ds["bn_scale"], ds["bn_bias"]]

    kernel = _make_block_kernel(H, W, Cin, planes, stride, has_ds)
    out = pl.pallas_call(
        kernel,
        out_shape=jax.ShapeDtypeStruct((N, M, planes), jnp.float32),
        grid=(N,),
        in_specs=in_specs,
        out_specs=pl.BlockSpec((1, M, planes), lambda n: (n, 0, 0)),
        scratch_shapes=[pltpu.VMEM((Ho + 2, Wo + 2, planes), jnp.float32)],
        compiler_params=pltpu.CompilerParams(
            dimension_semantics=("parallel",),
            vmem_limit_bytes=64 * 1024 * 1024),
    )(*inputs)

    return jnp.transpose(out.reshape(N, Ho, Wo, planes), (0, 3, 1, 2))   # NCHW


# ----------------------------------------------------------------------------
# Parameter construction (mirrors the PyTorch module init; BN folded to affine)
# ----------------------------------------------------------------------------

def _he_conv(key, cin, cout, ksz):
    n = ksz * ksz * cout
    return jax.random.normal(key, (cout, cin, ksz, ksz), jnp.float32) * math.sqrt(2.0 / n)


def _rand_bn(key, c):
    k1, k2, k3, k4 = jax.random.split(key, 4)
    gamma = jax.random.uniform(k1, (c,), jnp.float32, 0.5, 1.5)
    beta = 0.1 * jax.random.normal(k2, (c,), jnp.float32)
    mean = 0.1 * jax.random.normal(k3, (c,), jnp.float32)
    var = jax.random.uniform(k4, (c,), jnp.float32, 0.5, 1.5)
    scale = gamma / jnp.sqrt(var + _BN_EPS)
    bias = beta - mean * scale
    return scale, bias


def make_basicblock_params(key, inplanes, planes, stride):
    ks = jax.random.split(key, 6)
    w1 = _he_conv(ks[0], inplanes, planes, 3)
    w2 = _he_conv(ks[1], planes, planes, 3)
    s1, b1 = _rand_bn(ks[2], planes)
    s2, b2 = _rand_bn(ks[3], planes)
    p = {
        "stride": stride,
        # (O, I, kh, kw) -> (kh*3+kw, I, O) matching in-kernel tap order; bf16 for MXU
        "conv1": jnp.transpose(w1, (2, 3, 1, 0)).reshape(9, inplanes, planes).astype(jnp.bfloat16),
        "conv2": jnp.transpose(w2, (2, 3, 1, 0)).reshape(9, planes, planes).astype(jnp.bfloat16),
        "bn1_scale": s1.reshape(1, planes), "bn1_bias": b1.reshape(1, planes),
        "bn2_scale": s2.reshape(1, planes), "bn2_bias": b2.reshape(1, planes),
        "downsample": None,
        "_ref": {"w1": w1, "w2": w2, "s1": s1, "b1": b1, "s2": s2, "b2": b2},
    }
    if stride != 1 or inplanes != planes:
        wd = _he_conv(ks[4], inplanes, planes, 1)
        sd, bd = _rand_bn(ks[5], planes)
        p["downsample"] = {
            "conv": jnp.transpose(wd[:, :, 0, 0], (1, 0)).astype(jnp.bfloat16),
            "bn_scale": sd.reshape(1, planes), "bn_bias": bd.reshape(1, planes),
        }
        p["_ref"].update({"wd": wd, "sd": sd, "bd": bd})
    return p


# ----------------------------------------------------------------------------
# Pure-JAX reference (f32) for validation
# ----------------------------------------------------------------------------

def _conv_ref(x_nhwc, w_oihw, stride, pad):
    return jax.lax.conv_general_dilated(
        x_nhwc, jnp.transpose(w_oihw, (2, 3, 1, 0)),
        window_strides=(stride, stride),
        padding=((pad, pad), (pad, pad)),
        dimension_numbers=("NHWC", "HWIO", "NHWC"))


def basic_block_reference(x_nchw, params):
    r, stride = params["_ref"], params["stride"]
    x = jnp.transpose(x_nchw, (0, 2, 3, 1)).astype(jnp.float32)
    out = _conv_ref(x, r["w1"], stride, 1)
    out = jnp.maximum(out * r["s1"] + r["b1"], 0.0)
    out = _conv_ref(out, r["w2"], 1, 1)
    out = out * r["s2"] + r["b2"]
    if params["downsample"] is not None:
        res = _conv_ref(x, r["wd"], stride, 0) * r["sd"] + r["bd"]
    else:
        res = x
    out = jnp.maximum(out + res, 0.0)
    return jnp.transpose(out, (0, 3, 1, 2))


# ----------------------------------------------------------------------------

if __name__ == "__main__":
    key = jax.random.PRNGKey(0)
    kx, kA, kB = jax.random.split(key, 3)
    x = jax.random.normal(kx, (2, 16, 16, 16), jnp.float32)   # NCHW, small

    # Block A: identity shortcut (inplanes == planes, stride 1)
    pA = make_basicblock_params(kA, 16, 16, 1)
    yA = jax.block_until_ready(basic_block_forward(x, pA))
    refA = basic_block_reference(x, pA)
    assert yA.shape == (2, 16, 16, 16) and yA.dtype == jnp.float32
    assert bool(jnp.all(jnp.isfinite(yA)))
    errA = float(jnp.max(jnp.abs(yA - refA)))

    # Block B: stride-2 block with 1x1-conv + BN downsample (16 -> 32 channels)
    pB = make_basicblock_params(kB, 16, 32, 2)
    yB = jax.block_until_ready(basic_block_forward(x, pB))
    refB = basic_block_reference(x, pB)
    assert yB.shape == (2, 32, 8, 8) and yB.dtype == jnp.float32
    assert bool(jnp.all(jnp.isfinite(yB)))
    errB = float(jnp.max(jnp.abs(yB - refB)))

    # bf16 MXU inputs with f32 accumulation -> small numeric difference vs f32 ref
    assert errA < 0.2 and errB < 0.2, (errA, errB)
    print("KERNEL_OK")
</pallas_src>

<mosaic_0001>
module attributes {stable_mosaic.version = 11 : i64} {
  func.func @_body_no_ds(%arg0: i32, %arg1: memref<1x18x18x16xf32, #tpu.memory_space<vmem>>, %arg2: memref<9x16x16xbf16, #tpu.memory_space<vmem>>, %arg3: memref<1x16xf32, #tpu.memory_space<vmem>>, %arg4: memref<1x16xf32, #tpu.memory_space<vmem>>, %arg5: memref<9x16x16xbf16, #tpu.memory_space<vmem>>, %arg6: memref<1x16xf32, #tpu.memory_space<vmem>>, %arg7: memref<1x16xf32, #tpu.memory_space<vmem>>, %arg8: memref<1x256x16xf32, #tpu.memory_space<vmem>>, %arg9: memref<18x18x16xf32, #tpu.memory_space<vmem>>) attributes {dimension_semantics = [#tpu.dimension_semantics<parallel>], iteration_bounds = array<i64: 2>, scalar_prefetch = 0 : i64, scratch_operands = 1 : i64, tpu.core_type = #tpu.core_type<tc>, window_params = [{transform_indices = @transform_0, window_bounds = array<i64: 1, 18, 18, 16>}, {pipeline_mode = #tpu.pipeline_mode<synchronous>, transform_indices = @transform_1, window_bounds = array<i64: 9, 16, 16>}, {pipeline_mode = #tpu.pipeline_mode<synchronous>, transform_indices = @transform_2, window_bounds = array<i64: 1, 16>}, {pipeline_mode = #tpu.pipeline_mode<synchronous>, transform_indices = @transform_3, window_bounds = array<i64: 1, 16>}, {pipeline_mode = #tpu.pipeline_mode<synchronous>, transform_indices = @transform_4, window_bounds = array<i64: 9, 16, 16>}, {pipeline_mode = #tpu.pipeline_mode<synchronous>, transform_indices = @transform_5, window_bounds = array<i64: 1, 16>}, {pipeline_mode = #tpu.pipeline_mode<synchronous>, transform_indices = @transform_6, window_bounds = array<i64: 1, 16>}, {transform_indices = @transform_7, window_bounds = array<i64: 1, 256, 16>}]} {
    %c0 = arith.constant 0 : index
    %c0_0 = arith.constant 0 : index
    %c0_1 = arith.constant 0 : index
    %c0_2 = arith.constant 0 : index
    %0 = vector.load %arg1[%c0, %c0_0, %c0_1, %c0_2] : memref<1x18x18x16xf32, #tpu.memory_space<vmem>>, vector<1x16x16x16xf32>
    %1 = vector.shape_cast %0 : vector<1x16x16x16xf32> to vector<16x16x16xf32>
    %2 = vector.shape_cast %1 : vector<16x16x16xf32> to vector<256x16xf32>
    %3 = arith.truncf %2 : vector<256x16xf32> to vector<256x16xbf16>
    %c0_3 = arith.constant 0 : index
    %c0_4 = arith.constant 0 : index
    %c0_5 = arith.constant 0 : index
    %4 = vector.load %arg2[%c0_3, %c0_4, %c0_5] : memref<9x16x16xbf16, #tpu.memory_space<vmem>>, vector<1x16x16xbf16>
    %5 = vector.shape_cast %4 : vector<1x16x16xbf16> to vector<16x16xbf16>
    %cst = arith.constant dense<0.000000e+00> : vector<256x16xf32>
    %6 = tpu.matmul %3, %5, %cst {dimension_numbers = #tpu.dot_dimension_numbers<[1], [0], [0], [1], [0, 0, 1, 1], [], []>} : vector<256x16xbf16>, vector<16x16xbf16>, vector<256x16xf32> -> vector<256x16xf32>
    %c0_6 = arith.constant 0 : index
    %c0_7 = arith.constant 0 : index
    %c1 = arith.constant 1 : index
    %c0_8 = arith.constant 0 : index
    %7 = vector.load %arg1[%c0_6, %c0_7, %c1, %c0_8] : memref<1x18x18x16xf32, #tpu.memory_space<vmem>>, vector<1x16x16x16xf32>
    %8 = vector.shape_cast %7 : vector<1x16x16x16xf32> to vector<16x16x16xf32>
    %9 = vector.shape_cast %8 : vector<16x16x16xf32> to vector<256x16xf32>
    %10 = arith.truncf %9 : vector<256x16xf32> to vector<256x16xbf16>
    %c1_9 = arith.constant 1 : index
    %c0_10 = arith.constant 0 : index
    %c0_11 = arith.constant 0 : index
    %11 = vector.load %arg2[%c1_9, %c0_10, %c0_11] : memref<9x16x16xbf16, #tpu.memory_space<vmem>>, vector<1x16x16xbf16>
    %12 = vector.shape_cast %11 : vector<1x16x16xbf16> to vector<16x16xbf16>
    %cst_12 = arith.constant dense<0.000000e+00> : vector<256x16xf32>
    %13 = tpu.matmul %10, %12, %cst_12 {dimension_numbers = #tpu.dot_dimension_numbers<[1], [0], [0], [1], [0, 0, 1, 1], [], []>} : vector<256x16xbf16>, vector<16x16xbf16>, vector<256x16xf32> -> vector<256x16xf32>
    %14 = arith.addf %6, %13 : vector<256x16xf32>
    %c0_13 = arith.constant 0 : index
    %c0_14 = arith.constant 0 : index
    %c2 = arith.constant 2 : index
    %c0_15 = arith.constant 0 : index
    %15 = vector.load %arg1[%c0_13, %c0_14, %c2, %c0_15] : memref<1x18x18x16xf32, #tpu.memory_space<vmem>>, vector<1x16x16x16xf32>
    %16 = vector.shape_cast %15 : vector<1x16x16x16xf32> to vector<16x16x16xf32>
    %17 = vector.shape_cast %16 : vector<16x16x16xf32> to vector<256x16xf32>
    %18 = arith.truncf %17 : vector<256x16xf32> to vector<256x16xbf16>
    %c2_16 = arith.constant 2 : index
    %c0_17 = arith.constant 0 : index
    %c0_18 = arith.constant 0 : index
    %19 = vector.load %arg2[%c2_16, %c0_17, %c0_18] : memref<9x16x16xbf16, #tpu.memory_space<vmem>>, vector<1x16x16xbf16>
    %20 = vector.shape_cast %19 : vector<1x16x16xbf16> to vector<16x16xbf16>
    %cst_19 = arith.constant dense<0.000000e+00> : vector<256x16xf32>
    %21 = tpu.matmul %18, %20, %cst_19 {dimension_numbers = #tpu.dot_dimension_numbers<[1], [0], [0], [1], [0, 0, 1, 1], [], []>} : vector<256x16xbf16>, vector<16x16xbf16>, vector<256x16xf32> -> vector<256x16xf32>
    %22 = arith.addf %14, %21 : vector<256x16xf32>
    %c0_20 = arith.constant 0 : index
    %c1_21 = arith.constant 1 : index
    %c0_22 = arith.constant 0 : index
    %c0_23 = arith.constant 0 : index
    %23 = vector.load %arg1[%c0_20, %c1_21, %c0_22, %c0_23] : memref<1x18x18x16xf32, #tpu.memory_space<vmem>>, vector<1x16x16x16xf32>
    %24 = vector.shape_cast %23 : vector<1x16x16x16xf32> to vector<16x16x16xf32>
    %25 = vector.shape_cast %24 : vector<16x16x16xf32> to vector<256x16xf32>
    %26 = arith.truncf %25 : vector<256x16xf32> to vector<256x16xbf16>
    %c3 = arith.constant 3 : index
    %c0_24 = arith.constant 0 : index
    %c0_25 = arith.constant 0 : index
    %27 = vector.load %arg2[%c3, %c0_24, %c0_25] : memref<9x16x16xbf16, #tpu.memory_space<vmem>>, vector<1x16x16xbf16>
    %28 = vector.shape_cast %27 : vector<1x16x16xbf16> to vector<16x16xbf16>
    %cst_26 = arith.constant dense<0.000000e+00> : vector<256x16xf32>
    %29 = tpu.matmul %26, %28, %cst_26 {dimension_numbers = #tpu.dot_dimension_numbers<[1], [0], [0], [1], [0, 0, 1, 1], [], []>} : vector<256x16xbf16>, vector<16x16xbf16>, vector<256x16xf32> -> vector<256x16xf32>
    %30 = arith.addf %22, %29 : vector<256x16xf32>
    %c0_27 = arith.constant 0 : index
    %c1_28 = arith.constant 1 : index
    %c1_29 = arith.constant 1 : index
    %c0_30 = arith.constant 0 : index
    %31 = vector.load %arg1[%c0_27, %c1_28, %c1_29, %c0_30] : memref<1x18x18x16xf32, #tpu.memory_space<vmem>>, vector<1x16x16x16xf32>
    %32 = vector.shape_cast %31 : vector<1x16x16x16xf32> to vector<16x16x16xf32>
    %33 = vector.shape_cast %32 : vector<16x16x16xf32> to vector<256x16xf32>
    %34 = arith.truncf %33 : vector<256x16xf32> to vector<256x16xbf16>
    %c4 = arith.constant 4 : index
    %c0_31 = arith.constant 0 : index
    %c0_32 = arith.constant 0 : index
    %35 = vector.load %arg2[%c4, %c0_31, %c0_32] : memref<9x16x16xbf16, #tpu.memory_space<vmem>>, vector<1x16x16xbf16>
    %36 = vector.shape_cast %35 : vector<1x16x16xbf16> to vector<16x16xbf16>
    %cst_33 = arith.constant dense<0.000000e+00> : vector<256x16xf32>
    %37 = tpu.matmul %34, %36, %cst_33 {dimension_numbers = #tpu.dot_dimension_numbers<[1], [0], [0], [1], [0, 0, 1, 1], [], []>} : vector<256x16xbf16>, vector<16x16xbf16>, vector<256x16xf32> -> vector<256x16xf32>
    %38 = arith.addf %30, %37 : vector<256x16xf32>
    %c0_34 = arith.constant 0 : index
    %c1_35 = arith.constant 1 : index
    %c2_36 = arith.constant 2 : index
    %c0_37 = arith.constant 0 : index
    %39 = vector.load %arg1[%c0_34, %c1_35, %c2_36, %c0_37] : memref<1x18x18x16xf32, #tpu.memory_space<vmem>>, vector<1x16x16x16xf32>
    %40 = vector.shape_cast %39 : vector<1x16x16x16xf32> to vector<16x16x16xf32>
    %41 = vector.shape_cast %40 : vector<16x16x16xf32> to vector<256x16xf32>
    %42 = arith.truncf %41 : vector<256x16xf32> to vector<256x16xbf16>
    %c5 = arith.constant 5 : index
    %c0_38 = arith.constant 0 : index
    %c0_39 = arith.constant 0 : index
    %43 = vector.load %arg2[%c5, %c0_38, %c0_39] : memref<9x16x16xbf16, #tpu.memory_space<vmem>>, vector<1x16x16xbf16>
    %44 = vector.shape_cast %43 : vector<1x16x16xbf16> to vector<16x16xbf16>
    %cst_40 = arith.constant dense<0.000000e+00> : vector<256x16xf32>
    %45 = tpu.matmul %42, %44, %cst_40 {dimension_numbers = #tpu.dot_dimension_numbers<[1], [0], [0], [1], [0, 0, 1, 1], [], []>} : vector<256x16xbf16>, vector<16x16xbf16>, vector<256x16xf32> -> vector<256x16xf32>
    %46 = arith.addf %38, %45 : vector<256x16xf32>
    %c0_41 = arith.constant 0 : index
    %c2_42 = arith.constant 2 : index
    %c0_43 = arith.constant 0 : index
    %c0_44 = arith.constant 0 : index
    %47 = vector.load %arg1[%c0_41, %c2_42, %c0_43, %c0_44] : memref<1x18x18x16xf32, #tpu.memory_space<vmem>>, vector<1x16x16x16xf32>
    %48 = vector.shape_cast %47 : vector<1x16x16x16xf32> to vector<16x16x16xf32>
    %49 = vector.shape_cast %48 : vector<16x16x16xf32> to vector<256x16xf32>
    %50 = arith.truncf %49 : vector<256x16xf32> to vector<256x16xbf16>
    %c6 = arith.constant 6 : index
    %c0_45 = arith.constant 0 : index
    %c0_46 = arith.constant 0 : index
    %51 = vector.load %arg2[%c6, %c0_45, %c0_46] : memref<9x16x16xbf16, #tpu.memory_space<vmem>>, vector<1x16x16xbf16>
    %52 = vector.shape_cast %51 : vector<1x16x16xbf16> to vector<16x16xbf16>
    %cst_47 = arith.constant dense<0.000000e+00> : vector<256x16xf32>
    %53 = tpu.matmul %50, %52, %cst_47 {dimension_numbers = #tpu.dot_dimension_numbers<[1], [0], [0], [1], [0, 0, 1, 1], [], []>} : vector<256x16xbf16>, vector<16x16xbf16>, vector<256x16xf32> -> vector<256x16xf32>
    %54 = arith.addf %46, %53 : vector<256x16xf32>
    %c0_48 = arith.constant 0 : index
    %c2_49 = arith.constant 2 : index
    %c1_50 = arith.constant 1 : index
    %c0_51 = arith.constant 0 : index
    %55 = vector.load %arg1[%c0_48, %c2_49, %c1_50, %c0_51] : memref<1x18x18x16xf32, #tpu.memory_space<vmem>>, vector<1x16x16x16xf32>
    %56 = vector.shape_cast %55 : vector<1x16x16x16xf32> to vector<16x16x16xf32>
    %57 = vector.shape_cast %56 : vector<16x16x16xf32> to vector<256x16xf32>
    %58 = arith.truncf %57 : vector<256x16xf32> to vector<256x16xbf16>
    %c7 = arith.constant 7 : index
    %c0_52 = arith.constant 0 : index
    %c0_53 = arith.constant 0 : index
    %59 = vector.load %arg2[%c7, %c0_52, %c0_53] : memref<9x16x16xbf16, #tpu.memory_space<vmem>>, vector<1x16x16xbf16>
    %60 = vector.shape_cast %59 : vector<1x16x16xbf16> to vector<16x16xbf16>
    %cst_54 = arith.constant dense<0.000000e+00> : vector<256x16xf32>
    %61 = tpu.matmul %58, %60, %cst_54 {dimension_numbers = #tpu.dot_dimension_numbers<[1], [0], [0], [1], [0, 0, 1, 1], [], []>} : vector<256x16xbf16>, vector<16x16xbf16>, vector<256x16xf32> -> vector<256x16xf32>
    %62 = arith.addf %54, %61 : vector<256x16xf32>
    %c0_55 = arith.constant 0 : index
    %c2_56 = arith.constant 2 : index
    %c2_57 = arith.constant 2 : index
    %c0_58 = arith.constant 0 : index
    %63 = vector.load %arg1[%c0_55, %c2_56, %c2_57, %c0_58] : memref<1x18x18x16xf32, #tpu.memory_space<vmem>>, vector<1x16x16x16xf32>
    %64 = vector.shape_cast %63 : vector<1x16x16x16xf32> to vector<16x16x16xf32>
    %65 = vector.shape_cast %64 : vector<16x16x16xf32> to vector<256x16xf32>
    %66 = arith.truncf %65 : vector<256x16xf32> to vector<256x16xbf16>
    %c8 = arith.constant 8 : index
    %c0_59 = arith.constant 0 : index
    %c0_60 = arith.constant 0 : index
    %67 = vector.load %arg2[%c8, %c0_59, %c0_60] : memref<9x16x16xbf16, #tpu.memory_space<vmem>>, vector<1x16x16xbf16>
    %68 = vector.shape_cast %67 : vector<1x16x16xbf16> to vector<16x16xbf16>
    %cst_61 = arith.constant dense<0.000000e+00> : vector<256x16xf32>
    %69 = tpu.matmul %66, %68, %cst_61 {dimension_numbers = #tpu.dot_dimension_numbers<[1], [0], [0], [1], [0, 0, 1, 1], [], []>} : vector<256x16xbf16>, vector<16x16xbf16>, vector<256x16xf32> -> vector<256x16xf32>
    %70 = arith.addf %62, %69 : vector<256x16xf32>
    %c0_62 = arith.constant 0 : index
    %c0_63 = arith.constant 0 : index
    %71 = vector.load %arg3[%c0_62, %c0_63] : memref<1x16xf32, #tpu.memory_space<vmem>>, vector<1x16xf32>
    %72 = vector.broadcast %71 : vector<1x16xf32> to vector<256x16xf32>
    %73 = arith.mulf %70, %72 : vector<256x16xf32>
    %c0_64 = arith.constant 0 : index
    %c0_65 = arith.constant 0 : index
    %74 = vector.load %arg4[%c0_64, %c0_65] : memref<1x16xf32, #tpu.memory_space<vmem>>, vector<1x16xf32>
    %75 = vector.broadcast %74 : vector<1x16xf32> to vector<256x16xf32>
    %76 = arith.addf %73, %75 : vector<256x16xf32>
    %cst_66 = arith.constant 0.000000e+00 : f32
    %77 = vector.broadcast %cst_66 : f32 to vector<256x16xf32>
    %78 = arith.maximumf %76, %77 : vector<256x16xf32>
    %cst_67 = arith.constant 0.000000e+00 : f32
    %79 = vector.broadcast %cst_67 : f32 to vector<18x18x16xf32>
    %c0_68 = arith.constant 0 : index
    %c0_69 = arith.constant 0 : index
    %c0_70 = arith.constant 0 : index
    %80 = vector.load %arg9[%c0_68, %c0_69, %c0_70] : memref<18x18x16xf32, #tpu.memory_space<vmem>>, vector<18x18x16xf32>
    tpu.vector_store %arg9[%c0_68, %c0_69, %c0_70], %79 {strides = array<i32>} : memref<18x18x16xf32, #tpu.memory_space<vmem>>, vector<18x18x16xf32>,
    %81 = vector.shape_cast %78 : vector<256x16xf32> to vector<16x16x16xf32>
    %c1_71 = arith.constant 1 : index
    %c1_72 = arith.constant 1 : index
    %c0_73 = arith.constant 0 : index
    %82 = vector.load %arg9[%c1_71, %c1_72, %c0_73] : memref<18x18x16xf32, #tpu.memory_space<vmem>>, vector<16x16x16xf32>
    tpu.vector_store %arg9[%c1_71, %c1_72, %c0_73], %81 {strides = array<i32>} : memref<18x18x16xf32, #tpu.memory_space<vmem>>, vector<16x16x16xf32>,
    %c0_74 = arith.constant 0 : index
    %c0_75 = arith.constant 0 : index
    %c0_76 = arith.constant 0 : index
    %83 = vector.load %arg9[%c0_74, %c0_75, %c0_76] : memref<18x18x16xf32, #tpu.memory_space<vmem>>, vector<16x16x16xf32>
    %84 = vector.shape_cast %83 : vector<16x16x16xf32> to vector<256x16xf32>
    %85 = arith.truncf %84 : vector<256x16xf32> to vector<256x16xbf16>
    %c0_77 = arith.constant 0 : index
    %c0_78 = arith.constant 0 : index
    %c0_79 = arith.constant 0 : index
    %86 = vector.load %arg5[%c0_77, %c0_78, %c0_79] : memref<9x16x16xbf16, #tpu.memory_space<vmem>>, vector<1x16x16xbf16>
    %87 = vector.shape_cast %86 : vector<1x16x16xbf16> to vector<16x16xbf16>
    %cst_80 = arith.constant dense<0.000000e+00> : vector<256x16xf32>
    %88 = tpu.matmul %85, %87, %cst_80 {dimension_numbers = #tpu.dot_dimension_numbers<[1], [0], [0], [1], [0, 0, 1, 1], [], []>} : vector<256x16xbf16>, vector<16x16xbf16>, vector<256x16xf32> -> vector<256x16xf32>
    %c0_81 = arith.constant 0 : index
    %c1_82 = arith.constant 1 : index
    %c0_83 = arith.constant 0 : index
    %89 = vector.load %arg9[%c0_81, %c1_82, %c0_83] : memref<18x18x16xf32, #tpu.memory_space<vmem>>, vector<16x16x16xf32>
    %90 = vector.shape_cast %89 : vector<16x16x16xf32> to vector<256x16xf32>
    %91 = arith.truncf %90 : vector<256x16xf32> to vector<256x16xbf16>
    %c1_84 = arith.constant 1 : index
    %c0_85 = arith.constant 0 : index
    %c0_86 = arith.constant 0 : index
    %92 = vector.load %arg5[%c1_84, %c0_85, %c0_86] : memref<9x16x16xbf16, #tpu.memory_space<vmem>>, vector<1x16x16xbf16>
    %93 = vector.shape_cast %92 : vector<1x16x16xbf16> to vector<16x16xbf16>
    %cst_87 = arith.constant dense<0.000000e+00> : vector<256x16xf32>
    %94 = tpu.matmul %91, %93, %cst_87 {dimension_numbers = #tpu.dot_dimension_numbers<[1], [0], [0], [1], [0, 0, 1, 1], [], []>} : vector<256x16xbf16>, vector<16x16xbf16>, vector<256x16xf32> -> vector<256x16xf32>
    %95 = arith.addf %88, %94 : vector<256x16xf32>
    %c0_88 = arith.constant 0 : index
    %c2_89 = arith.constant 2 : index
    %c0_90 = arith.constant 0 : index
    %96 = vector.load %arg9[%c0_88, %c2_89, %c0_90] : memref<18x18x16xf32, #tpu.memory_space<vmem>>, vector<16x16x16xf32>
    %97 = vector.shape_cast %96 : vector<16x16x16xf32> to vector<256x16xf32>
    %98 = arith.truncf %97 : vector<256x16xf32> to vector<256x16xbf16>
    %c2_91 = arith.constant 2 : index
    %c0_92 = arith.constant 0 : index
    %c0_93 = arith.constant 0 : index
    %99 = vector.load %arg5[%c2_91, %c0_92, %c0_93] : memref<9x16x16xbf16, #tpu.memory_space<vmem>>, vector<1x16x16xbf16>
    %100 = vector.shape_cast %99 : vector<1x16x16xbf16> to vector<16x16xbf16>
    %cst_94 = arith.constant dense<0.000000e+00> : vector<256x16xf32>
    %101 = tpu.matmul %98, %100, %cst_94 {dimension_numbers = #tpu.dot_dimension_numbers<[1], [0], [0], [1], [0, 0, 1, 1], [], []>} : vector<256x16xbf16>, vector<16x16xbf16>, vector<256x16xf32> -> vector<256x16xf32>
    %102 = arith.addf %95, %101 : vector<256x16xf32>
    %c1_95 = arith.constant 1 : index
    %c0_96 = arith.constant 0 : index
    %c0_97 = arith.constant 0 : index
    %103 = vector.load %arg9[%c1_95, %c0_96, %c0_97] : memref<18x18x16xf32, #tpu.memory_space<vmem>>, vector<16x16x16xf32>
    %104 = vector.shape_cast %103 : vector<16x16x16xf32> to vector<256x16xf32>
    %105 = arith.truncf %104 : vector<256x16xf32> to vector<256x16xbf16>
    %c3_98 = arith.constant 3 : index
    %c0_99 = arith.constant 0 : index
    %c0_100 = arith.constant 0 : index
    %106 = vector.load %arg5[%c3_98, %c0_99, %c0_100] : memref<9x16x16xbf16, #tpu.memory_space<vmem>>, vector<1x16x16xbf16>
    %107 = vector.shape_cast %106 : vector<1x16x16xbf16> to vector<16x16xbf16>
    %cst_101 = arith.constant dense<0.000000e+00> : vector<256x16xf32>
    %108 = tpu.matmul %105, %107, %cst_101 {dimension_numbers = #tpu.dot_dimension_numbers<[1], [0], [0], [1], [0, 0, 1, 1], [], []>} : vector<256x16xbf16>, vector<16x16xbf16>, vector<256x16xf32> -> vector<256x16xf32>
    %109 = arith.addf %102, %108 : vector<256x16xf32>
    %c1_102 = arith.constant 1 : index
    %c1_103 = arith.constant 1 : index
    %c0_104 = arith.constant 0 : index
    %110 = vector.load %arg9[%c1_102, %c1_103, %c0_104] : memref<18x18x16xf32, #tpu.memory_space<vmem>>, vector<16x16x16xf32>
    %111 = vector.shape_cast %110 : vector<16x16x16xf32> to vector<256x16xf32>
    %112 = arith.truncf %111 : vector<256x16xf32> to vector<256x16xbf16>
    %c4_105 = arith.constant 4 : index
    %c0_106 = arith.constant 0 : index
    %c0_107 = arith.constant 0 : index
    %113 = vector.load %arg5[%c4_105, %c0_106, %c0_107] : memref<9x16x16xbf16, #tpu.memory_space<vmem>>, vector<1x16x16xbf16>
    %114 = vector.shape_cast %113 : vector<1x16x16xbf16> to vector<16x16xbf16>
    %cst_108 = arith.constant dense<0.000000e+00> : vector<256x16xf32>
    %115 = tpu.matmul %112, %114, %cst_108 {dimension_numbers = #tpu.dot_dimension_numbers<[1], [0], [0], [1], [0, 0, 1, 1], [], []>} : vector<256x16xbf16>, vector<16x16xbf16>, vector<256x16xf32> -> vector<256x16xf32>
    %116 = arith.addf %109, %115 : vector<256x16xf32>
    %c1_109 = arith.constant 1 : index
    %c2_110 = arith.constant 2 : index
    %c0_111 = arith.constant 0 : index
    %117 = vector.load %arg9[%c1_109, %c2_110, %c0_111] : memref<18x18x16xf32, #tpu.memory_space<vmem>>, vector<16x16x16xf32>
    %118 = vector.shape_cast %117 : vector<16x16x16xf32> to vector<256x16xf32>
    %119 = arith.truncf %118 : vector<256x16xf32> to vector<256x16xbf16>
    %c5_112 = arith.constant 5 : index
    %c0_113 = arith.constant 0 : index
    %c0_114 = arith.constant 0 : index
    %120 = vector.load %arg5[%c5_112, %c0_113, %c0_114] : memref<9x16x16xbf16, #tpu.memory_space<vmem>>, vector<1x16x16xbf16>
    %121 = vector.shape_cast %120 : vector<1x16x16xbf16> to vector<16x16xbf16>
    %cst_115 = arith.constant dense<0.000000e+00> : vector<256x16xf32>
    %122 = tpu.matmul %119, %121, %cst_115 {dimension_numbers = #tpu.dot_dimension_numbers<[1], [0], [0], [1], [0, 0, 1, 1], [], []>} : vector<256x16xbf16>, vector<16x16xbf16>, vector<256x16xf32> -> vector<256x16xf32>
    %123 = arith.addf %116, %122 : vector<256x16xf32>
    %c2_116 = arith.constant 2 : index
    %c0_117 = arith.constant 0 : index
    %c0_118 = arith.constant 0 : index
    %124 = vector.load %arg9[%c2_116, %c0_117, %c0_118] : memref<18x18x16xf32, #tpu.memory_space<vmem>>, vector<16x16x16xf32>
    %125 = vector.shape_cast %124 : vector<16x16x16xf32> to vector<256x16xf32>
    %126 = arith.truncf %125 : vector<256x16xf32> to vector<256x16xbf16>
    %c6_119 = arith.constant 6 : index
    %c0_120 = arith.constant 0 : index
    %c0_121 = arith.constant 0 : index
    %127 = vector.load %arg5[%c6_119, %c0_120, %c0_121] : memref<9x16x16xbf16, #tpu.memory_space<vmem>>, vector<1x16x16xbf16>
    %128 = vector.shape_cast %127 : vector<1x16x16xbf16> to vector<16x16xbf16>
    %cst_122 = arith.constant dense<0.000000e+00> : vector<256x16xf32>
    %129 = tpu.matmul %126, %128, %cst_122 {dimension_numbers = #tpu.dot_dimension_numbers<[1], [0], [0], [1], [0, 0, 1, 1], [], []>} : vector<256x16xbf16>, vector<16x16xbf16>, vector<256x16xf32> -> vector<256x16xf32>
    %130 = arith.addf %123, %129 : vector<256x16xf32>
    %c2_123 = arith.constant 2 : index
    %c1_124 = arith.constant 1 : index
    %c0_125 = arith.constant 0 : index
    %131 = vector.load %arg9[%c2_123, %c1_124, %c0_125] : memref<18x18x16xf32, #tpu.memory_space<vmem>>, vector<16x16x16xf32>
    %132 = vector.shape_cast %131 : vector<16x16x16xf32> to vector<256x16xf32>
    %133 = arith.truncf %132 : vector<256x16xf32> to vector<256x16xbf16>
    %c7_126 = arith.constant 7 : index
    %c0_127 = arith.constant 0 : index
    %c0_128 = arith.constant 0 : index
    %134 = vector.load %arg5[%c7_126, %c0_127, %c0_128] : memref<9x16x16xbf16, #tpu.memory_space<vmem>>, vector<1x16x16xbf16>
    %135 = vector.shape_cast %134 : vector<1x16x16xbf16> to vector<16x16xbf16>
    %cst_129 = arith.constant dense<0.000000e+00> : vector<256x16xf32>
    %136 = tpu.matmul %133, %135, %cst_129 {dimension_numbers = #tpu.dot_dimension_numbers<[1], [0], [0], [1], [0, 0, 1, 1], [], []>} : vector<256x16xbf16>, vector<16x16xbf16>, vector<256x16xf32> -> vector<256x16xf32>
    %137 = arith.addf %130, %136 : vector<256x16xf32>
    %c2_130 = arith.constant 2 : index
    %c2_131 = arith.constant 2 : index
    %c0_132 = arith.constant 0 : index
    %138 = vector.load %arg9[%c2_130, %c2_131, %c0_132] : memref<18x18x16xf32, #tpu.memory_space<vmem>>, vector<16x16x16xf32>
    %139 = vector.shape_cast %138 : vector<16x16x16xf32> to vector<256x16xf32>
    %140 = arith.truncf %139 : vector<256x16xf32> to vector<256x16xbf16>
    %c8_133 = arith.constant 8 : index
    %c0_134 = arith.constant 0 : index
    %c0_135 = arith.constant 0 : index
    %141 = vector.load %arg5[%c8_133, %c0_134, %c0_135] : memref<9x16x16xbf16, #tpu.memory_space<vmem>>, vector<1x16x16xbf16>
    %142 = vector.shape_cast %141 : vector<1x16x16xbf16> to vector<16x16xbf16>
    %cst_136 = arith.constant dense<0.000000e+00> : vector<256x16xf32>
    %143 = tpu.matmul %140, %142, %cst_136 {dimension_numbers = #tpu.dot_dimension_numbers<[1], [0], [0], [1], [0, 0, 1, 1], [], []>} : vector<256x16xbf16>, vector<16x16xbf16>, vector<256x16xf32> -> vector<256x16xf32>
    %144 = arith.addf %137, %143 : vector<256x16xf32>
    %c0_137 = arith.constant 0 : index
    %c0_138 = arith.constant 0 : index
    %145 = vector.load %arg6[%c0_137, %c0_138] : memref<1x16xf32, #tpu.memory_space<vmem>>, vector<1x16xf32>
    %146 = vector.broadcast %145 : vector<1x16xf32> to vector<256x16xf32>
    %147 = arith.mulf %144, %146 : vector<256x16xf32>
    %c0_139 = arith.constant 0 : index
    %c0_140 = arith.constant 0 : index
    %148 = vector.load %arg7[%c0_139, %c0_140] : memref<1x16xf32, #tpu.memory_space<vmem>>, vector<1x16xf32>
    %149 = vector.broadcast %148 : vector<1x16xf32> to vector<256x16xf32>
    %150 = arith.addf %147, %149 : vector<256x16xf32>
    %c0_141 = arith.constant 0 : index
    %c1_142 = arith.constant 1 : index
    %c1_143 = arith.constant 1 : index
    %c0_144 = arith.constant 0 : index
    %151 = vector.load %arg1[%c0_141, %c1_142, %c1_143, %c0_144] : memref<1x18x18x16xf32, #tpu.memory_space<vmem>>, vector<1x16x16x16xf32>
    %152 = vector.shape_cast %151 : vector<1x16x16x16xf32> to vector<16x16x16xf32>
    %153 = vector.shape_cast %152 : vector<16x16x16xf32> to vector<256x16xf32>
    %154 = arith.addf %150, %153 : vector<256x16xf32>
    %cst_145 = arith.constant 0.000000e+00 : f32
    %155 = vector.broadcast %cst_145 : f32 to vector<256x16xf32>
    %156 = arith.maximumf %154, %155 : vector<256x16xf32>
    %c0_146 = arith.constant 0 : index
    %c0_147 = arith.constant 0 : index
    %c0_148 = arith.constant 0 : index
    %157 = vector.load %arg8[%c0_146, %c0_147, %c0_148] : memref<1x256x16xf32, #tpu.memory_space<vmem>>, vector<1x256x16xf32>
    %158 = vector.shape_cast %157 : vector<1x256x16xf32> to vector<256x16xf32>
    %159 = vector.shape_cast %156 : vector<256x16xf32> to vector<1x256x16xf32>
    tpu.vector_store %arg8[%c0_146, %c0_147, %c0_148], %159 {strides = array<i32>} : memref<1x256x16xf32, #tpu.memory_space<vmem>>, vector<1x256x16xf32>,
    return
  }
  func.func @transform_0(%arg0: i32) -> (i32, i32, i32, i32) {
    %c0_i32 = arith.constant 0 : i32
    %c0_i32_0 = arith.constant 0 : i32
    %c0_i32_1 = arith.constant 0 : i32
    %c0_i32_2 = arith.constant 0 : i32
    return %arg0, %c0_i32, %c0_i32_0, %c0_i32_1 : i32, i32, i32, i32
  }
  func.func @transform_1(%arg0: i32) -> (i32, i32, i32) {
    %c0_i32 = arith.constant 0 : i32
    %c0_i32_0 = arith.constant 0 : i32
    %c0_i32_1 = arith.constant 0 : i32
    %c0_i32_2 = arith.constant 0 : i32
    return %c0_i32, %c0_i32_0, %c0_i32_1 : i32, i32, i32
  }
  func.func @transform_2(%arg0: i32) -> (i32, i32) {
    %c0_i32 = arith.constant 0 : i32
    %c0_i32_0 = arith.constant 0 : i32
    %c0_i32_1 = arith.constant 0 : i32
    return %c0_i32, %c0_i32_0 : i32, i32
  }
  func.func @transform_3(%arg0: i32) -> (i32, i32) {
    %c0_i32 = arith.constant 0 : i32
    %c0_i32_0 = arith.constant 0 : i32
    %c0_i32_1 = arith.constant 0 : i32
    return %c0_i32, %c0_i32_0 : i32, i32
  }
  func.func @transform_4(%arg0: i32) -> (i32, i32, i32) {
    %c0_i32 = arith.constant 0 : i32
    %c0_i32_0 = arith.constant 0 : i32
    %c0_i32_1 = arith.constant 0 : i32
    %c0_i32_2 = arith.constant 0 : i32
    return %c0_i32, %c0_i32_0, %c0_i32_1 : i32, i32, i32
  }
  func.func @transform_5(%arg0: i32) -> (i32, i32) {
    %c0_i32 = arith.constant 0 : i32
    %c0_i32_0 = arith.constant 0 : i32
    %c0_i32_1 = arith.constant 0 : i32
    return %c0_i32, %c0_i32_0 : i32, i32
  }
  func.func @transform_6(%arg0: i32) -> (i32, i32) {
    %c0_i32 = arith.constant 0 : i32
    %c0_i32_0 = arith.constant 0 : i32
    %c0_i32_1 = arith.constant 0 : i32
    return %c0_i32, %c0_i32_0 : i32, i32
  }
  func.func @transform_7(%arg0: i32) -> (i32, i32, i32) {
    %c0_i32 = arith.constant 0 : i32
    %c0_i32_0 = arith.constant 0 : i32
    %c0_i32_1 = arith.constant 0 : i32
    return %arg0, %c0_i32, %c0_i32_0 : i32, i32, i32
  }
}

</mosaic_0001>

<llo_original>
// kernel: tpu_custom_call.1
$region0: #{tpu_custom_call.1}
  #allocation0 [shape = 'u32[]', space=smem, size = 0x4, offset = 0x4, fixed_abs, tag = 'smem constant byte address 0x4 - core index']
  #allocation1 [shape = 'u32[72,128]{1,0:T(1,128)}', space=vmem, size = 0x9000, scoped, tag = 'internal scratch']
  #allocation2 [shape = 'f32[18,18,16]{2,1,0:T(8,128)}', space=vmem, size = 0x36000, scoped, tag = 'scratch operand']
  %s0 = inlined_call_operand.vmem [shape: f32[2,18,18,16], index: 0, kind: input, shape index: {}]
  %s1 = inlined_call_operand.vmem [shape: bf16[9,16,16], index: 1, kind: input, shape index: {}]
  %s2 = inlined_call_operand.vmem [shape: f32[1,16], index: 2, kind: input, shape index: {}]
  %s3 = inlined_call_operand.vmem [shape: f32[1,16], index: 3, kind: input, shape index: {}]
  %s4 = inlined_call_operand.vmem [shape: bf16[9,16,16], index: 4, kind: input, shape index: {}]
  %s5 = inlined_call_operand.vmem [shape: f32[1,16], index: 5, kind: input, shape index: {}]
  %s6 = inlined_call_operand.vmem [shape: f32[1,16], index: 6, kind: input, shape index: {}]
  %s7 = inlined_call_operand.vmem [shape: f32[2,256,16], index: 7, kind: output, shape index: {}]
  %s8 = sld [smem:[#allocation0]]
  $region61: #{tpu_custom_call.1} parent=0
    _
  %s10 = ssub.s32 1, %s8
  %s11 = scalar_select 0, %s10, %s8
  loop: start=0, step=1, limit=4
  $region2: #{tpu_custom_call.1} parent=0 // loop_pre_header
    _
  $region3: #{tpu_custom_call.1} parent=0 // loop_header
    %s13 = sphi 0, %s17
    %p14 = scmp.ge.s32.totalorder %s13, 4
    %s23 = sphi 0, %s25
    %s26 = sphi 0, %s23
    %s27 = sphi 0, %s26
    %s43 = sphi 0, %s27
    %s47 = sphi 0, %s47
    %s49 = sphi 0, %s47
    %s50 = sphi 0, %s49
    %s64 = sphi 0, %s50
    %s68 = sphi 0, %s68
    %s70 = sphi 0, %s68
    %s71 = sphi 0, %s70
    %s85 = sphi 0, %s71
    %s89 = sphi 0, %s89
    %s91 = sphi 0, %s89
    %s92 = sphi 0, %s91
    %s106 = sphi 0, %s92
    %s110 = sphi 0, %s110
    %s112 = sphi 0, %s110
    %s113 = sphi 0, %s112
    %s127 = sphi 0, %s113
    %s131 = sphi 0, %s131
    %s133 = sphi 0, %s131
    %s134 = sphi 0, %s133
    %s148 = sphi 0, %s134
    %s152 = sphi 0, %s152
    %s154 = sphi 0, %s152
    %s155 = sphi 0, %s154
    %s169 = sphi 0, %s155
    %s175 = sphi 0, %s177
    %s178 = sphi 0, %s175
    %s179 = sphi 0, %s178
    %s195 = sphi 0, %s179
  $region4: #{tpu_custom_call.1} parent=0 // loop_header_branch
    %16 = sbr.rel (%p14) target = $region8
  $region5: #{tpu_custom_call.1} parent=0 // loop_body
    %s18 = ssub.s32 %s13, 1
    %s19 = ssub.s32 %s13, 2
    %s20 = sadd.s32 %s13, 1
    %s21 = ssub.s32 %s13, %s20
    %p22 = scmp.eq.s32.totalorder %s21, 0
    %s24 = sadd.s32 %s23, 1
    %s25 = scalar_select %p22, %s23, %s24
    %p28 = pneg %p22
    %p29 = scmp.eq.s32.totalorder %s13, 1
    %p30 = por %p28, %p29
    %p31 = scmp.ne.s32.totalorder %s23, %s26
    %p32 = scmp.eq.s32.totalorder %s13, 0
    %p33 = por %p31, %p32
    %p34 = scmp.ne.s32.totalorder %s23, %s26
    %p35 = scmp.eq.s32.totalorder %s18, 1
    %p36 = por %p34, %p35
    %p37 = scmp.ne.s32.totalorder %s26, %s27
    %p38 = scmp.eq.s32.totalorder %s18, 0
    %p39 = por %p37, %p38
    %p40 = scmp.ne.s32.totalorder %s26, %s27
    %p41 = scmp.eq.s32.totalorder %s19, 1
    %p42 = por %p40, %p41
    %p44 = scmp.ne.s32.totalorder %s27, %s43
    %p45 = scmp.eq.s32.totalorder %s19, 0
    %p46 = por %p44, %p45
    %s48 = sadd.s32 %s47, 1
    %p51 = scmp.eq.s32.totalorder %s13, 1
    %p52 = scmp.ne.s32.totalorder %s47, %s49
    %p53 = scmp.eq.s32.totalorder %s13, 0
    %p54 = por %p52, %p53
    %p55 = scmp.ne.s32.totalorder %s47, %s49
    %p56 = scmp.eq.s32.totalorder %s18, 1
    %p57 = por %p55, %p56
    %p58 = scmp.ne.s32.totalorder %s49, %s50
    %p59 = scmp.eq.s32.totalorder %s18, 0
    %p60 = por %p58, %p59
    %p61 = scmp.ne.s32.totalorder %s49, %s50
    %p62 = scmp.eq.s32.totalorder %s19, 1
    %p63 = por %p61, %p62
    %p65 = scmp.ne.s32.totalorder %s50, %s64
    %p66 = scmp.eq.s32.totalorder %s19, 0
    %p67 = por %p65, %p66
    %s69 = sadd.s32 %s68, 1
    %p72 = scmp.eq.s32.totalorder %s13, 1
    %p73 = scmp.ne.s32.totalorder %s68, %s70
    %p74 = scmp.eq.s32.totalorder %s13, 0
    %p75 = por %p73, %p74
    %p76 = scmp.ne.s32.totalorder %s68, %s70
    %p77 = scmp.eq.s32.totalorder %s18, 1
    %p78 = por %p76, %p77
    %p79 = scmp.ne.s32.totalorder %s70, %s71
    %p80 = scmp.eq.s32.totalorder %s18, 0
    %p81 = por %p79, %p80
    %p82 = scmp.ne.s32.totalorder %s70, %s71
    %p83 = scmp.eq.s32.totalorder %s19, 1
    %p84 = por %p82, %p83
    %p86 = scmp.ne.s32.totalorder %s71, %s85
    %p87 = scmp.eq.s32.totalorder %s19, 0
    %p88 = por %p86, %p87
    %s90 = sadd.s32 %s89, 1
    %p93 = scmp.eq.s32.totalorder %s13, 1
    %p94 = scmp.ne.s32.totalorder %s89, %s91
    %p95 = scmp.eq.s32.totalorder %s13, 0
    %p96 = por %p94, %p95
    %p97 = scmp.ne.s32.totalorder %s89, %s91
    %p98 = scmp.eq.s32.totalorder %s18, 1
    %p99 = por %p97, %p98
    %p100 = scmp.ne.s32.totalorder %s91, %s92
    %p101 = scmp.eq.s32.totalorder %s18, 0
    %p102 = por %p100, %p101
    %p103 = scmp.ne.s32.totalorder %s91, %s92
    %p104 = scmp.eq.s32.totalorder %s19, 1
    %p105 = por %p103, %p104
    %p107 = scmp.ne.s32.totalorder %s92, %s106
    %p108 = scmp.eq.s32.totalorder %s19, 0
    %p109 = por %p107, %p108
    %s111 = sadd.s32 %s110, 1
    %p114 = scmp.eq.s32.totalorder %s13, 1
    %p115 = scmp.ne.s32.totalorder %s110, %s112
    %p116 = scmp.eq.s32.totalorder %s13, 0
    %p117 = por %p115, %p116
    %p118 = scmp.ne.s32.totalorder %s110, %s112
    %p119 = scmp.eq.s32.totalorder %s18, 1
    %p120 = por %p118, %p119
    %p121 = scmp.ne.s32.totalorder %s112, %s113
    %p122 = scmp.eq.s32.totalorder %s18, 0
    %p123 = por %p121, %p122
    %p124 = scmp.ne.s32.totalorder %s112, %s113
    %p125 = scmp.eq.s32.totalorder %s19, 1
    %p126 = por %p124, %p125
    %p128 = scmp.ne.s32.totalorder %s113, %s127
    %p129 = scmp.eq.s32.totalorder %s19, 0
    %p130 = por %p128, %p129
    %s132 = sadd.s32 %s131, 1
    %p135 = scmp.eq.s32.totalorder %s13, 1
    %p136 = scmp.ne.s32.totalorder %s131, %s133
    %p137 = scmp.eq.s32.totalorder %s13, 0
    %p138 = por %p136, %p137
    %p139 = scmp.ne.s32.totalorder %s131, %s133
    %p140 = scmp.eq.s32.totalorder %s18, 1
    %p141 = por %p139, %p140
    %p142 = scmp.ne.s32.totalorder %s133, %s134
    %p143 = scmp.eq.s32.totalorder %s18, 0
    %p144 = por %p142, %p143
    %p145 = scmp.ne.s32.totalorder %s133, %s134
    %p146 = scmp.eq.s32.totalorder %s19, 1
    %p147 = por %p145, %p146
    %p149 = scmp.ne.s32.totalorder %s134, %s148
    %p150 = scmp.eq.s32.totalorder %s19, 0
    %p151 = por %p149, %p150
    %s153 = sadd.s32 %s152, 1
    %p156 = scmp.eq.s32.totalorder %s13, 1
    %p157 = scmp.ne.s32.totalorder %s152, %s154
    %p158 = scmp.eq.s32.totalorder %s13, 0
    %p159 = por %p157, %p158
    %p160 = scmp.ne.s32.totalorder %s152, %s154
    %p161 = scmp.eq.s32.totalorder %s18, 1
    %p162 = por %p160, %p161
    %p163 = scmp.ne.s32.totalorder %s154, %s155
    %p164 = scmp.eq.s32.totalorder %s18, 0
    %p165 = por %p163, %p164
    %p166 = scmp.ne.s32.totalorder %s154, %s155
    %p167 = scmp.eq.s32.totalorder %s19, 1
    %p168 = por %p166, %p167
    %p170 = scmp.ne.s32.totalorder %s155, %s169
    %p171 = scmp.eq.s32.totalorder %s19, 0
    %p172 = por %p170, %p171
    %s173 = ssub.s32 %s13, %s20
    %p174 = scmp.eq.s32.totalorder %s173, 0
    %s176 = sadd.s32 %s175, 1
    %s177 = scalar_select %p174, %s175, %s176
    %p180 = pneg %p174
    %p181 = scmp.eq.s32.totalorder %s13, 1
    %p182 = por %p180, %p181
    %p183 = scmp.ne.s32.totalorder %s175, %s178
    %p184 = scmp.eq.s32.totalorder %s13, 0
    %p185 = por %p183, %p184
    %p186 = scmp.ne.s32.totalorder %s175, %s178
    %p187 = scmp.eq.s32.totalorder %s18, 1
    %p188 = por %p186, %p187
    %p189 = scmp.ne.s32.totalorder %s178, %s179
    %p190 = scmp.eq.s32.totalorder %s18, 0
    %p191 = por %p189, %p190
    %p192 = scmp.ne.s32.totalorder %s178, %s179
    %p193 = scmp.eq.s32.totalorder %s19, 1
    %p194 = por %p192, %p193
    %p196 = scmp.ne.s32.totalorder %s179, %s195
    %p197 = scmp.eq.s32.totalorder %s19, 0
    %p198 = por %p196, %p197
    %p199 = scmp.le.s32.totalorder 1, %s13
    %p200 = scmp.lt.s32.totalorder %s13, 3
    %p201 = pnand %p199, %p200
    %p202 = pneg %p201
    // Predicated region
    $region9: #{tpu_custom_call.1} parent=5 // pred_check
      _
    $region10: #{tpu_custom_call.1} parent=5 // pred_check_branch
      %204 = sbr.rel (%p201) target = $region12
    $region11: #{tpu_custom_call.1} parent=5 // pred_region
      %s205 = ssub.s32 %s13, 1
      // Predicated region
      $region13: #{tpu_custom_call.1} parent=11 // pred_check
        %p206 = pneg %p60
      $region14: #{tpu_custom_call.1} parent=11 // pred_check_branch
        %208 = sbr.rel (%p206) target = $region16
      $region15: #{tpu_custom_call.1} parent=11 // pred_region
        _
      $region16: #{tpu_custom_call.1} parent=11 // pred_fallthru
        _
      // Predicated region
      $region17: #{tpu_custom_call.1} parent=11 // pred_check
        %p209 = pneg %p81
      $region18: #{tpu_custom_call.1} parent=11 // pred_check_branch
        %211 = sbr.rel (%p209) target = $region20
      $region19: #{tpu_custom_call.1} parent=11 // pred_region
        _
      $region20: #{tpu_custom_call.1} parent=11 // pred_fallthru
        _
      // Predicated region
      $region21: #{tpu_custom_call.1} parent=11 // pred_check
        %p212 = pneg %p102
      $region22: #{tpu_custom_call.1} parent=11 // pred_check_branch
        %214 = sbr.rel (%p212) target = $region24
      $region23: #{tpu_custom_call.1} parent=11 // pred_region
        _
      $region24: #{tpu_custom_call.1} parent=11 // pred_fallthru
        _
      // Predicated region
      $region25: #{tpu_custom_call.1} parent=11 // pred_check
        %p215 = pneg %p123
      $region26: #{tpu_custom_call.1} parent=11 // pred_check_branch
        %217 = sbr.rel (%p215) target = $region28
      $region27: #{tpu_custom_call.1} parent=11 // pred_region
        _
      $region28: #{tpu_custom_call.1} parent=11 // pred_fallthru
        _
      // Predicated region
      $region29: #{tpu_custom_call.1} parent=11 // pred_check
        %p218 = pneg %p144
      $region30: #{tpu_custom_call.1} parent=11 // pred_check_branch
        %220 = sbr.rel (%p218) target = $region32
      $region31: #{tpu_custom_call.1} parent=11 // pred_region
        _
      $region32: #{tpu_custom_call.1} parent=11 // pred_fallthru
        _
      // Predicated region
      $region33: #{tpu_custom_call.1} parent=11 // pred_check
        %p221 = pneg %p165
      $region34: #{tpu_custom_call.1} parent=11 // pred_check_branch
        %223 = sbr.rel (%p221) target = $region36
      $region35: #{tpu_custom_call.1} parent=11 // pred_region
        _
      $region36: #{tpu_custom_call.1} parent=11 // pred_fallthru
        _
    $region12: #{tpu_custom_call.1} parent=5 // pred_fallthru
      _
    %p224 = scmp.lt.s32.totalorder %s13, 2
    // Predicated region
    $region37: #{tpu_custom_call.1} parent=5 // pred_check
      %p225 = pneg %p224
    $region38: #{tpu_custom_call.1} parent=5 // pred_check_branch
      %227 = sbr.rel (%p225) target = $region40
    $region39: #{tpu_custom_call.1} parent=5 // pred_region
      // Predicated region
      $region41: #{tpu_custom_call.1} parent=39 // pred_check
        %p228 = pneg %p33
      $region42: #{tpu_custom_call.1} parent=39 // pred_check_branch
        %230 = sbr.rel (%p228) target = $region44
      $region43: #{tpu_custom_call.1} parent=39 // pred_region
        %p231 = scmp.lt.s32.totalorder %s13, 1
        %s232 = scalar_select %p231, %s13, 1
        %s233 = smul.addr %s232, 54
        %s234 = smul.addr %s233, 8
        %s235 = scalar_lea.vmem %s0, %s234
      $region44: #{tpu_custom_call.1} parent=39 // pred_fallthru
        _
    $region40: #{tpu_custom_call.1} parent=5 // pred_fallthru
      _
    %p236 = scmp.le.s32.totalorder 1, %s13
    %p237 = scmp.lt.s32.totalorder %s13, 3
    %p238 = pnand %p236, %p237
    %p239 = pneg %p238
    // Predicated region
    $region45: #{tpu_custom_call.1} parent=5 // pred_check
      _
    $region46: #{tpu_custom_call.1} parent=5 // pred_check_branch
      %241 = sbr.rel (%p238) target = $region48
    $region47: #{tpu_custom_call.1} parent=5 // pred_region
      %s242 = ssub.s32 %s13, 1
      %p243 = scmp.lt.s32.totalorder %s18, 1
      %s244 = scalar_select %p243, %s18, 1
      %s245 = smul.addr %s244, 54
      %s246 = smul.addr %s245, 8
      %s247 = scalar_lea.vmem %s0, %s246
      %p248 = pneg %p39
      %p249 = pneg %p36
      %p250 = pneg %p60
      %p251 = pneg %p57
      %p252 = pneg %p81
      %p253 = pneg %p78
      %p254 = pneg %p102
      %p255 = pneg %p99
      %p256 = pneg %p123
      %p257 = pneg %p120
      %p258 = pneg %p144
      %p259 = pneg %p141
      %p260 = pneg %p165
      %p261 = pneg %p162
      %p262 = pneg %p191
      %p263 = pneg %p188
      %p264 = scmp.lt.s32.totalorder %s18, 1
      %s265 = scalar_select %p264, %s18, 1
      %s266 = smul.addr %s265, 32
      %s267 = smul.addr %s266, 8
      %s268 = scalar_lea.vmem %s7, %s267
      %p269 = scmp.lt.s32.totalorder %s18, 1
      %s270 = scalar_select %p269, %s18, 1
      %s271 = smul.addr %s270, 54
      %s272 = smul.addr %s271, 8
      %s273 = scalar_lea.vmem %s0, %s272
      %p274 = scmp.lt.s32.totalorder %s18, 1
      %s275 = scalar_select %p274, %s18, 1
      %s276 = smul.addr %s275, 32
      %s277 = smul.addr %s276, 8
      %s278 = scalar_lea.vmem %s7, %s277
      %v280 = vld [vmem:[%s273] sm:$0xff]
      %v281 = vld [vmem:[%s273 + $0x8] sm:$0xff]
      %v282 = vld [vmem:[%s273 + $0x18] sm:$0xff]
      %v283 = vld [vmem:[%s273 + $0x20] sm:$0xff]
      %v284 = vld [vmem:[%s273 + $0x30] sm:$0xff]
      %v285 = vld [vmem:[%s273 + $0x38] sm:$0xff]
      %v286 = vld [vmem:[%s273 + $0x48] sm:$0xff]
      %v287 = vld [vmem:[%s273 + $0x50] sm:$0xff]
      %v288 = vld [vmem:[%s273 + $0x60] sm:$0xff]
      %v289 = vld [vmem:[%s273 + $0x68] sm:$0xff]
      %v290 = vld [vmem:[%s273 + $0x78] sm:$0xff]
      %v291 = vld [vmem:[%s273 + $0x80] sm:$0xff]
      %v292 = vld [vmem:[%s273 + $0x90] sm:$0xff]
      %v293 = vld [vmem:[%s273 + $0x98] sm:$0xff]
      %v294 = vld [vmem:[%s273 + $0xa8] sm:$0xff]
      %v295 = vld [vmem:[%s273 + $0xb0] sm:$0xff]
      %v296 = vld [vmem:[%s273 + $0xc0] sm:$0xff]
      %v297 = vld [vmem:[%s273 + $0xc8] sm:$0xff]
      %v298 = vld [vmem:[%s273 + $0xd8] sm:$0xff]
      %v299 = vld [vmem:[%s273 + $0xe0] sm:$0xff]
      %v300 = vld [vmem:[%s273 + $0xf0] sm:$0xff]
      %v301 = vld [vmem:[%s273 + $0xf8] sm:$0xff]
      %v302 = vld [vmem:[%s273 + $0x108] sm:$0xff]
      %v303 = vld [vmem:[%s273 + $0x110] sm:$0xff]
      %v304 = vld [vmem:[%s273 + $0x120] sm:$0xff]
      %v305 = vld [vmem:[%s273 + $0x128] sm:$0xff]
      %v306 = vld [vmem:[%s273 + $0x138] sm:$0xff]
      %v307 = vld [vmem:[%s273 + $0x140] sm:$0xff]
      %v308 = vld [vmem:[%s273 + $0x150] sm:$0xff]
      %v309 = vld [vmem:[%s273 + $0x158] sm:$0xff]
      %v310 = vld [vmem:[%s273 + $0x168] sm:$0xff]
      %v311 = vld [vmem:[%s273 + $0x170] sm:$0xff]
      %v312 = vpack.c.bf16 %v281, %v280
      %v313 = vpack.c.bf16 %v283, %v282
      %v314 = vpack.c.bf16 %v285, %v284
      %v315 = vpack.c.bf16 %v287, %v286
      %v316 = vpack.c.bf16 %v289, %v288
      %v317 = vpack.c.bf16 %v291, %v290
      %v318 = vpack.c.bf16 %v293, %v292
      %v319 = vpack.c.bf16 %v295, %v294
      %v320 = vpack.c.bf16 %v297, %v296
      %v321 = vpack.c.bf16 %v299, %v298
      %v322 = vpack.c.bf16 %v301, %v300
      %v323 = vpack.c.bf16 %v303, %v302
      %v324 = vpack.c.bf16 %v305, %v304
      %v325 = vpack.c.bf16 %v307, %v306
      %v326 = vpack.c.bf16 %v309, %v308
      %v327 = vpack.c.bf16 %v311, %v310
      %v328 = vld [vmem:[%s1] sm:$0xf]
      %v329 = vld [vmem:[%s1 + $0x4] sm:$0xf]
      %v330 = vld [vmem:[%s273 + $0x1] sm:$0xff]
      %v331 = vld [vmem:[%s273 + $0x9] sm:$0xff]
      %v332 = vld [vmem:[%s273 + $0x19] sm:$0xff]
      %v333 = vld [vmem:[%s273 + $0x21] sm:$0xff]
      %v334 = vld [vmem:[%s273 + $0x31] sm:$0xff]
      %v335 = vld [vmem:[%s273 + $0x39] sm:$0xff]
      %v336 = vld [vmem:[%s273 + $0x49] sm:$0xff]
      %v337 = vld [vmem:[%s273 + $0x51] sm:$0xff]
      %v338 = vld [vmem:[%s273 + $0x61] sm:$0xff]
      %v339 = vld [vmem:[%s273 + $0x69] sm:$0xff]
      %v340 = vld [vmem:[%s273 + $0x79] sm:$0xff]
      %v341 = vld [vmem:[%s273 + $0x81] sm:$0xff]
      %v342 = vld [vmem:[%s273 + $0x91] sm:$0xff]
      %v343 = vld [vmem:[%s273 + $0x99] sm:$0xff]
      %v344 = vld [vmem:[%s273 + $0xa9] sm:$0xff]
      %v345 = vld [vmem:[%s273 + $0xb1] sm:$0xff]
      %v346 = vld [vmem:[%s273 + $0xc1] sm:$0xff]
      %v347 = vld [vmem:[%s273 + $0xc9] sm:$0xff]
      %v348 = vld [vmem:[%s273 + $0xd9] sm:$0xff]
      %v349 = vld [vmem:[%s273 + $0xe1] sm:$0xff]
      %v350 = vld [vmem:[%s273 + $0xf1] sm:$0xff]
      %v351 = vld [vmem:[%s273 + $0xf9] sm:$0xff]
      %v352 = vld [vmem:[%s273 + $0x109] sm:$0xff]
      %v353 = vld [vmem:[%s273 + $0x111] sm:$0xff]
      %v354 = vld [vmem:[%s273 + $0x121] sm:$0xff]
      %v355 = vld [vmem:[%s273 + $0x129] sm:$0xff]
      %v356 = vld [vmem:[%s273 + $0x139] sm:$0xff]
      %v357 = vld [vmem:[%s273 + $0x141] sm:$0xff]
      %v358 = vld [vmem:[%s273 + $0x151] sm:$0xff]
      %v359 = vld [vmem:[%s273 + $0x159] sm:$0xff]
      %v360 = vld [vmem:[%s273 + $0x169] sm:$0xff]
      %v361 = vld [vmem:[%s273 + $0x171] sm:$0xff]
      %v362 = vpack.c.bf16 %v331, %v330
      %v363 = vpack.c.bf16 %v333, %v332
      %v364 = vpack.c.bf16 %v335, %v334
      %v365 = vpack.c.bf16 %v337, %v336
      %v366 = vpack.c.bf16 %v339, %v338
      %v367 = vpack.c.bf16 %v341, %v340
      %v368 = vpack.c.bf16 %v343, %v342
      %v369 = vpack.c.bf16 %v345, %v344
      %v370 = vpack.c.bf16 %v347, %v346
      %v371 = vpack.c.bf16 %v349, %v348
      %v372 = vpack.c.bf16 %v351, %v350
      %v373 = vpack.c.bf16 %v353, %v352
      %v374 = vpack.c.bf16 %v355, %v354
      %v375 = vpack.c.bf16 %v357, %v356
      %v376 = vpack.c.bf16 %v359, %v358
      %v377 = vpack.c.bf16 %v361, %v360
      %s378 = scalar_lea.vmem %s1, 8
      %v379 = vld [vmem:[%s378] sm:$0xf]
      %v380 = vld [vmem:[%s378 + $0x4] sm:$0xf]
      %v383 = vunpack.c.l.b16 %v379
      %v384 = vunpack.c.l.b16 %v380
      %v385 = vpack.c.b16 %v384, %v383
      %vm387 = vcmask 130048
      %v389 = vsel %vm387, %v362, 0
      %v392 = vsel %vm387, %v363, 0
      %v395 = vsel %vm387, %v364, 0
      %v398 = vsel %vm387, %v365, 0
      %v401 = vsel %vm387, %v366, 0
      %v404 = vsel %vm387, %v367, 0
      %v407 = vsel %vm387, %v368, 0
      %v410 = vsel %vm387, %v369, 0
      %v413 = vsel %vm387, %v370, 0
      %v416 = vsel %vm387, %v371, 0
      %v419 = vsel %vm387, %v372, 0
      %v422 = vsel %vm387, %v373, 0
      %v425 = vsel %vm387, %v374, 0
      %v428 = vsel %vm387, %v375, 0
      %v431 = vsel %vm387, %v376, 0
      %v434 = vsel %vm387, %v377, 0
      %436 = vmatpush.bf16.msra.mxu0 0
      %437 = vmatpush.bf16.msra.mxu0 0
      %438 = vmatpush.bf16.msra.mxu0 0
      %439 = vmatpush.bf16.msra.mxu0 0
      %440 = vmatpush.bf16.msra.mxu0 0
      %441 = vmatpush.bf16.msra.mxu0 0
      %442 = vmatpush.bf16.msra.mxu0 0
      %443 = vmatpush.bf16.msra.mxu0 %v385
      %444 = vmatmul.bf16.gmra.mxu0 %v389
      %v445 = vpop.f32.mrf.mxu0
      %v446 = vadd.f32 0.0, %v445
      %v447 = vpop.f32.mrf.mxu0
      %v448 = vadd.f32 0.0, %v447
      %449 = vmatmul.bf16.gmra.mxu0 %v392
      %v450 = vpop.f32.mrf.mxu0
      %v451 = vadd.f32 0.0, %v450
      %v452 = vpop.f32.mrf.mxu0
      %v453 = vadd.f32 0.0, %v452
      %454 = vmatmul.bf16.gmra.mxu0 %v395
      %v455 = vpop.f32.mrf.mxu0
      %v456 = vadd.f32 0.0, %v455
      %v457 = vpop.f32.mrf.mxu0
      %v458 = vadd.f32 0.0, %v457
      %459 = vmatmul.bf16.gmra.mxu0 %v398
      %v460 = vpop.f32.mrf.mxu0
      %v461 = vadd.f32 0.0, %v460
      %v462 = vpop.f32.mrf.mxu0
      %v463 = vadd.f32 0.0, %v462
      %464 = vmatmul.bf16.gmra.mxu0 %v401
      %v465 = vpop.f32.mrf.mxu0
      %v466 = vadd.f32 0.0, %v465
      %v467 = vpop.f32.mrf.mxu0
      %v468 = vadd.f32 0.0, %v467
      %469 = vmatmul.bf16.gmra.mxu0 %v404
      %v470 = vpop.f32.mrf.mxu0
      %v471 = vadd.f32 0.0, %v470
      %v472 = vpop.f32.mrf.mxu0
      %v473 = vadd.f32 0.0, %v472
      %474 = vmatmul.bf16.gmra.mxu0 %v407
      %v475 = vpop.f32.mrf.mxu0
      %v476 = vadd.f32 0.0, %v475
      %v477 = vpop.f32.mrf.mxu0
      %v478 = vadd.f32 0.0, %v477
      %479 = vmatmul.bf16.gmra.mxu0 %v410
      %v480 = vpop.f32.mrf.mxu0
      %v481 = vadd.f32 0.0, %v480
      %v482 = vpop.f32.mrf.mxu0
      %v483 = vadd.f32 0.0, %v482
      %484 = vmatmul.bf16.gmra.mxu0 %v413
      %v485 = vpop.f32.mrf.mxu0
      %v486 = vadd.f32 0.0, %v485
      %v487 = vpop.f32.mrf.mxu0
      %v488 = vadd.f32 0.0, %v487
      %489 = vmatmul.bf16.gmra.mxu0 %v416
      %v490 = vpop.f32.mrf.mxu0
      %v491 = vadd.f32 0.0, %v490
      %v492 = vpop.f32.mrf.mxu0
      %v493 = vadd.f32 0.0, %v492
      %494 = vmatmul.bf16.gmra.mxu0 %v419
      %v495 = vpop.f32.mrf.mxu0
      %v496 = vadd.f32 0.0, %v495
      %v497 = vpop.f32.mrf.mxu0
      %v498 = vadd.f32 0.0, %v497
      %499 = vmatmul.bf16.gmra.mxu0 %v422
      %v500 = vpop.f32.mrf.mxu0
      %v501 = vadd.f32 0.0, %v500
      %v502 = vpop.f32.mrf.mxu0
      %v503 = vadd.f32 0.0, %v502
      %504 = vmatmul.bf16.gmra.mxu0 %v425
      %v505 = vpop.f32.mrf.mxu0
      %v506 = vadd.f32 0.0, %v505
      %v507 = vpop.f32.mrf.mxu0
      %v508 = vadd.f32 0.0, %v507
      %509 = vmatmul.bf16.gmra.mxu0 %v428
      %v510 = vpop.f32.mrf.mxu0
      %v511 = vadd.f32 0.0, %v510
      %v512 = vpop.f32.mrf.mxu0
      %v513 = vadd.f32 0.0, %v512
      %514 = vmatmul.bf16.gmra.mxu0 %v431
      %v515 = vpop.f32.mrf.mxu0
      %v516 = vadd.f32 0.0, %v515
      %v517 = vpop.f32.mrf.mxu0
      %v518 = vadd.f32 0.0, %v517
      %519 = vmatmul.bf16.gmra.mxu0 %v434
      %v520 = vpop.f32.mrf.mxu0
      %v521 = vadd.f32 0.0, %v520
      %v522 = vpop.f32.mrf.mxu0
      %v523 = vadd.f32 0.0, %v522
      %524 = vdwg.mxu0
      %v527 = vunpack.c.l.b16 %v328
      %v528 = vunpack.c.l.b16 %v329
      %v529 = vpack.c.b16 %v528, %v527
      %v532 = vsel %vm387, %v312, 0
      %v535 = vsel %vm387, %v313, 0
      %v538 = vsel %vm387, %v314, 0
      %v541 = vsel %vm387, %v315, 0
      %v544 = vsel %vm387, %v316, 0
      %v547 = vsel %vm387, %v317, 0
      %v550 = vsel %vm387, %v318, 0
      %v553 = vsel %vm387, %v319, 0
      %v556 = vsel %vm387, %v320, 0
      %v559 = vsel %vm387, %v321, 0
      %v562 = vsel %vm387, %v322, 0
      %v565 = vsel %vm387, %v323, 0
      %v568 = vsel %vm387, %v324, 0
      %v571 = vsel %vm387, %v325, 0
      %v574 = vsel %vm387, %v326, 0
      %v577 = vsel %vm387, %v327, 0
      %579 = vmatpush.bf16.msra.mxu0 0
      %580 = vmatpush.bf16.msra.mxu0 0
      %581 = vmatpush.bf16.msra.mxu0 0
      %582 = vmatpush.bf16.msra.mxu0 0
      %583 = vmatpush.bf16.msra.mxu0 0
      %584 = vmatpush.bf16.msra.mxu0 0
      %585 = vmatpush.bf16.msra.mxu0 0
      %586 = vmatpush.bf16.msra.mxu0 %v529
      %587 = vmatmul.bf16.gmra.mxu0 %v532
      %v588 = vpop.f32.mrf.mxu0
      %v589 = vadd.f32 %v446, %v588
      %v590 = vpop.f32.mrf.mxu0
      %v591 = vadd.f32 %v448, %v590
      %592 = vmatmul.bf16.gmra.mxu0 %v535
      %v593 = vpop.f32.mrf.mxu0
      %v594 = vadd.f32 %v451, %v593
      %v595 = vpop.f32.mrf.mxu0
      %v596 = vadd.f32 %v453, %v595
      %597 = vmatmul.bf16.gmra.mxu0 %v538
      %v598 = vpop.f32.mrf.mxu0
      %v599 = vadd.f32 %v456, %v598
      %v600 = vpop.f32.mrf.mxu0
      %v601 = vadd.f32 %v458, %v600
      %602 = vmatmul.bf16.gmra.mxu0 %v541
      %v603 = vpop.f32.mrf.mxu0
      %v604 = vadd.f32 %v461, %v603
      %v605 = vpop.f32.mrf.mxu0
      %v606 = vadd.f32 %v463, %v605
      %607 = vmatmul.bf16.gmra.mxu0 %v544
      %v608 = vpop.f32.mrf.mxu0
      %v609 = vadd.f32 %v466, %v608
      %v610 = vpop.f32.mrf.mxu0
      %v611 = vadd.f32 %v468, %v610
      %612 = vmatmul.bf16.gmra.mxu0 %v547
      %v613 = vpop.f32.mrf.mxu0
      %v614 = vadd.f32 %v471, %v613
      %v615 = vpop.f32.mrf.mxu0
      %v616 = vadd.f32 %v473, %v615
      %617 = vmatmul.bf16.gmra.mxu0 %v550
      %v618 = vpop.f32.mrf.mxu0
      %v619 = vadd.f32 %v476, %v618
      %v620 = vpop.f32.mrf.mxu0
      %v621 = vadd.f32 %v478, %v620
      %622 = vmatmul.bf16.gmra.mxu0 %v553
      %v623 = vpop.f32.mrf.mxu0
      %v624 = vadd.f32 %v481, %v623
      %v625 = vpop.f32.mrf.mxu0
      %v626 = vadd.f32 %v483, %v625
      %627 = vmatmul.bf16.gmra.mxu0 %v556
      %v628 = vpop.f32.mrf.mxu0
      %v629 = vadd.f32 %v486, %v628
      %v630 = vpop.f32.mrf.mxu0
      %v631 = vadd.f32 %v488, %v630
      %632 = vmatmul.bf16.gmra.mxu0 %v559
      %v633 = vpop.f32.mrf.mxu0
      %v634 = vadd.f32 %v491, %v633
      %v635 = vpop.f32.mrf.mxu0
      %v636 = vadd.f32 %v493, %v635
      %637 = vmatmul.bf16.gmra.mxu0 %v562
      %v638 = vpop.f32.mrf.mxu0
      %v639 = vadd.f32 %v496, %v638
      %v640 = vpop.f32.mrf.mxu0
      %v641 = vadd.f32 %v498, %v640
      %642 = vmatmul.bf16.gmra.mxu0 %v565
      %v643 = vpop.f32.mrf.mxu0
      %v644 = vadd.f32 %v501, %v643
      %v645 = vpop.f32.mrf.mxu0
      %v646 = vadd.f32 %v503, %v645
      %647 = vmatmul.bf16.gmra.mxu0 %v568
      %v648 = vpop.f32.mrf.mxu0
      %v649 = vadd.f32 %v506, %v648
      %v650 = vpop.f32.mrf.mxu0
      %v651 = vadd.f32 %v508, %v650
      %652 = vmatmul.bf16.gmra.mxu0 %v571
      %v653 = vpop.f32.mrf.mxu0
      %v654 = vadd.f32 %v511, %v653
      %v655 = vpop.f32.mrf.mxu0
      %v656 = vadd.f32 %v513, %v655
      %657 = vmatmul.bf16.gmra.mxu0 %v574
      %v658 = vpop.f32.mrf.mxu0
      %v659 = vadd.f32 %v516, %v658
      %v660 = vpop.f32.mrf.mxu0
      %v661 = vadd.f32 %v518, %v660
      %662 = vmatmul.bf16.gmra.mxu0 %v577
      %v663 = vpop.f32.mrf.mxu0
      %v664 = vadd.f32 %v521, %v663
      %v665 = vpop.f32.mrf.mxu0
      %v666 = vadd.f32 %v523, %v665
      %667 = vdwg.mxu0
      %v668 = vld [vmem:[%s273 + $0x2] sm:$0xff]
      %v669 = vld [vmem:[%s273 + $0xa] sm:$0xff]
      %v670 = vld [vmem:[%s273 + $0x1a] sm:$0xff]
      %v671 = vld [vmem:[%s273 + $0x22] sm:$0xff]
      %v672 = vld [vmem:[%s273 + $0x32] sm:$0xff]
      %v673 = vld [vmem:[%s273 + $0x3a] sm:$0xff]
      %v674 = vld [vmem:[%s273 + $0x4a] sm:$0xff]
      %v675 = vld [vmem:[%s273 + $0x52] sm:$0xff]
      %v676 = vld [vmem:[%s273 + $0x62] sm:$0xff]
      %v677 = vld [vmem:[%s273 + $0x6a] sm:$0xff]
      %v678 = vld [vmem:[%s273 + $0x7a] sm:$0xff]
      %v679 = vld [vmem:[%s273 + $0x82] sm:$0xff]
      %v680 = vld [vmem:[%s273 + $0x92] sm:$0xff]
      %v681 = vld [vmem:[%s273 + $0x9a] sm:$0xff]
      %v682 = vld [vmem:[%s273 + $0xaa] sm:$0xff]
      %v683 = vld [vmem:[%s273 + $0xb2] sm:$0xff]
      %v684 = vld [vmem:[%s273 + $0xc2] sm:$0xff]
      %v685 = vld [vmem:[%s273 + $0xca] sm:$0xff]
      %v686 = vld [vmem:[%s273 + $0xda] sm:$0xff]
      %v687 = vld [vmem:[%s273 + $0xe2] sm:$0xff]
      %v688 = vld [vmem:[%s273 + $0xf2] sm:$0xff]
      %v689 = vld [vmem:[%s273 + $0xfa] sm:$0xff]
      %v690 = vld [vmem:[%s273 + $0x10a] sm:$0xff]
      %v691 = vld [vmem:[%s273 + $0x112] sm:$0xff]
      %v692 = vld [vmem:[%s273 + $0x122] sm:$0xff]
      %v693 = vld [vmem:[%s273 + $0x12a] sm:$0xff]
      %v694 = vld [vmem:[%s273 + $0x13a] sm:$0xff]
      %v695 = vld [vmem:[%s273 + $0x142] sm:$0xff]
      %v696 = vld [vmem:[%s273 + $0x152] sm:$0xff]
      %v697 = vld [vmem:[%s273 + $0x15a] sm:$0xff]
      %v698 = vld [vmem:[%s273 + $0x16a] sm:$0xff]
      %v699 = vld [vmem:[%s273 + $0x172] sm:$0xff]
      %v700 = vpack.c.bf16 %v669, %v668
      %v701 = vpack.c.bf16 %v671, %v670
      %v702 = vpack.c.bf16 %v673, %v672
      %v703 = vpack.c.bf16 %v675, %v674
      %v704 = vpack.c.bf16 %v677, %v676
      %v705 = vpack.c.bf16 %v679, %v678
      %v706 = vpack.c.bf16 %v681, %v680
      %v707 = vpack.c.bf16 %v683, %v682
      %v708 = vpack.c.bf16 %v685, %v684
      %v709 = vpack.c.bf16 %v687, %v686
      %v710 = vpack.c.bf16 %v689, %v688
      %v711 = vpack.c.bf16 %v691, %v690
      %v712 = vpack.c.bf16 %v693, %v692
      %v713 = vpack.c.bf16 %v695, %v694
      %v714 = vpack.c.bf16 %v697, %v696
      %v715 = vpack.c.bf16 %v699, %v698
      %s716 = scalar_lea.vmem %s1, 16
      %v717 = vld [vmem:[%s716] sm:$0xf]
      %v718 = vld [vmem:[%s716 + $0x4] sm:$0xf]
      %v721 = vunpack.c.l.b16 %v717
      %v722 = vunpack.c.l.b16 %v718
      %v723 = vpack.c.b16 %v722, %v721
      %v726 = vsel %vm387, %v700, 0
      %v729 = vsel %vm387, %v701, 0
      %v732 = vsel %vm387, %v702, 0
      %v735 = vsel %vm387, %v703, 0
      %v738 = vsel %vm387, %v704, 0
      %v741 = vsel %vm387, %v705, 0
      %v744 = vsel %vm387, %v706, 0
      %v747 = vsel %vm387, %v707, 0
      %v750 = vsel %vm387, %v708, 0
      %v753 = vsel %vm387, %v709, 0
      %v756 = vsel %vm387, %v710, 0
      %v759 = vsel %vm387, %v711, 0
      %v762 = vsel %vm387, %v712, 0
      %v765 = vsel %vm387, %v713, 0
      %v768 = vsel %vm387, %v714, 0
      %v771 = vsel %vm387, %v715, 0
      %773 = vmatpush.bf16.msra.mxu0 0
      %774 = vmatpush.bf16.msra.mxu0 0
      %775 = vmatpush.bf16.msra.mxu0 0
      %776 = vmatpush.bf16.msra.mxu0 0
      %777 = vmatpush.bf16.msra.mxu0 0
      %778 = vmatpush.bf16.msra.mxu0 0
      %779 = vmatpush.bf16.msra.mxu0 0
      %780 = vmatpush.bf16.msra.mxu0 %v723
      %781 = vmatmul.bf16.gmra.mxu0 %v726
      %v782 = vpop.f32.mrf.mxu0
      %v783 = vadd.f32 0.0, %v782
      %v784 = vpop.f32.mrf.mxu0
      %v785 = vadd.f32 0.0, %v784
      %786 = vmatmul.bf16.gmra.mxu0 %v729
      %v787 = vpop.f32.mrf.mxu0
      %v788 = vadd.f32 0.0, %v787
      %v789 = vpop.f32.mrf.mxu0
      %v790 = vadd.f32 0.0, %v789
      %791 = vmatmul.bf16.gmra.mxu0 %v732
      %v792 = vpop.f32.mrf.mxu0
      %v793 = vadd.f32 0.0, %v792
      %v794 = vpop.f32.mrf.mxu0
      %v795 = vadd.f32 0.0, %v794
      %796 = vmatmul.bf16.gmra.mxu0 %v735
      %v797 = vpop.f32.mrf.mxu0
      %v798 = vadd.f32 0.0, %v797
      %v799 = vpop.f32.mrf.mxu0
      %v800 = vadd.f32 0.0, %v799
      %801 = vmatmul.bf16.gmra.mxu0 %v738
      %v802 = vpop.f32.mrf.mxu0
      %v803 = vadd.f32 0.0, %v802
      %v804 = vpop.f32.mrf.mxu0
      %v805 = vadd.f32 0.0, %v804
      %806 = vmatmul.bf16.gmra.mxu0 %v741
      %v807 = vpop.f32.mrf.mxu0
      %v808 = vadd.f32 0.0, %v807
      %v809 = vpop.f32.mrf.mxu0
      %v810 = vadd.f32 0.0, %v809
      %811 = vmatmul.bf16.gmra.mxu0 %v744
      %v812 = vpop.f32.mrf.mxu0
      %v813 = vadd.f32 0.0, %v812
      %v814 = vpop.f32.mrf.mxu0
      %v815 = vadd.f32 0.0, %v814
      %816 = vmatmul.bf16.gmra.mxu0 %v747
      %v817 = vpop.f32.mrf.mxu0
      %v818 = vadd.f32 0.0, %v817
      %v819 = vpop.f32.mrf.mxu0
      %v820 = vadd.f32 0.0, %v819
      %821 = vmatmul.bf16.gmra.mxu0 %v750
      %v822 = vpop.f32.mrf.mxu0
      %v823 = vadd.f32 0.0, %v822
      %v824 = vpop.f32.mrf.mxu0
      %v825 = vadd.f32 0.0, %v824
      %826 = vmatmul.bf16.gmra.mxu0 %v753
      %v827 = vpop.f32.mrf.mxu0
      %v828 = vadd.f32 0.0, %v827
      %v829 = vpop.f32.mrf.mxu0
      %v830 = vadd.f32 0.0, %v829
      %831 = vmatmul.bf16.gmra.mxu0 %v756
      %v832 = vpop.f32.mrf.mxu0
      %v833 = vadd.f32 0.0, %v832
      %v834 = vpop.f32.mrf.mxu0
      %v835 = vadd.f32 0.0, %v834
      %836 = vmatmul.bf16.gmra.mxu0 %v759
      %v837 = vpop.f32.mrf.mxu0
      %v838 = vadd.f32 0.0, %v837
      %v839 = vpop.f32.mrf.mxu0
      %v840 = vadd.f32 0.0, %v839
      %841 = vmatmul.bf16.gmra.mxu0 %v762
      %v842 = vpop.f32.mrf.mxu0
      %v843 = vadd.f32 0.0, %v842
      %v844 = vpop.f32.mrf.mxu0
      %v845 = vadd.f32 0.0, %v844
      %846 = vmatmul.bf16.gmra.mxu0 %v765
      %v847 = vpop.f32.mrf.mxu0
      %v848 = vadd.f32 0.0, %v847
      %v849 = vpop.f32.mrf.mxu0
      %v850 = vadd.f32 0.0, %v849
      %851 = vmatmul.bf16.gmra.mxu0 %v768
      %v852 = vpop.f32.mrf.mxu0
      %v853 = vadd.f32 0.0, %v852
      %v854 = vpop.f32.mrf.mxu0
      %v855 = vadd.f32 0.0, %v854
      %856 = vmatmul.bf16.gmra.mxu0 %v771
      %v857 = vpop.f32.mrf.mxu0
      %v858 = vadd.f32 0.0, %v857
      %v859 = vpop.f32.mrf.mxu0
      %v860 = vadd.f32 0.0, %v859
      %861 = vdwg.mxu0
      %v862 = vadd.f32 %v589, %v783
      %v863 = vadd.f32 %v591, %v785
      %v864 = vadd.f32 %v594, %v788
      %v865 = vadd.f32 %v596, %v790
      %v866 = vadd.f32 %v599, %v793
      %v867 = vadd.f32 %v601, %v795
      %v868 = vadd.f32 %v604, %v798
      %v869 = vadd.f32 %v606, %v800
      %v870 = vadd.f32 %v609, %v803
      %v871 = vadd.f32 %v611, %v805
      %v872 = vadd.f32 %v614, %v808
      %v873 = vadd.f32 %v616, %v810
      %v874 = vadd.f32 %v619, %v813
      %v875 = vadd.f32 %v621, %v815
      %v876 = vadd.f32 %v624, %v818
      %v877 = vadd.f32 %v626, %v820
      %v878 = vadd.f32 %v629, %v823
      %v879 = vadd.f32 %v631, %v825
      %v880 = vadd.f32 %v634, %v828
      %v881 = vadd.f32 %v636, %v830
      %v882 = vadd.f32 %v639, %v833
      %v883 = vadd.f32 %v641, %v835
      %v884 = vadd.f32 %v644, %v838
      %v885 = vadd.f32 %v646, %v840
      %v886 = vadd.f32 %v649, %v843
      %v887 = vadd.f32 %v651, %v845
      %v888 = vadd.f32 %v654, %v848
      %v889 = vadd.f32 %v656, %v850
      %v890 = vadd.f32 %v659, %v853
      %v891 = vadd.f32 %v661, %v855
      %v892 = vadd.f32 %v664, %v858
      %v893 = vadd.f32 %v666, %v860
      %s894 = scalar_lea.vmem %s273, 24
      %v895 = vld [vmem:[%s894] sm:$0xff]
      %v896 = vld [vmem:[%s894 + $0x8] sm:$0xff]
      %v897 = vld [vmem:[%s894 + $0x18] sm:$0xff]
      %v898 = vld [vmem:[%s894 + $0x20] sm:$0xff]
      %v899 = vld [vmem:[%s894 + $0x30] sm:$0xff]
      %v900 = vld [vmem:[%s894 + $0x38] sm:$0xff]
      %v901 = vld [vmem:[%s894 + $0x48] sm:$0xff]
      %v902 = vld [vmem:[%s894 + $0x50] sm:$0xff]
      %v903 = vld [vmem:[%s894 + $0x60] sm:$0xff]
      %v904 = vld [vmem:[%s894 + $0x68] sm:$0xff]
      %v905 = vld [vmem:[%s894 + $0x78] sm:$0xff]
      %v906 = vld [vmem:[%s894 + $0x80] sm:$0xff]
      %v907 = vld [vmem:[%s894 + $0x90] sm:$0xff]
      %v908 = vld [vmem:[%s894 + $0x98] sm:$0xff]
      %v909 = vld [vmem:[%s894 + $0xa8] sm:$0xff]
      %v910 = vld [vmem:[%s894 + $0xb0] sm:$0xff]
      %v911 = vld [vmem:[%s894 + $0xc0] sm:$0xff]
      %v912 = vld [vmem:[%s894 + $0xc8] sm:$0xff]
      %v913 = vld [vmem:[%s894 + $0xd8] sm:$0xff]
      %v914 = vld [vmem:[%s894 + $0xe0] sm:$0xff]
      %v915 = vld [vmem:[%s894 + $0xf0] sm:$0xff]
      %v916 = vld [vmem:[%s894 + $0xf8] sm:$0xff]
      %v917 = vld [vmem:[%s894 + $0x108] sm:$0xff]
      %v918 = vld [vmem:[%s894 + $0x110] sm:$0xff]
      %v919 = vld [vmem:[%s894 + $0x120] sm:$0xff]
      %v920 = vld [vmem:[%s894 + $0x128] sm:$0xff]
      %v921 = vld [vmem:[%s894 + $0x138] sm:$0xff]
      %v922 = vld [vmem:[%s894 + $0x140] sm:$0xff]
      %v923 = vld [vmem:[%s894 + $0x150] sm:$0xff]
      %v924 = vld [vmem:[%s894 + $0x158] sm:$0xff]
      %v925 = vld [vmem:[%s894 + $0x168] sm:$0xff]
      %v926 = vld [vmem:[%s894 + $0x170] sm:$0xff]
      %v927 = vpack.c.bf16 %v896, %v895
      %v928 = vpack.c.bf16 %v898, %v897
      %v929 = vpack.c.bf16 %v900, %v899
      %v930 = vpack.c.bf16 %v902, %v901
      %v931 = vpack.c.bf16 %v904, %v903
      %v932 = vpack.c.bf16 %v906, %v905
      %v933 = vpack.c.bf16 %v908, %v907
      %v934 = vpack.c.bf16 %v910, %v909
      %v935 = vpack.c.bf16 %v912, %v911
      %v936 = vpack.c.bf16 %v914, %v913
      %v937 = vpack.c.bf16 %v916, %v915
      %v938 = vpack.c.bf16 %v918, %v917
      %v939 = vpack.c.bf16 %v920, %v919
      %v940 = vpack.c.bf16 %v922, %v921
      %v941 = vpack.c.bf16 %v924, %v923
      %v942 = vpack.c.bf16 %v926, %v925
      %s943 = scalar_lea.vmem %s1, 24
      %v944 = vld [vmem:[%s943] sm:$0xf]
      %v945 = vld [vmem:[%s943 + $0x4] sm:$0xf]
      %v948 = vunpack.c.l.b16 %v944
      %v949 = vunpack.c.l.b16 %v945
      %v950 = vpack.c.b16 %v949, %v948
      %v953 = vsel %vm387, %v927, 0
      %v956 = vsel %vm387, %v928, 0
      %v959 = vsel %vm387, %v929, 0
      %v962 = vsel %vm387, %v930, 0
      %v965 = vsel %vm387, %v931, 0
      %v968 = vsel %vm387, %v932, 0
      %v971 = vsel %vm387, %v933, 0
      %v974 = vsel %vm387, %v934, 0
      %v977 = vsel %vm387, %v935, 0
      %v980 = vsel %vm387, %v936, 0
      %v983 = vsel %vm387, %v937, 0
      %v986 = vsel %vm387, %v938, 0
      %v989 = vsel %vm387, %v939, 0
      %v992 = vsel %vm387, %v940, 0
      %v995 = vsel %vm387, %v941, 0
      %v998 = vsel %vm387, %v942, 0
      %1000 = vmatpush.bf16.msra.mxu0 0
      %1001 = vmatpush.bf16.msra.mxu0 0
      %1002 = vmatpush.bf16.msra.mxu0 0
      %1003 = vmatpush.bf16.msra.mxu0 0
      %1004 = vmatpush.bf16.msra.mxu0 0
      %1005 = vmatpush.bf16.msra.mxu0 0
      %1006 = vmatpush.bf16.msra.mxu0 0
      %1007 = vmatpush.bf16.msra.mxu0 %v950
      %1008 = vmatmul.bf16.gmra.mxu0 %v953
      %v1009 = vpop.f32.mrf.mxu0
      %v1010 = vadd.f32 0.0, %v1009
      %v1011 = vpop.f32.mrf.mxu0
      %v1012 = vadd.f32 0.0, %v1011
      %1013 = vmatmul.bf16.gmra.mxu0 %v956
      %v1014 = vpop.f32.mrf.mxu0
      %v1015 = vadd.f32 0.0, %v1014
      %v1016 = vpop.f32.mrf.mxu0
      %v1017 = vadd.f32 0.0, %v1016
      %1018 = vmatmul.bf16.gmra.mxu0 %v959
      %v1019 = vpop.f32.mrf.mxu0
      %v1020 = vadd.f32 0.0, %v1019
      %v1021 = vpop.f32.mrf.mxu0
      %v1022 = vadd.f32 0.0, %v1021
      %1023 = vmatmul.bf16.gmra.mxu0 %v962
      %v1024 = vpop.f32.mrf.mxu0
      %v1025 = vadd.f32 0.0, %v1024
      %v1026 = vpop.f32.mrf.mxu0
      %v1027 = vadd.f32 0.0, %v1026
      %1028 = vmatmul.bf16.gmra.mxu0 %v965
      %v1029 = vpop.f32.mrf.mxu0
      %v1030 = vadd.f32 0.0, %v1029
      %v1031 = vpop.f32.mrf.mxu0
      %v1032 = vadd.f32 0.0, %v1031
      %1033 = vmatmul.bf16.gmra.mxu0 %v968
      %v1034 = vpop.f32.mrf.mxu0
      %v1035 = vadd.f32 0.0, %v1034
      %v1036 = vpop.f32.mrf.mxu0
      %v1037 = vadd.f32 0.0, %v1036
      %1038 = vmatmul.bf16.gmra.mxu0 %v971
      %v1039 = vpop.f32.mrf.mxu0
      %v1040 = vadd.f32 0.0, %v1039
      %v1041 = vpop.f32.mrf.mxu0
      %v1042 = vadd.f32 0.0, %v1041
      %1043 = vmatmul.bf16.gmra.mxu0 %v974
      %v1044 = vpop.f32.mrf.mxu0
      %v1045 = vadd.f32 0.0, %v1044
      %v1046 = vpop.f32.mrf.mxu0
      %v1047 = vadd.f32 0.0, %v1046
      %1048 = vmatmul.bf16.gmra.mxu0 %v977
      %v1049 = vpop.f32.mrf.mxu0
      %v1050 = vadd.f32 0.0, %v1049
      %v1051 = vpop.f32.mrf.mxu0
      %v1052 = vadd.f32 0.0, %v1051
      %1053 = vmatmul.bf16.gmra.mxu0 %v980
      %v1054 = vpop.f32.mrf.mxu0
      %v1055 = vadd.f32 0.0, %v1054
      %v1056 = vpop.f32.mrf.mxu0
      %v1057 = vadd.f32 0.0, %v1056
      %1058 = vmatmul.bf16.gmra.mxu0 %v983
      %v1059 = vpop.f32.mrf.mxu0
      %v1060 = vadd.f32 0.0, %v1059
      %v1061 = vpop.f32.mrf.mxu0
      %v1062 = vadd.f32 0.0, %v1061
      %1063 = vmatmul.bf16.gmra.mxu0 %v986
      %v1064 = vpop.f32.mrf.mxu0
      %v1065 = vadd.f32 0.0, %v1064
      %v1066 = vpop.f32.mrf.mxu0
      %v1067 = vadd.f32 0.0, %v1066
      %1068 = vmatmul.bf16.gmra.mxu0 %v989
      %v1069 = vpop.f32.mrf.mxu0
      %v1070 = vadd.f32 0.0, %v1069
      %v1071 = vpop.f32.mrf.mxu0
      %v1072 = vadd.f32 0.0, %v1071
      %1073 = vmatmul.bf16.gmra.mxu0 %v992
      %v1074 = vpop.f32.mrf.mxu0
      %v1075 = vadd.f32 0.0, %v1074
      %v1076 = vpop.f32.mrf.mxu0
      %v1077 = vadd.f32 0.0, %v1076
      %1078 = vmatmul.bf16.gmra.mxu0 %v995
      %v1079 = vpop.f32.mrf.mxu0
      %v1080 = vadd.f32 0.0, %v1079
      %v1081 = vpop.f32.mrf.mxu0
      %v1082 = vadd.f32 0.0, %v1081
      %1083 = vmatmul.bf16.gmra.mxu0 %v998
      %v1084 = vpop.f32.mrf.mxu0
      %v1085 = vadd.f32 0.0, %v1084
      %v1086 = vpop.f32.mrf.mxu0
      %v1087 = vadd.f32 0.0, %v1086
      %1088 = vdwg.mxu0
      %v1089 = vadd.f32 %v862, %v1010
      %v1090 = vadd.f32 %v863, %v1012
      %v1091 = vadd.f32 %v864, %v1015
      %v1092 = vadd.f32 %v865, %v1017
      %v1093 = vadd.f32 %v866, %v1020
      %v1094 = vadd.f32 %v867, %v1022
      %v1095 = vadd.f32 %v868, %v1025
      %v1096 = vadd.f32 %v869, %v1027
      %v1097 = vadd.f32 %v870, %v1030
      %v1098 = vadd.f32 %v871, %v1032
      %v1099 = vadd.f32 %v872, %v1035
      %v1100 = vadd.f32 %v873, %v1037
      %v1101 = vadd.f32 %v874, %v1040
      %v1102 = vadd.f32 %v875, %v1042
      %v1103 = vadd.f32 %v876, %v1045
      %v1104 = vadd.f32 %v877, %v1047
      %v1105 = vadd.f32 %v878, %v1050
      %v1106 = vadd.f32 %v879, %v1052
      %v1107 = vadd.f32 %v880, %v1055
      %v1108 = vadd.f32 %v881, %v1057
      %v1109 = vadd.f32 %v882, %v1060
      %v1110 = vadd.f32 %v883, %v1062
      %v1111 = vadd.f32 %v884, %v1065
      %v1112 = vadd.f32 %v885, %v1067
      %v1113 = vadd.f32 %v886, %v1070
      %v1114 = vadd.f32 %v887, %v1072
      %v1115 = vadd.f32 %v888, %v1075
      %v1116 = vadd.f32 %v889, %v1077
      %v1117 = vadd.f32 %v890, %v1080
      %v1118 = vadd.f32 %v891, %v1082
      %v1119 = vadd.f32 %v892, %v1085
      %v1120 = vadd.f32 %v893, %v1087
      %v1121 = vld [vmem:[%s894 + $0x1] sm:$0xff]
      %v1122 = vld [vmem:[%s894 + $0x9] sm:$0xff]
      %v1123 = vld [vmem:[%s894 + $0x19] sm:$0xff]
      %v1124 = vld [vmem:[%s894 + $0x21] sm:$0xff]
      %v1125 = vld [vmem:[%s894 + $0x31] sm:$0xff]
      %v1126 = vld [vmem:[%s894 + $0x39] sm:$0xff]
      %v1127 = vld [vmem:[%s894 + $0x49] sm:$0xff]
      %v1128 = vld [vmem:[%s894 + $0x51] sm:$0xff]
      %v1129 = vld [vmem:[%s894 + $0x61] sm:$0xff]
      %v1130 = vld [vmem:[%s894 + $0x69] sm:$0xff]
      %v1131 = vld [vmem:[%s894 + $0x79] sm:$0xff]
      %v1132 = vld [vmem:[%s894 + $0x81] sm:$0xff]
      %v1133 = vld [vmem:[%s894 + $0x91] sm:$0xff]
      %v1134 = vld [vmem:[%s894 + $0x99] sm:$0xff]
      %v1135 = vld [vmem:[%s894 + $0xa9] sm:$0xff]
      %v1136 = vld [vmem:[%s894 + $0xb1] sm:$0xff]
      %v1137 = vld [vmem:[%s894 + $0xc1] sm:$0xff]
      %v1138 = vld [vmem:[%s894 + $0xc9] sm:$0xff]
      %v1139 = vld [vmem:[%s894 + $0xd9] sm:$0xff]
      %v1140 = vld [vmem:[%s894 + $0xe1] sm:$0xff]
      %v1141 = vld [vmem:[%s894 + $0xf1] sm:$0xff]
      %v1142 = vld [vmem:[%s894 + $0xf9] sm:$0xff]
      %v1143 = vld [vmem:[%s894 + $0x109] sm:$0xff]
      %v1144 = vld [vmem:[%s894 + $0x111] sm:$0xff]
      %v1145 = vld [vmem:[%s894 + $0x121] sm:$0xff]
      %v1146 = vld [vmem:[%s894 + $0x129] sm:$0xff]
      %v1147 = vld [vmem:[%s894 + $0x139] sm:$0xff]
      %v1148 = vld [vmem:[%s894 + $0x141] sm:$0xff]
      %v1149 = vld [vmem:[%s894 + $0x151] sm:$0xff]
      %v1150 = vld [vmem:[%s894 + $0x159] sm:$0xff]
      %v1151 = vld [vmem:[%s894 + $0x169] sm:$0xff]
      %v1152 = vld [vmem:[%s894 + $0x171] sm:$0xff]
      %v1153 = vpack.c.bf16 %v1122, %v1121
      %v1154 = vpack.c.bf16 %v1124, %v1123
      %v1155 = vpack.c.bf16 %v1126, %v1125
      %v1156 = vpack.c.bf16 %v1128, %v1127
      %v1157 = vpack.c.bf16 %v1130, %v1129
      %v1158 = vpack.c.bf16 %v1132, %v1131
      %v1159 = vpack.c.bf16 %v1134, %v1133
      %v1160 = vpack.c.bf16 %v1136, %v1135
      %v1161 = vpack.c.bf16 %v1138, %v1137
      %v1162 = vpack.c.bf16 %v1140, %v1139
      %v1163 = vpack.c.bf16 %v1142, %v1141
      %v1164 = vpack.c.bf16 %v1144, %v1143
      %v1165 = vpack.c.bf16 %v1146, %v1145
      %v1166 = vpack.c.bf16 %v1148, %v1147
      %v1167 = vpack.c.bf16 %v1150, %v1149
      %v1168 = vpack.c.bf16 %v1152, %v1151
      %s1169 = scalar_lea.vmem %s1, 32
      %v1170 = vld [vmem:[%s1169] sm:$0xf]
      %v1171 = vld [vmem:[%s1169 + $0x4] sm:$0xf]
      %v1174 = vunpack.c.l.b16 %v1170
      %v1175 = vunpack.c.l.b16 %v1171
      %v1176 = vpack.c.b16 %v1175, %v1174
      %v1179 = vsel %vm387, %v1153, 0
      %v1182 = vsel %vm387, %v1154, 0
      %v1185 = vsel %vm387, %v1155, 0
      %v1188 = vsel %vm387, %v1156, 0
      %v1191 = vsel %vm387, %v1157, 0
      %v1194 = vsel %vm387, %v1158, 0
      %v1197 = vsel %vm387, %v1159, 0
      %v1200 = vsel %vm387, %v1160, 0
      %v1203 = vsel %vm387, %v1161, 0
      %v1206 = vsel %vm387, %v1162, 0
      %v1209 = vsel %vm387, %v1163, 0
      %v1212 = vsel %vm387, %v1164, 0
      %v1215 = vsel %vm387, %v1165, 0
      %v1218 = vsel %vm387, %v1166, 0
      %v1221 = vsel %vm387, %v1167, 0
      %v1224 = vsel %vm387, %v1168, 0
      %1226 = vmatpush.bf16.msra.mxu0 0
      %1227 = vmatpush.bf16.msra.mxu0 0
      %1228 = vmatpush.bf16.msra.mxu0 0
      %1229 = vmatpush.bf16.msra.mxu0 0
      %1230 = vmatpush.bf16.msra.mxu0 0
      %1231 = vmatpush.bf16.msra.mxu0 0
      %1232 = vmatpush.bf16.msra.mxu0 0
      %1233 = vmatpush.bf16.msra.mxu0 %v1176
      %1234 = vmatmul.bf16.gmra.mxu0 %v1179
      %v1235 = vpop.f32.mrf.mxu0
      %v1236 = vadd.f32 0.0, %v1235
      %v1237 = vpop.f32.mrf.mxu0
      %v1238 = vadd.f32 0.0, %v1237
      %1239 = vmatmul.bf16.gmra.mxu0 %v1182
      %v1240 = vpop.f32.mrf.mxu0
      %v1241 = vadd.f32 0.0, %v1240
      %v1242 = vpop.f32.mrf.mxu0
      %v1243 = vadd.f32 0.0, %v1242
      %1244 = vmatmul.bf16.gmra.mxu0 %v1185
      %v1245 = vpop.f32.mrf.mxu0
      %v1246 = vadd.f32 0.0, %v1245
      %v1247 = vpop.f32.mrf.mxu0
      %v1248 = vadd.f32 0.0, %v1247
      %1249 = vmatmul.bf16.gmra.mxu0 %v1188
      %v1250 = vpop.f32.mrf.mxu0
      %v1251 = vadd.f32 0.0, %v1250
      %v1252 = vpop.f32.mrf.mxu0
      %v1253 = vadd.f32 0.0, %v1252
      %1254 = vmatmul.bf16.gmra.mxu0 %v1191
      %v1255 = vpop.f32.mrf.mxu0
      %v1256 = vadd.f32 0.0, %v1255
      %v1257 = vpop.f32.mrf.mxu0
      %v1258 = vadd.f32 0.0, %v1257
      %1259 = vmatmul.bf16.gmra.mxu0 %v1194
      %v1260 = vpop.f32.mrf.mxu0
      %v1261 = vadd.f32 0.0, %v1260
      %v1262 = vpop.f32.mrf.mxu0
      %v1263 = vadd.f32 0.0, %v1262
      %1264 = vmatmul.bf16.gmra.mxu0 %v1197
      %v1265 = vpop.f32.mrf.mxu0
      %v1266 = vadd.f32 0.0, %v1265
      %v1267 = vpop.f32.mrf.mxu0
      %v1268 = vadd.f32 0.0, %v1267
      %1269 = vmatmul.bf16.gmra.mxu0 %v1200
      %v1270 = vpop.f32.mrf.mxu0
      %v1271 = vadd.f32 0.0, %v1270
      %v1272 = vpop.f32.mrf.mxu0
      %v1273 = vadd.f32 0.0, %v1272
      %1274 = vmatmul.bf16.gmra.mxu0 %v1203
      %v1275 = vpop.f32.mrf.mxu0
      %v1276 = vadd.f32 0.0, %v1275
      %v1277 = vpop.f32.mrf.mxu0
      %v1278 = vadd.f32 0.0, %v1277
      %1279 = vmatmul.bf16.gmra.mxu0 %v1206
      %v1280 = vpop.f32.mrf.mxu0
      %v1281 = vadd.f32 0.0, %v1280
      %v1282 = vpop.f32.mrf.mxu0
      %v1283 = vadd.f32 0.0, %v1282
      %1284 = vmatmul.bf16.gmra.mxu0 %v1209
      %v1285 = vpop.f32.mrf.mxu0
      %v1286 = vadd.f32 0.0, %v1285
      %v1287 = vpop.f32.mrf.mxu0
      %v1288 = vadd.f32 0.0, %v1287
      %1289 = vmatmul.bf16.gmra.mxu0 %v1212
      %v1290 = vpop.f32.mrf.mxu0
      %v1291 = vadd.f32 0.0, %v1290
      %v1292 = vpop.f32.mrf.mxu0
      %v1293 = vadd.f32 0.0, %v1292
      %1294 = vmatmul.bf16.gmra.mxu0 %v1215
      %v1295 = vpop.f32.mrf.mxu0
      %v1296 = vadd.f32 0.0, %v1295
      %v1297 = vpop.f32.mrf.mxu0
      %v1298 = vadd.f32 0.0, %v1297
      %1299 = vmatmul.bf16.gmra.mxu0 %v1218
      %v1300 = vpop.f32.mrf.mxu0
      %v1301 = vadd.f32 0.0, %v1300
      %v1302 = vpop.f32.mrf.mxu0
      %v1303 = vadd.f32 0.0, %v1302
      %1304 = vmatmul.bf16.gmra.mxu0 %v1221
      %v1305 = vpop.f32.mrf.mxu0
      %v1306 = vadd.f32 0.0, %v1305
      %v1307 = vpop.f32.mrf.mxu0
      %v1308 = vadd.f32 0.0, %v1307
      %1309 = vmatmul.bf16.gmra.mxu0 %v1224
      %v1310 = vpop.f32.mrf.mxu0
      %v1311 = vadd.f32 0.0, %v1310
      %v1312 = vpop.f32.mrf.mxu0
      %v1313 = vadd.f32 0.0, %v1312
      %1314 = vdwg.mxu0
      %v1315 = vadd.f32 %v1089, %v1236
      %v1316 = vadd.f32 %v1090, %v1238
      %v1317 = vadd.f32 %v1091, %v1241
      %v1318 = vadd.f32 %v1092, %v1243
      %v1319 = vadd.f32 %v1093, %v1246
      %v1320 = vadd.f32 %v1094, %v1248
      %v1321 = vadd.f32 %v1095, %v1251
      %v1322 = vadd.f32 %v1096, %v1253
      %v1323 = vadd.f32 %v1097, %v1256
      %v1324 = vadd.f32 %v1098, %v1258
      %v1325 = vadd.f32 %v1099, %v1261
      %v1326 = vadd.f32 %v1100, %v1263
      %v1327 = vadd.f32 %v1101, %v1266
      %v1328 = vadd.f32 %v1102, %v1268
      %v1329 = vadd.f32 %v1103, %v1271
      %v1330 = vadd.f32 %v1104, %v1273
      %v1331 = vadd.f32 %v1105, %v1276
      %v1332 = vadd.f32 %v1106, %v1278
      %v1333 = vadd.f32 %v1107, %v1281
      %v1334 = vadd.f32 %v1108, %v1283
      %v1335 = vadd.f32 %v1109, %v1286
      %v1336 = vadd.f32 %v1110, %v1288
      %v1337 = vadd.f32 %v1111, %v1291
      %v1338 = vadd.f32 %v1112, %v1293
      %v1339 = vadd.f32 %v1113, %v1296
      %v1340 = vadd.f32 %v1114, %v1298
      %v1341 = vadd.f32 %v1115, %v1301
      %v1342 = vadd.f32 %v1116, %v1303
      %v1343 = vadd.f32 %v1117, %v1306
      %v1344 = vadd.f32 %v1118, %v1308
      %v1345 = vadd.f32 %v1119, %v1311
      %v1346 = vadd.f32 %v1120, %v1313
      %v1347 = vld [vmem:[%s894 + $0x2] sm:$0xff]
      %v1348 = vld [vmem:[%s894 + $0xa] sm:$0xff]
      %v1349 = vld [vmem:[%s894 + $0x1a] sm:$0xff]
      %v1350 = vld [vmem:[%s894 + $0x22] sm:$0xff]
      %v1351 = vld [vmem:[%s894 + $0x32] sm:$0xff]
      %v1352 = vld [vmem:[%s894 + $0x3a] sm:$0xff]
      %v1353 = vld [vmem:[%s894 + $0x4a] sm:$0xff]
      %v1354 = vld [vmem:[%s894 + $0x52] sm:$0xff]
      %v1355 = vld [vmem:[%s894 + $0x62] sm:$0xff]
      %v1356 = vld [vmem:[%s894 + $0x6a] sm:$0xff]
      %v1357 = vld [vmem:[%s894 + $0x7a] sm:$0xff]
      %v1358 = vld [vmem:[%s894 + $0x82] sm:$0xff]
      %v1359 = vld [vmem:[%s894 + $0x92] sm:$0xff]
      %v1360 = vld [vmem:[%s894 + $0x9a] sm:$0xff]
      %v1361 = vld [vmem:[%s894 + $0xaa] sm:$0xff]
      %v1362 = vld [vmem:[%s894 + $0xb2] sm:$0xff]
      %v1363 = vld [vmem:[%s894 + $0xc2] sm:$0xff]
      %v1364 = vld [vmem:[%s894 + $0xca] sm:$0xff]
      %v1365 = vld [vmem:[%s894 + $0xda] sm:$0xff]
      %v1366 = vld [vmem:[%s894 + $0xe2] sm:$0xff]
      %v1367 = vld [vmem:[%s894 + $0xf2] sm:$0xff]
      %v1368 = vld [vmem:[%s894 + $0xfa] sm:$0xff]
      %v1369 = vld [vmem:[%s894 + $0x10a] sm:$0xff]
      %v1370 = vld [vmem:[%s894 + $0x112] sm:$0xff]
      %v1371 = vld [vmem:[%s894 + $0x122] sm:$0xff]
      %v1372 = vld [vmem:[%s894 + $0x12a] sm:$0xff]
      %v1373 = vld [vmem:[%s894 + $0x13a] sm:$0xff]
      %v1374 = vld [vmem:[%s894 + $0x142] sm:$0xff]
      %v1375 = vld [vmem:[%s894 + $0x152] sm:$0xff]
      %v1376 = vld [vmem:[%s894 + $0x15a] sm:$0xff]
      %v1377 = vld [vmem:[%s894 + $0x16a] sm:$0xff]
      %v1378 = vld [vmem:[%s894 + $0x172] sm:$0xff]
      %v1379 = vpack.c.bf16 %v1348, %v1347
      %v1380 = vpack.c.bf16 %v1350, %v1349
      %v1381 = vpack.c.bf16 %v1352, %v1351
      %v1382 = vpack.c.bf16 %v1354, %v1353
      %v1383 = vpack.c.bf16 %v1356, %v1355
      %v1384 = vpack.c.bf16 %v1358, %v1357
      %v1385 = vpack.c.bf16 %v1360, %v1359
      %v1386 = vpack.c.bf16 %v1362, %v1361
      %v1387 = vpack.c.bf16 %v1364, %v1363
      %v1388 = vpack.c.bf16 %v1366, %v1365
      %v1389 = vpack.c.bf16 %v1368, %v1367
      %v1390 = vpack.c.bf16 %v1370, %v1369
      %v1391 = vpack.c.bf16 %v1372, %v1371
      %v1392 = vpack.c.bf16 %v1374, %v1373
      %v1393 = vpack.c.bf16 %v1376, %v1375
      %v1394 = vpack.c.bf16 %v1378, %v1377
      %s1395 = scalar_lea.vmem %s1, 40
      %v1396 = vld [vmem:[%s1395] sm:$0xf]
      %v1397 = vld [vmem:[%s1395 + $0x4] sm:$0xf]
      %v1400 = vunpack.c.l.b16 %v1396
      %v1401 = vunpack.c.l.b16 %v1397
      %v1402 = vpack.c.b16 %v1401, %v1400
      %v1405 = vsel %vm387, %v1379, 0
      %v1408 = vsel %vm387, %v1380, 0
      %v1411 = vsel %vm387, %v1381, 0
      %v1414 = vsel %vm387, %v1382, 0
      %v1417 = vsel %vm387, %v1383, 0
      %v1420 = vsel %vm387, %v1384, 0
      %v1423 = vsel %vm387, %v1385, 0
      %v1426 = vsel %vm387, %v1386, 0
      %v1429 = vsel %vm387, %v1387, 0
      %v1432 = vsel %vm387, %v1388, 0
      %v1435 = vsel %vm387, %v1389, 0
      %v1438 = vsel %vm387, %v1390, 0
      %v1441 = vsel %vm387, %v1391, 0
      %v1444 = vsel %vm387, %v1392, 0
      %v1447 = vsel %vm387, %v1393, 0
      %v1450 = vsel %vm387, %v1394, 0
      %1452 = vmatpush.bf16.msra.mxu0 0
      %1453 = vmatpush.bf16.msra.mxu0 0
      %1454 = vmatpush.bf16.msra.mxu0 0
      %1455 = vmatpush.bf16.msra.mxu0 0
      %1456 = vmatpush.bf16.msra.mxu0 0
      %1457 = vmatpush.bf16.msra.mxu0 0
      %1458 = vmatpush.bf16.msra.mxu0 0
      %1459 = vmatpush.bf16.msra.mxu0 %v1402
      %1460 = vmatmul.bf16.gmra.mxu0 %v1405
      %v1461 = vpop.f32.mrf.mxu0
      %v1462 = vadd.f32 0.0, %v1461
      %v1463 = vpop.f32.mrf.mxu0
      %v1464 = vadd.f32 0.0, %v1463
      %1465 = vmatmul.bf16.gmra.mxu0 %v1408
      %v1466 = vpop.f32.mrf.mxu0
      %v1467 = vadd.f32 0.0, %v1466
      %v1468 = vpop.f32.mrf.mxu0
      %v1469 = vadd.f32 0.0, %v1468
      %1470 = vmatmul.bf16.gmra.mxu0 %v1411
      %v1471 = vpop.f32.mrf.mxu0
      %v1472 = vadd.f32 0.0, %v1471
      %v1473 = vpop.f32.mrf.mxu0
      %v1474 = vadd.f32 0.0, %v1473
      %1475 = vmatmul.bf16.gmra.mxu0 %v1414
      %v1476 = vpop.f32.mrf.mxu0
      %v1477 = vadd.f32 0.0, %v1476
      %v1478 = vpop.f32.mrf.mxu0
      %v1479 = vadd.f32 0.0, %v1478
      %1480 = vmatmul.bf16.gmra.mxu0 %v1417
      %v1481 = vpop.f32.mrf.mxu0
      %v1482 = vadd.f32 0.0, %v1481
      %v1483 = vpop.f32.mrf.mxu0
      %v1484 = vadd.f32 0.0, %v1483
      %1485 = vmatmul.bf16.gmra.mxu0 %v1420
      %v1486 = vpop.f32.mrf.mxu0
      %v1487 = vadd.f32 0.0, %v1486
      %v1488 = vpop.f32.mrf.mxu0
      %v1489 = vadd.f32 0.0, %v1488
      %1490 = vmatmul.bf16.gmra.mxu0 %v1423
      %v1491 = vpop.f32.mrf.mxu0
      %v1492 = vadd.f32 0.0, %v1491
      %v1493 = vpop.f32.mrf.mxu0
      %v1494 = vadd.f32 0.0, %v1493
      %1495 = vmatmul.bf16.gmra.mxu0 %v1426
      %v1496 = vpop.f32.mrf.mxu0
      %v1497 = vadd.f32 0.0, %v1496
      %v1498 = vpop.f32.mrf.mxu0
      %v1499 = vadd.f32 0.0, %v1498
      %1500 = vmatmul.bf16.gmra.mxu0 %v1429
      %v1501 = vpop.f32.mrf.mxu0
      %v1502 = vadd.f32 0.0, %v1501
      %v1503 = vpop.f32.mrf.mxu0
      %v1504 = vadd.f32 0.0, %v1503
      %1505 = vmatmul.bf16.gmra.mxu0 %v1432
      %v1506 = vpop.f32.mrf.mxu0
      %v1507 = vadd.f32 0.0, %v1506
      %v1508 = vpop.f32.mrf.mxu0
      %v1509 = vadd.f32 0.0, %v1508
      %1510 = vmatmul.bf16.gmra.mxu0 %v1435
      %v1511 = vpop.f32.mrf.mxu0
      %v1512 = vadd.f32 0.0, %v1511
      %v1513 = vpop.f32.mrf.mxu0
      %v1514 = vadd.f32 0.0, %v1513
      %1515 = vmatmul.bf16.gmra.mxu0 %v1438
      %v1516 = vpop.f32.mrf.mxu0
      %v1517 = vadd.f32 0.0, %v1516
      %v1518 = vpop.f32.mrf.mxu0
      %v1519 = vadd.f32 0.0, %v1518
      %1520 = vmatmul.bf16.gmra.mxu0 %v1441
      %v1521 = vpop.f32.mrf.mxu0
      %v1522 = vadd.f32 0.0, %v1521
      %v1523 = vpop.f32.mrf.mxu0
      %v1524 = vadd.f32 0.0, %v1523
      %1525 = vmatmul.bf16.gmra.mxu0 %v1444
      %v1526 = vpop.f32.mrf.mxu0
      %v1527 = vadd.f32 0.0, %v1526
      %v1528 = vpop.f32.mrf.mxu0
      %v1529 = vadd.f32 0.0, %v1528
      %1530 = vmatmul.bf16.gmra.mxu0 %v1447
      %v1531 = vpop.f32.mrf.mxu0
      %v1532 = vadd.f32 0.0, %v1531
      %v1533 = vpop.f32.mrf.mxu0
      %v1534 = vadd.f32 0.0, %v1533
      %1535 = vmatmul.bf16.gmra.mxu0 %v1450
      %v1536 = vpop.f32.mrf.mxu0
      %v1537 = vadd.f32 0.0, %v1536
      %v1538 = vpop.f32.mrf.mxu0
      %v1539 = vadd.f32 0.0, %v1538
      %1540 = vdwg.mxu0
      %v1541 = vadd.f32 %v1315, %v1462
      %v1542 = vadd.f32 %v1316, %v1464
      %v1543 = vadd.f32 %v1317, %v1467
      %v1544 = vadd.f32 %v1318, %v1469
      %v1545 = vadd.f32 %v1319, %v1472
      %v1546 = vadd.f32 %v1320, %v1474
      %v1547 = vadd.f32 %v1321, %v1477
      %v1548 = vadd.f32 %v1322, %v1479
      %v1549 = vadd.f32 %v1323, %v1482
      %v1550 = vadd.f32 %v1324, %v1484
      %v1551 = vadd.f32 %v1325, %v1487
      %v1552 = vadd.f32 %v1326, %v1489
      %v1553 = vadd.f32 %v1327, %v1492
      %v1554 = vadd.f32 %v1328, %v1494
      %v1555 = vadd.f32 %v1329, %v1497
      %v1556 = vadd.f32 %v1330, %v1499
      %v1557 = vadd.f32 %v1331, %v1502
      %v1558 = vadd.f32 %v1332, %v1504
      %v1559 = vadd.f32 %v1333, %v1507
      %v1560 = vadd.f32 %v1334, %v1509
      %v1561 = vadd.f32 %v1335, %v1512
      %v1562 = vadd.f32 %v1336, %v1514
      %v1563 = vadd.f32 %v1337, %v1517
      %v1564 = vadd.f32 %v1338, %v1519
      %v1565 = vadd.f32 %v1339, %v1522
      %v1566 = vadd.f32 %v1340, %v1524
      %v1567 = vadd.f32 %v1341, %v1527
      %v1568 = vadd.f32 %v1342, %v1529
      %v1569 = vadd.f32 %v1343, %v1532
      %v1570 = vadd.f32 %v1344, %v1534
      %v1571 = vadd.f32 %v1345, %v1537
      %v1572 = vadd.f32 %v1346, %v1539
      %s1573 = scalar_lea.vmem %s273, 48
      %v1574 = vld [vmem:[%s1573] sm:$0xff]
      %v1575 = vld [vmem:[%s1573 + $0x8] sm:$0xff]
      %v1576 = vld [vmem:[%s1573 + $0x18] sm:$0xff]
      %v1577 = vld [vmem:[%s1573 + $0x20] sm:$0xff]
      %v1578 = vld [vmem:[%s1573 + $0x30] sm:$0xff]
      %v1579 = vld [vmem:[%s1573 + $0x38] sm:$0xff]
      %v1580 = vld [vmem:[%s1573 + $0x48] sm:$0xff]
      %v1581 = vld [vmem:[%s1573 + $0x50] sm:$0xff]
      %v1582 = vld [vmem:[%s1573 + $0x60] sm:$0xff]
      %v1583 = vld [vmem:[%s1573 + $0x68] sm:$0xff]
      %v1584 = vld [vmem:[%s1573 + $0x78] sm:$0xff]
      %v1585 = vld [vmem:[%s1573 + $0x80] sm:$0xff]
      %v1586 = vld [vmem:[%s1573 + $0x90] sm:$0xff]
      %v1587 = vld [vmem:[%s1573 + $0x98] sm:$0xff]
      %v1588 = vld [vmem:[%s1573 + $0xa8] sm:$0xff]
      %v1589 = vld [vmem:[%s1573 + $0xb0] sm:$0xff]
      %v1590 = vld [vmem:[%s1573 + $0xc0] sm:$0xff]
      %v1591 = vld [vmem:[%s1573 + $0xc8] sm:$0xff]
      %v1592 = vld [vmem:[%s1573 + $0xd8] sm:$0xff]
      %v1593 = vld [vmem:[%s1573 + $0xe0] sm:$0xff]
      %v1594 = vld [vmem:[%s1573 + $0xf0] sm:$0xff]
      %v1595 = vld [vmem:[%s1573 + $0xf8] sm:$0xff]
      %v1596 = vld [vmem:[%s1573 + $0x108] sm:$0xff]
      %v1597 = vld [vmem:[%s1573 + $0x110] sm:$0xff]
      %v1598 = vld [vmem:[%s1573 + $0x120] sm:$0xff]
      %v1599 = vld [vmem:[%s1573 + $0x128] sm:$0xff]
      %v1600 = vld [vmem:[%s1573 + $0x138] sm:$0xff]
      %v1601 = vld [vmem:[%s1573 + $0x140] sm:$0xff]
      %v1602 = vld [vmem:[%s1573 + $0x150] sm:$0xff]
      %v1603 = vld [vmem:[%s1573 + $0x158] sm:$0xff]
      %v1604 = vld [vmem:[%s1573 + $0x168] sm:$0xff]
      %v1605 = vld [vmem:[%s1573 + $0x170] sm:$0xff]
      %v1606 = vpack.c.bf16 %v1575, %v1574
      %v1607 = vpack.c.bf16 %v1577, %v1576
      %v1608 = vpack.c.bf16 %v1579, %v1578
      %v1609 = vpack.c.bf16 %v1581, %v1580
      %v1610 = vpack.c.bf16 %v1583, %v1582
      %v1611 = vpack.c.bf16 %v1585, %v1584
      %v1612 = vpack.c.bf16 %v1587, %v1586
      %v1613 = vpack.c.bf16 %v1589, %v1588
      %v1614 = vpack.c.bf16 %v1591, %v1590
      %v1615 = vpack.c.bf16 %v1593, %v1592
      %v1616 = vpack.c.bf16 %v1595, %v1594
      %v1617 = vpack.c.bf16 %v1597, %v1596
      %v1618 = vpack.c.bf16 %v1599, %v1598
      %v1619 = vpack.c.bf16 %v1601, %v1600
      %v1620 = vpack.c.bf16 %v1603, %v1602
      %v1621 = vpack.c.bf16 %v1605, %v1604
      %s1622 = scalar_lea.vmem %s1, 48
      %v1623 = vld [vmem:[%s1622] sm:$0xf]
      %v1624 = vld [vmem:[%s1622 + $0x4] sm:$0xf]
      %v1627 = vunpack.c.l.b16 %v1623
      %v1628 = vunpack.c.l.b16 %v1624
      %v1629 = vpack.c.b16 %v1628, %v1627
      %v1632 = vsel %vm387, %v1606, 0
      %v1635 = vsel %vm387, %v1607, 0
      %v1638 = vsel %vm387, %v1608, 0
      %v1641 = vsel %vm387, %v1609, 0
      %v1644 = vsel %vm387, %v1610, 0
      %v1647 = vsel %vm387, %v1611, 0
      %v1650 = vsel %vm387, %v1612, 0
      %v1653 = vsel %vm387, %v1613, 0
      %v1656 = vsel %vm387, %v1614, 0
      %v1659 = vsel %vm387, %v1615, 0
      %v1662 = vsel %vm387, %v1616, 0
      %v1665 = vsel %vm387, %v1617, 0
      %v1668 = vsel %vm387, %v1618, 0
      %v1671 = vsel %vm387, %v1619, 0
      %v1674 = vsel %vm387, %v1620, 0
      %v1677 = vsel %vm387, %v1621, 0
      %1679 = vmatpush.bf16.msra.mxu0 0
      %1680 = vmatpush.bf16.msra.mxu0 0
      %1681 = vmatpush.bf16.msra.mxu0 0
      %1682 = vmatpush.bf16.msra.mxu0 0
      %1683 = vmatpush.bf16.msra.mxu0 0
      %1684 = vmatpush.bf16.msra.mxu0 0
      %1685 = vmatpush.bf16.msra.mxu0 0
      %1686 = vmatpush.bf16.msra.mxu0 %v1629
      %1687 = vmatmul.bf16.gmra.mxu0 %v1632
      %v1688 = vpop.f32.mrf.mxu0
      %v1689 = vadd.f32 0.0, %v1688
      %v1690 = vpop.f32.mrf.mxu0
      %v1691 = vadd.f32 0.0, %v1690
      %1692 = vmatmul.bf16.gmra.mxu0 %v1635
      %v1693 = vpop.f32.mrf.mxu0
      %v1694 = vadd.f32 0.0, %v1693
      %v1695 = vpop.f32.mrf.mxu0
      %v1696 = vadd.f32 0.0, %v1695
      %1697 = vmatmul.bf16.gmra.mxu0 %v1638
      %v1698 = vpop.f32.mrf.mxu0
      %v1699 = vadd.f32 0.0, %v1698
      %v1700 = vpop.f32.mrf.mxu0
      %v1701 = vadd.f32 0.0, %v1700
      %1702 = vmatmul.bf16.gmra.mxu0 %v1641
      %v1703 = vpop.f32.mrf.mxu0
      %v1704 = vadd.f32 0.0, %v1703
      %v1705 = vpop.f32.mrf.mxu0
      %v1706 = vadd.f32 0.0, %v1705
      %1707 = vmatmul.bf16.gmra.mxu0 %v1644
      %v1708 = vpop.f32.mrf.mxu0
      %v1709 = vadd.f32 0.0, %v1708
      %v1710 = vpop.f32.mrf.mxu0
      %v1711 = vadd.f32 0.0, %v1710
      %1712 = vmatmul.bf16.gmra.mxu0 %v1647
      %v1713 = vpop.f32.mrf.mxu0
      %v1714 = vadd.f32 0.0, %v1713
      %v1715 = vpop.f32.mrf.mxu0
      %v1716 = vadd.f32 0.0, %v1715
      %1717 = vmatmul.bf16.gmra.mxu0 %v1650
      %v1718 = vpop.f32.mrf.mxu0
      %v1719 = vadd.f32 0.0, %v1718
      %v1720 = vpop.f32.mrf.mxu0
      %v1721 = vadd.f32 0.0, %v1720
      %1722 = vmatmul.bf16.gmra.mxu0 %v1653
      %v1723 = vpop.f32.mrf.mxu0
      %v1724 = vadd.f32 0.0, %v1723
      %v1725 = vpop.f32.mrf.mxu0
      %v1726 = vadd.f32 0.0, %v1725
      %1727 = vmatmul.bf16.gmra.mxu0 %v1656
      %v1728 = vpop.f32.mrf.mxu0
      %v1729 = vadd.f32 0.0, %v1728
      %v1730 = vpop.f32.mrf.mxu0
      %v1731 = vadd.f32 0.0, %v1730
      %1732 = vmatmul.bf16.gmra.mxu0 %v1659
      %v1733 = vpop.f32.mrf.mxu0
      %v1734 = vadd.f32 0.0, %v1733
      %v1735 = vpop.f32.mrf.mxu0
      %v1736 = vadd.f32 0.0, %v1735
      %1737 = vmatmul.bf16.gmra.mxu0 %v1662
      %v1738 = vpop.f32.mrf.mxu0
      %v1739 = vadd.f32 0.0, %v1738
      %v1740 = vpop.f32.mrf.mxu0
      %v1741 = vadd.f32 0.0, %v1740
      %1742 = vmatmul.bf16.gmra.mxu0 %v1665
      %v1743 = vpop.f32.mrf.mxu0
      %v1744 = vadd.f32 0.0, %v1743
      %v1745 = vpop.f32.mrf.mxu0
      %v1746 = vadd.f32 0.0, %v1745
      %1747 = vmatmul.bf16.gmra.mxu0 %v1668
      %v1748 = vpop.f32.mrf.mxu0
      %v1749 = vadd.f32 0.0, %v1748
      %v1750 = vpop.f32.mrf.mxu0
      %v1751 = vadd.f32 0.0, %v1750
      %1752 = vmatmul.bf16.gmra.mxu0 %v1671
      %v1753 = vpop.f32.mrf.mxu0
      %v1754 = vadd.f32 0.0, %v1753
      %v1755 = vpop.f32.mrf.mxu0
      %v1756 = vadd.f32 0.0, %v1755
      %1757 = vmatmul.bf16.gmra.mxu0 %v1674
      %v1758 = vpop.f32.mrf.mxu0
      %v1759 = vadd.f32 0.0, %v1758
      %v1760 = vpop.f32.mrf.mxu0
      %v1761 = vadd.f32 0.0, %v1760
      %1762 = vmatmul.bf16.gmra.mxu0 %v1677
      %v1763 = vpop.f32.mrf.mxu0
      %v1764 = vadd.f32 0.0, %v1763
      %v1765 = vpop.f32.mrf.mxu0
      %v1766 = vadd.f32 0.0, %v1765
      %1767 = vdwg.mxu0
      %v1768 = vadd.f32 %v1541, %v1689
      %v1769 = vadd.f32 %v1542, %v1691
      %v1770 = vadd.f32 %v1543, %v1694
      %v1771 = vadd.f32 %v1544, %v1696
      %v1772 = vadd.f32 %v1545, %v1699
      %v1773 = vadd.f32 %v1546, %v1701
      %v1774 = vadd.f32 %v1547, %v1704
      %v1775 = vadd.f32 %v1548, %v1706
      %v1776 = vadd.f32 %v1549, %v1709
      %v1777 = vadd.f32 %v1550, %v1711
      %v1778 = vadd.f32 %v1551, %v1714
      %v1779 = vadd.f32 %v1552, %v1716
      %v1780 = vadd.f32 %v1553, %v1719
      %v1781 = vadd.f32 %v1554, %v1721
      %v1782 = vadd.f32 %v1555, %v1724
      %v1783 = vadd.f32 %v1556, %v1726
      %v1784 = vadd.f32 %v1557, %v1729
      %v1785 = vadd.f32 %v1558, %v1731
      %v1786 = vadd.f32 %v1559, %v1734
      %v1787 = vadd.f32 %v1560, %v1736
      %v1788 = vadd.f32 %v1561, %v1739
      %v1789 = vadd.f32 %v1562, %v1741
      %v1790 = vadd.f32 %v1563, %v1744
      %v1791 = vadd.f32 %v1564, %v1746
      %v1792 = vadd.f32 %v1565, %v1749
      %v1793 = vadd.f32 %v1566, %v1751
      %v1794 = vadd.f32 %v1567, %v1754
      %v1795 = vadd.f32 %v1568, %v1756
      %v1796 = vadd.f32 %v1569, %v1759
      %v1797 = vadd.f32 %v1570, %v1761
      %v1798 = vadd.f32 %v1571, %v1764
      %v1799 = vadd.f32 %v1572, %v1766
      %v1800 = vld [vmem:[%s1573 + $0x1] sm:$0xff]
      %v1801 = vld [vmem:[%s1573 + $0x9] sm:$0xff]
      %v1802 = vld [vmem:[%s1573 + $0x19] sm:$0xff]
      %v1803 = vld [vmem:[%s1573 + $0x21] sm:$0xff]
      %v1804 = vld [vmem:[%s1573 + $0x31] sm:$0xff]
      %v1805 = vld [vmem:[%s1573 + $0x39] sm:$0xff]
      %v1806 = vld [vmem:[%s1573 + $0x49] sm:$0xff]
      %v1807 = vld [vmem:[%s1573 + $0x51] sm:$0xff]
      %v1808 = vld [vmem:[%s1573 + $0x61] sm:$0xff]
      %v1809 = vld [vmem:[%s1573 + $0x69] sm:$0xff]
      %v1810 = vld [vmem:[%s1573 + $0x79] sm:$0xff]
      %v1811 = vld [vmem:[%s1573 + $0x81] sm:$0xff]
      %v1812 = vld [vmem:[%s1573 + $0x91] sm:$0xff]
      %v1813 = vld [vmem:[%s1573 + $0x99] sm:$0xff]
      %v1814 = vld [vmem:[%s1573 + $0xa9] sm:$0xff]
      %v1815 = vld [vmem:[%s1573 + $0xb1] sm:$0xff]
      %v1816 = vld [vmem:[%s1573 + $0xc1] sm:$0xff]
      %v1817 = vld [vmem:[%s1573 + $0xc9] sm:$0xff]
      %v1818 = vld [vmem:[%s1573 + $0xd9] sm:$0xff]
      %v1819 = vld [vmem:[%s1573 + $0xe1] sm:$0xff]
      %v1820 = vld [vmem:[%s1573 + $0xf1] sm:$0xff]
      %v1821 = vld [vmem:[%s1573 + $0xf9] sm:$0xff]
      %v1822 = vld [vmem:[%s1573 + $0x109] sm:$0xff]
      %v1823 = vld [vmem:[%s1573 + $0x111] sm:$0xff]
      %v1824 = vld [vmem:[%s1573 + $0x121] sm:$0xff]
      %v1825 = vld [vmem:[%s1573 + $0x129] sm:$0xff]
      %v1826 = vld [vmem:[%s1573 + $0x139] sm:$0xff]
      %v1827 = vld [vmem:[%s1573 + $0x141] sm:$0xff]
      %v1828 = vld [vmem:[%s1573 + $0x151] sm:$0xff]
      %v1829 = vld [vmem:[%s1573 + $0x159] sm:$0xff]
      %v1830 = vld [vmem:[%s1573 + $0x169] sm:$0xff]
      %v1831 = vld [vmem:[%s1573 + $0x171] sm:$0xff]
      %v1832 = vpack.c.bf16 %v1801, %v1800
      %v1833 = vpack.c.bf16 %v1803, %v1802
      %v1834 = vpack.c.bf16 %v1805, %v1804
      %v1835 = vpack.c.bf16 %v1807, %v1806
      %v1836 = vpack.c.bf16 %v1809, %v1808
      %v1837 = vpack.c.bf16 %v1811, %v1810
      %v1838 = vpack.c.bf16 %v1813, %v1812
      %v1839 = vpack.c.bf16 %v1815, %v1814
      %v1840 = vpack.c.bf16 %v1817, %v1816
      %v1841 = vpack.c.bf16 %v1819, %v1818
      %v1842 = vpack.c.bf16 %v1821, %v1820
      %v1843 = vpack.c.bf16 %v1823, %v1822
      %v1844 = vpack.c.bf16 %v1825, %v1824
      %v1845 = vpack.c.bf16 %v1827, %v1826
      %v1846 = vpack.c.bf16 %v1829, %v1828
      %v1847 = vpack.c.bf16 %v1831, %v1830
      %s1848 = scalar_lea.vmem %s1, 56
      %v1849 = vld [vmem:[%s1848] sm:$0xf]
      %v1850 = vld [vmem:[%s1848 + $0x4] sm:$0xf]
      %v1853 = vunpack.c.l.b16 %v1849
      %v1854 = vunpack.c.l.b16 %v1850
      %v1855 = vpack.c.b16 %v1854, %v1853
      %v1858 = vsel %vm387, %v1832, 0
      %v1861 = vsel %vm387, %v1833, 0
      %v1864 = vsel %vm387, %v1834, 0
      %v1867 = vsel %vm387, %v1835, 0
      %v1870 = vsel %vm387, %v1836, 0
      %v1873 = vsel %vm387, %v1837, 0
      %v1876 = vsel %vm387, %v1838, 0
      %v1879 = vsel %vm387, %v1839, 0
      %v1882 = vsel %vm387, %v1840, 0
      %v1885 = vsel %vm387, %v1841, 0
      %v1888 = vsel %vm387, %v1842, 0
      %v1891 = vsel %vm387, %v1843, 0
      %v1894 = vsel %vm387, %v1844, 0
      %v1897 = vsel %vm387, %v1845, 0
      %v1900 = vsel %vm387, %v1846, 0
      %v1903 = vsel %vm387, %v1847, 0
      %1905 = vmatpush.bf16.msra.mxu0 0
      %1906 = vmatpush.bf16.msra.mxu0 0
      %1907 = vmatpush.bf16.msra.mxu0 0
      %1908 = vmatpush.bf16.msra.mxu0 0
      %1909 = vmatpush.bf16.msra.mxu0 0
      %1910 = vmatpush.bf16.msra.mxu0 0
      %1911 = vmatpush.bf16.msra.mxu0 0
      %1912 = vmatpush.bf16.msra.mxu0 %v1855
      %1913 = vmatmul.bf16.gmra.mxu0 %v1858
      %v1914 = vpop.f32.mrf.mxu0
      %v1915 = vadd.f32 0.0, %v1914
      %v1916 = vpop.f32.mrf.mxu0
      %v1917 = vadd.f32 0.0, %v1916
      %1918 = vmatmul.bf16.gmra.mxu0 %v1861
      %v1919 = vpop.f32.mrf.mxu0
      %v1920 = vadd.f32 0.0, %v1919
      %v1921 = vpop.f32.mrf.mxu0
      %v1922 = vadd.f32 0.0, %v1921
      %1923 = vmatmul.bf16.gmra.mxu0 %v1864
      %v1924 = vpop.f32.mrf.mxu0
      %v1925 = vadd.f32 0.0, %v1924
      %v1926 = vpop.f32.mrf.mxu0
      %v1927 = vadd.f32 0.0, %v1926
      %1928 = vmatmul.bf16.gmra.mxu0 %v1867
      %v1929 = vpop.f32.mrf.mxu0
      %v1930 = vadd.f32 0.0, %v1929
      %v1931 = vpop.f32.mrf.mxu0
      %v1932 = vadd.f32 0.0, %v1931
      %1933 = vmatmul.bf16.gmra.mxu0 %v1870
      %v1934 = vpop.f32.mrf.mxu0
      %v1935 = vadd.f32 0.0, %v1934
      %v1936 = vpop.f32.mrf.mxu0
      %v1937 = vadd.f32 0.0, %v1936
      %1938 = vmatmul.bf16.gmra.mxu0 %v1873
      %v1939 = vpop.f32.mrf.mxu0
      %v1940 = vadd.f32 0.0, %v1939
      %v1941 = vpop.f32.mrf.mxu0
      %v1942 = vadd.f32 0.0, %v1941
      %1943 = vmatmul.bf16.gmra.mxu0 %v1876
      %v1944 = vpop.f32.mrf.mxu0
      %v1945 = vadd.f32 0.0, %v1944
      %v1946 = vpop.f32.mrf.mxu0
      %v1947 = vadd.f32 0.0, %v1946
      %1948 = vmatmul.bf16.gmra.mxu0 %v1879
      %v1949 = vpop.f32.mrf.mxu0
      %v1950 = vadd.f32 0.0, %v1949
      %v1951 = vpop.f32.mrf.mxu0
      %v1952 = vadd.f32 0.0, %v1951
      %1953 = vmatmul.bf16.gmra.mxu0 %v1882
      %v1954 = vpop.f32.mrf.mxu0
      %v1955 = vadd.f32 0.0, %v1954
      %v1956 = vpop.f32.mrf.mxu0
      %v1957 = vadd.f32 0.0, %v1956
      %1958 = vmatmul.bf16.gmra.mxu0 %v1885
      %v1959 = vpop.f32.mrf.mxu0
      %v1960 = vadd.f32 0.0, %v1959
      %v1961 = vpop.f32.mrf.mxu0
      %v1962 = vadd.f32 0.0, %v1961
      %1963 = vmatmul.bf16.gmra.mxu0 %v1888
      %v1964 = vpop.f32.mrf.mxu0
      %v1965 = vadd.f32 0.0, %v1964
      %v1966 = vpop.f32.mrf.mxu0
      %v1967 = vadd.f32 0.0, %v1966
      %1968 = vmatmul.bf16.gmra.mxu0 %v1891
      %v1969 = vpop.f32.mrf.mxu0
      %v1970 = vadd.f32 0.0, %v1969
      %v1971 = vpop.f32.mrf.mxu0
      %v1972 = vadd.f32 0.0, %v1971
      %1973 = vmatmul.bf16.gmra.mxu0 %v1894
      %v1974 = vpop.f32.mrf.mxu0
      %v1975 = vadd.f32 0.0, %v1974
      %v1976 = vpop.f32.mrf.mxu0
      %v1977 = vadd.f32 0.0, %v1976
      %1978 = vmatmul.bf16.gmra.mxu0 %v1897
      %v1979 = vpop.f32.mrf.mxu0
      %v1980 = vadd.f32 0.0, %v1979
      %v1981 = vpop.f32.mrf.mxu0
      %v1982 = vadd.f32 0.0, %v1981
      %1983 = vmatmul.bf16.gmra.mxu0 %v1900
      %v1984 = vpop.f32.mrf.mxu0
      %v1985 = vadd.f32 0.0, %v1984
      %v1986 = vpop.f32.mrf.mxu0
      %v1987 = vadd.f32 0.0, %v1986
      %1988 = vmatmul.bf16.gmra.mxu0 %v1903
      %v1989 = vpop.f32.mrf.mxu0
      %v1990 = vadd.f32 0.0, %v1989
      %v1991 = vpop.f32.mrf.mxu0
      %v1992 = vadd.f32 0.0, %v1991
      %1993 = vdwg.mxu0
      %v1994 = vadd.f32 %v1768, %v1915
      %v1995 = vadd.f32 %v1769, %v1917
      %v1996 = vadd.f32 %v1770, %v1920
      %v1997 = vadd.f32 %v1771, %v1922
      %v1998 = vadd.f32 %v1772, %v1925
      %v1999 = vadd.f32 %v1773, %v1927
      %v2000 = vadd.f32 %v1774, %v1930
      %v2001 = vadd.f32 %v1775, %v1932
      %v2002 = vadd.f32 %v1776, %v1935
      %v2003 = vadd.f32 %v1777, %v1937
      %v2004 = vadd.f32 %v1778, %v1940
      %v2005 = vadd.f32 %v1779, %v1942
      %v2006 = vadd.f32 %v1780, %v1945
      %v2007 = vadd.f32 %v1781, %v1947
      %v2008 = vadd.f32 %v1782, %v1950
      %v2009 = vadd.f32 %v1783, %v1952
      %v2010 = vadd.f32 %v1784, %v1955
      %v2011 = vadd.f32 %v1785, %v1957
      %v2012 = vadd.f32 %v1786, %v1960
      %v2013 = vadd.f32 %v1787, %v1962
      %v2014 = vadd.f32 %v1788, %v1965
      %v2015 = vadd.f32 %v1789, %v1967
      %v2016 = vadd.f32 %v1790, %v1970
      %v2017 = vadd.f32 %v1791, %v1972
      %v2018 = vadd.f32 %v1792, %v1975
      %v2019 = vadd.f32 %v1793, %v1977
      %v2020 = vadd.f32 %v1794, %v1980
      %v2021 = vadd.f32 %v1795, %v1982
      %v2022 = vadd.f32 %v1796, %v1985
      %v2023 = vadd.f32 %v1797, %v1987
      %v2024 = vadd.f32 %v1798, %v1990
      %v2025 = vadd.f32 %v1799, %v1992
      %v2026 = vld [vmem:[%s1573 + $0x2] sm:$0xff]
      %v2027 = vld [vmem:[%s1573 + $0xa] sm:$0xff]
      %v2028 = vld [vmem:[%s1573 + $0x1a] sm:$0xff]
      %v2029 = vld [vmem:[%s1573 + $0x22] sm:$0xff]
      %v2030 = vld [vmem:[%s1573 + $0x32] sm:$0xff]
      %v2031 = vld [vmem:[%s1573 + $0x3a] sm:$0xff]
      %v2032 = vld [vmem:[%s1573 + $0x4a] sm:$0xff]
      %v2033 = vld [vmem:[%s1573 + $0x52] sm:$0xff]
      %v2034 = vld [vmem:[%s1573 + $0x62] sm:$0xff]
      %v2035 = vld [vmem:[%s1573 + $0x6a] sm:$0xff]
      %v2036 = vld [vmem:[%s1573 + $0x7a] sm:$0xff]
      %v2037 = vld [vmem:[%s1573 + $0x82] sm:$0xff]
      %v2038 = vld [vmem:[%s1573 + $0x92] sm:$0xff]
      %v2039 = vld [vmem:[%s1573 + $0x9a] sm:$0xff]
      %v2040 = vld [vmem:[%s1573 + $0xaa] sm:$0xff]
      %v2041 = vld [vmem:[%s1573 + $0xb2] sm:$0xff]
      %v2042 = vld [vmem:[%s1573 + $0xc2] sm:$0xff]
      %v2043 = vld [vmem:[%s1573 + $0xca] sm:$0xff]
      %v2044 = vld [vmem:[%s1573 + $0xda] sm:$0xff]
      %v2045 = vld [vmem:[%s1573 + $0xe2] sm:$0xff]
      %v2046 = vld [vmem:[%s1573 + $0xf2] sm:$0xff]
      %v2047 = vld [vmem:[%s1573 + $0xfa] sm:$0xff]
      %v2048 = vld [vmem:[%s1573 + $0x10a] sm:$0xff]
      %v2049 = vld [vmem:[%s1573 + $0x112] sm:$0xff]
      %v2050 = vld [vmem:[%s1573 + $0x122] sm:$0xff]
      %v2051 = vld [vmem:[%s1573 + $0x12a] sm:$0xff]
      %v2052 = vld [vmem:[%s1573 + $0x13a] sm:$0xff]
      %v2053 = vld [vmem:[%s1573 + $0x142] sm:$0xff]
      %v2054 = vld [vmem:[%s1573 + $0x152] sm:$0xff]
      %v2055 = vld [vmem:[%s1573 + $0x15a] sm:$0xff]
      %v2056 = vld [vmem:[%s1573 + $0x16a] sm:$0xff]
      %v2057 = vld [vmem:[%s1573 + $0x172] sm:$0xff]
      %v2058 = vpack.c.bf16 %v2027, %v2026
      %v2059 = vpack.c.bf16 %v2029, %v2028
      %v2060 = vpack.c.bf16 %v2031, %v2030
      %v2061 = vpack.c.bf16 %v2033, %v2032
      %v2062 = vpack.c.bf16 %v2035, %v2034
      %v2063 = vpack.c.bf16 %v2037, %v2036
      %v2064 = vpack.c.bf16 %v2039, %v2038
      %v2065 = vpack.c.bf16 %v2041, %v2040
      %v2066 = vpack.c.bf16 %v2043, %v2042
      %v2067 = vpack.c.bf16 %v2045, %v2044
      %v2068 = vpack.c.bf16 %v2047, %v2046
      %v2069 = vpack.c.bf16 %v2049, %v2048
      %v2070 = vpack.c.bf16 %v2051, %v2050
      %v2071 = vpack.c.bf16 %v2053, %v2052
      %v2072 = vpack.c.bf16 %v2055, %v2054
      %v2073 = vpack.c.bf16 %v2057, %v2056
      %s2074 = scalar_lea.vmem %s1, 64
      %v2075 = vld [vmem:[%s2074] sm:$0xf]
      %v2076 = vld [vmem:[%s2074 + $0x4] sm:$0xf]
      %v2079 = vunpack.c.l.b16 %v2075
      %v2080 = vunpack.c.l.b16 %v2076
      %v2081 = vpack.c.b16 %v2080, %v2079
      %v2084 = vsel %vm387, %v2058, 0
      %v2087 = vsel %vm387, %v2059, 0
      %v2090 = vsel %vm387, %v2060, 0
      %v2093 = vsel %vm387, %v2061, 0
      %v2096 = vsel %vm387, %v2062, 0
      %v2099 = vsel %vm387, %v2063, 0
      %v2102 = vsel %vm387, %v2064, 0
      %v2105 = vsel %vm387, %v2065, 0
      %v2108 = vsel %vm387, %v2066, 0
      %v2111 = vsel %vm387, %v2067, 0
      %v2114 = vsel %vm387, %v2068, 0
      %v2117 = vsel %vm387, %v2069, 0
      %v2120 = vsel %vm387, %v2070, 0
      %v2123 = vsel %vm387, %v2071, 0
      %v2126 = vsel %vm387, %v2072, 0
      %v2129 = vsel %vm387, %v2073, 0
      %2131 = vmatpush.bf16.msra.mxu0 0
      %2132 = vmatpush.bf16.msra.mxu0 0
      %2133 = vmatpush.bf16.msra.mxu0 0
      %2134 = vmatpush.bf16.msra.mxu0 0
      %2135 = vmatpush.bf16.msra.mxu0 0
      %2136 = vmatpush.bf16.msra.mxu0 0
      %2137 = vmatpush.bf16.msra.mxu0 0
      %2138 = vmatpush.bf16.msra.mxu0 %v2081
      %2139 = vmatmul.bf16.gmra.mxu0 %v2084
      %v2140 = vpop.f32.mrf.mxu0
      %v2141 = vadd.f32 0.0, %v2140
      %v2142 = vpop.f32.mrf.mxu0
      %v2143 = vadd.f32 0.0, %v2142
      %2144 = vmatmul.bf16.gmra.mxu0 %v2087
      %v2145 = vpop.f32.mrf.mxu0
      %v2146 = vadd.f32 0.0, %v2145
      %v2147 = vpop.f32.mrf.mxu0
      %v2148 = vadd.f32 0.0, %v2147
      %2149 = vmatmul.bf16.gmra.mxu0 %v2090
      %v2150 = vpop.f32.mrf.mxu0
      %v2151 = vadd.f32 0.0, %v2150
      %v2152 = vpop.f32.mrf.mxu0
      %v2153 = vadd.f32 0.0, %v2152
      %2154 = vmatmul.bf16.gmra.mxu0 %v2093
      %v2155 = vpop.f32.mrf.mxu0
      %v2156 = vadd.f32 0.0, %v2155
      %v2157 = vpop.f32.mrf.mxu0
      %v2158 = vadd.f32 0.0, %v2157
      %2159 = vmatmul.bf16.gmra.mxu0 %v2096
      %v2160 = vpop.f32.mrf.mxu0
      %v2161 = vadd.f32 0.0, %v2160
      %v2162 = vpop.f32.mrf.mxu0
      %v2163 = vadd.f32 0.0, %v2162
      %2164 = vmatmul.bf16.gmra.mxu0 %v2099
      %v2165 = vpop.f32.mrf.mxu0
      %v2166 = vadd.f32 0.0, %v2165
      %v2167 = vpop.f32.mrf.mxu0
      %v2168 = vadd.f32 0.0, %v2167
      %2169 = vmatmul.bf16.gmra.mxu0 %v2102
      %v2170 = vpop.f32.mrf.mxu0
      %v2171 = vadd.f32 0.0, %v2170
      %v2172 = vpop.f32.mrf.mxu0
      %v2173 = vadd.f32 0.0, %v2172
      %2174 = vmatmul.bf16.gmra.mxu0 %v2105
      %v2175 = vpop.f32.mrf.mxu0
      %v2176 = vadd.f32 0.0, %v2175
      %v2177 = vpop.f32.mrf.mxu0
      %v2178 = vadd.f32 0.0, %v2177
      %2179 = vmatmul.bf16.gmra.mxu0 %v2108
      %v2180 = vpop.f32.mrf.mxu0
      %v2181 = vadd.f32 0.0, %v2180
      %v2182 = vpop.f32.mrf.mxu0
      %v2183 = vadd.f32 0.0, %v2182
      %2184 = vmatmul.bf16.gmra.mxu0 %v2111
      %v2185 = vpop.f32.mrf.mxu0
      %v2186 = vadd.f32 0.0, %v2185
      %v2187 = vpop.f32.mrf.mxu0
      %v2188 = vadd.f32 0.0, %v2187
      %2189 = vmatmul.bf16.gmra.mxu0 %v2114
      %v2190 = vpop.f32.mrf.mxu0
      %v2191 = vadd.f32 0.0, %v2190
      %v2192 = vpop.f32.mrf.mxu0
      %v2193 = vadd.f32 0.0, %v2192
      %2194 = vmatmul.bf16.gmra.mxu0 %v2117
      %v2195 = vpop.f32.mrf.mxu0
      %v2196 = vadd.f32 0.0, %v2195
      %v2197 = vpop.f32.mrf.mxu0
      %v2198 = vadd.f32 0.0, %v2197
      %2199 = vmatmul.bf16.gmra.mxu0 %v2120
      %v2200 = vpop.f32.mrf.mxu0
      %v2201 = vadd.f32 0.0, %v2200
      %v2202 = vpop.f32.mrf.mxu0
      %v2203 = vadd.f32 0.0, %v2202
      %2204 = vmatmul.bf16.gmra.mxu0 %v2123
      %v2205 = vpop.f32.mrf.mxu0
      %v2206 = vadd.f32 0.0, %v2205
      %v2207 = vpop.f32.mrf.mxu0
      %v2208 = vadd.f32 0.0, %v2207
      %2209 = vmatmul.bf16.gmra.mxu0 %v2126
      %v2210 = vpop.f32.mrf.mxu0
      %v2211 = vadd.f32 0.0, %v2210
      %v2212 = vpop.f32.mrf.mxu0
      %v2213 = vadd.f32 0.0, %v2212
      %2214 = vmatmul.bf16.gmra.mxu0 %v2129
      %v2215 = vpop.f32.mrf.mxu0
      %v2216 = vadd.f32 0.0, %v2215
      %v2217 = vpop.f32.mrf.mxu0
      %v2218 = vadd.f32 0.0, %v2217
      %2219 = vdwg.mxu0
      %v2220 = vadd.f32 %v1994, %v2141
      %v2221 = vadd.f32 %v1995, %v2143
      %v2222 = vadd.f32 %v1996, %v2146
      %v2223 = vadd.f32 %v1997, %v2148
      %v2224 = vadd.f32 %v1998, %v2151
      %v2225 = vadd.f32 %v1999, %v2153
      %v2226 = vadd.f32 %v2000, %v2156
      %v2227 = vadd.f32 %v2001, %v2158
      %v2228 = vadd.f32 %v2002, %v2161
      %v2229 = vadd.f32 %v2003, %v2163
      %v2230 = vadd.f32 %v2004, %v2166
      %v2231 = vadd.f32 %v2005, %v2168
      %v2232 = vadd.f32 %v2006, %v2171
      %v2233 = vadd.f32 %v2007, %v2173
      %v2234 = vadd.f32 %v2008, %v2176
      %v2235 = vadd.f32 %v2009, %v2178
      %v2236 = vadd.f32 %v2010, %v2181
      %v2237 = vadd.f32 %v2011, %v2183
      %v2238 = vadd.f32 %v2012, %v2186
      %v2239 = vadd.f32 %v2013, %v2188
      %v2240 = vadd.f32 %v2014, %v2191
      %v2241 = vadd.f32 %v2015, %v2193
      %v2242 = vadd.f32 %v2016, %v2196
      %v2243 = vadd.f32 %v2017, %v2198
      %v2244 = vadd.f32 %v2018, %v2201
      %v2245 = vadd.f32 %v2019, %v2203
      %v2246 = vadd.f32 %v2020, %v2206
      %v2247 = vadd.f32 %v2021, %v2208
      %v2248 = vadd.f32 %v2022, %v2211
      %v2249 = vadd.f32 %v2023, %v2213
      %v2250 = vadd.f32 %v2024, %v2216
      %v2251 = vadd.f32 %v2025, %v2218
      %v2252 = vld [vmem:[%s2] sm:$0x1]
      %v2254 = vperm.slane %v2252, 0
      %v2256 = vmul.f32 %v2220, %v2254
      %v2257 = vmul.f32 %v2221, %v2254
      %v2258 = vmul.f32 %v2222, %v2254
      %v2259 = vmul.f32 %v2223, %v2254
      %v2260 = vmul.f32 %v2224, %v2254
      %v2261 = vmul.f32 %v2225, %v2254
      %v2262 = vmul.f32 %v2226, %v2254
      %v2263 = vmul.f32 %v2227, %v2254
      %v2264 = vmul.f32 %v2228, %v2254
      %v2265 = vmul.f32 %v2229, %v2254
      %v2266 = vmul.f32 %v2230, %v2254
      %v2267 = vmul.f32 %v2231, %v2254
      %v2268 = vmul.f32 %v2232, %v2254
      %v2269 = vmul.f32 %v2233, %v2254
      %v2270 = vmul.f32 %v2234, %v2254
      %v2271 = vmul.f32 %v2235, %v2254
      %v2272 = vmul.f32 %v2236, %v2254
      %v2273 = vmul.f32 %v2237, %v2254
      %v2274 = vmul.f32 %v2238, %v2254
      %v2275 = vmul.f32 %v2239, %v2254
      %v2276 = vmul.f32 %v2240, %v2254
      %v2277 = vmul.f32 %v2241, %v2254
      %v2278 = vmul.f32 %v2242, %v2254
      %v2279 = vmul.f32 %v2243, %v2254
      %v2280 = vmul.f32 %v2244, %v2254
      %v2281 = vmul.f32 %v2245, %v2254
      %v2282 = vmul.f32 %v2246, %v2254
      %v2283 = vmul.f32 %v2247, %v2254
      %v2284 = vmul.f32 %v2248, %v2254
      %v2285 = vmul.f32 %v2249, %v2254
      %v2286 = vmul.f32 %v2250, %v2254
      %v2287 = vmul.f32 %v2251, %v2254
      %v2288 = vld [vmem:[%s3] sm:$0x1]
      %v2290 = vperm.slane %v2288, 0
      %v2292 = vadd.f32 %v2256, %v2290
      %v2293 = vadd.f32 %v2257, %v2290
      %v2294 = vadd.f32 %v2258, %v2290
      %v2295 = vadd.f32 %v2259, %v2290
      %v2296 = vadd.f32 %v2260, %v2290
      %v2297 = vadd.f32 %v2261, %v2290
      %v2298 = vadd.f32 %v2262, %v2290
      %v2299 = vadd.f32 %v2263, %v2290
      %v2300 = vadd.f32 %v2264, %v2290
      %v2301 = vadd.f32 %v2265, %v2290
      %v2302 = vadd.f32 %v2266, %v2290
      %v2303 = vadd.f32 %v2267, %v2290
      %v2304 = vadd.f32 %v2268, %v2290
      %v2305 = vadd.f32 %v2269, %v2290
      %v2306 = vadd.f32 %v2270, %v2290
      %v2307 = vadd.f32 %v2271, %v2290
      %v2308 = vadd.f32 %v2272, %v2290
      %v2309 = vadd.f32 %v2273, %v2290
      %v2310 = vadd.f32 %v2274, %v2290
      %v2311 = vadd.f32 %v2275, %v2290
      %v2312 = vadd.f32 %v2276, %v2290
      %v2313 = vadd.f32 %v2277, %v2290
      %v2314 = vadd.f32 %v2278, %v2290
      %v2315 = vadd.f32 %v2279, %v2290
      %v2316 = vadd.f32 %v2280, %v2290
      %v2317 = vadd.f32 %v2281, %v2290
      %v2318 = vadd.f32 %v2282, %v2290
      %v2319 = vadd.f32 %v2283, %v2290
      %v2320 = vadd.f32 %v2284, %v2290
      %v2321 = vadd.f32 %v2285, %v2290
      %v2322 = vadd.f32 %v2286, %v2290
      %v2323 = vadd.f32 %v2287, %v2290
      %v2324 = vmax.f32 %v2292, 0.0
      %v2325 = vmax.f32 %v2293, 0.0
      %v2326 = vmax.f32 %v2294, 0.0
      %v2327 = vmax.f32 %v2295, 0.0
      %v2328 = vmax.f32 %v2296, 0.0
      %v2329 = vmax.f32 %v2297, 0.0
      %v2330 = vmax.f32 %v2298, 0.0
      %v2331 = vmax.f32 %v2299, 0.0
      %v2332 = vmax.f32 %v2300, 0.0
      %v2333 = vmax.f32 %v2301, 0.0
      %v2334 = vmax.f32 %v2302, 0.0
      %v2335 = vmax.f32 %v2303, 0.0
      %v2336 = vmax.f32 %v2304, 0.0
      %v2337 = vmax.f32 %v2305, 0.0
      %v2338 = vmax.f32 %v2306, 0.0
      %v2339 = vmax.f32 %v2307, 0.0
      %v2340 = vmax.f32 %v2308, 0.0
      %v2341 = vmax.f32 %v2309, 0.0
      %v2342 = vmax.f32 %v2310, 0.0
      %v2343 = vmax.f32 %v2311, 0.0
      %v2344 = vmax.f32 %v2312, 0.0
      %v2345 = vmax.f32 %v2313, 0.0
      %v2346 = vmax.f32 %v2314, 0.0
      %v2347 = vmax.f32 %v2315, 0.0
      %v2348 = vmax.f32 %v2316, 0.0
      %v2349 = vmax.f32 %v2317, 0.0
      %v2350 = vmax.f32 %v2318, 0.0
      %v2351 = vmax.f32 %v2319, 0.0
      %v2352 = vmax.f32 %v2320, 0.0
      %v2353 = vmax.f32 %v2321, 0.0
      %v2354 = vmax.f32 %v2322, 0.0
      %v2355 = vmax.f32 %v2323, 0.0
      %2356 = vst.msk [vmem:[#allocation2] sm:$0xff] %vm387, 0.0
      %2357 = vst.msk [vmem:[#allocation2 + $0x8] sm:$0xff] %vm387, 0.0
      %vm2358 = vcmask 123904
      %2359 = vst.msk [vmem:[#allocation2 + $0x10] sm:$0x3] %vm2358, 0.0
      %2360 = vst.msk [vmem:[#allocation2 + $0x18] sm:$0xff] %vm387, 0.0
      %2361 = vst.msk [vmem:[#allocation2 + $0x20] sm:$0xff] %vm387, 0.0
      %2362 = vst.msk [vmem:[#allocation2 + $0x28] sm:$0x3] %vm2358, 0.0
      %2363 = vst.msk [vmem:[#allocation2 + $0x30] sm:$0xff] %vm387, 0.0
      %2364 = vst.msk [vmem:[#allocation2 + $0x38] sm:$0xff] %vm387, 0.0
      %2365 = vst.msk [vmem:[#allocation2 + $0x40] sm:$0x3] %vm2358, 0.0
      %2366 = vst.msk [vmem:[#allocation2 + $0x48] sm:$0xff] %vm387, 0.0
      %2367 = vst.msk [vmem:[#allocation2 + $0x50] sm:$0xff] %vm387, 0.0
      %2368 = vst.msk [vmem:[#allocation2 + $0x58] sm:$0x3] %vm2358, 0.0
      %2369 = vst.msk [vmem:[#allocation2 + $0x60] sm:$0xff] %vm387, 0.0
      %2370 = vst.msk [vmem:[#allocation2 + $0x68] sm:$0xff] %vm387, 0.0
      %2371 = vst.msk [vmem:[#allocation2 + $0x70] sm:$0x3] %vm2358, 0.0
      %2372 = vst.msk [vmem:[#allocation2 + $0x78] sm:$0xff] %vm387, 0.0
      %2373 = vst.msk [vmem:[#allocation2 + $0x80] sm:$0xff] %vm387, 0.0
      %2374 = vst.msk [vmem:[#allocation2 + $0x88] sm:$0x3] %vm2358, 0.0
      %2375 = vst.msk [vmem:[#allocation2 + $0x90] sm:$0xff] %vm387, 0.0
      %2376 = vst.msk [vmem:[#allocation2 + $0x98] sm:$0xff] %vm387, 0.0
      %2377 = vst.msk [vmem:[#allocation2 + $0xa0] sm:$0x3] %vm2358, 0.0
      %2378 = vst.msk [vmem:[#allocation2 + $0xa8] sm:$0xff] %vm387, 0.0
      %2379 = vst.msk [vmem:[#allocation2 + $0xb0] sm:$0xff] %vm387, 0.0
      %2380 = vst.msk [vmem:[#allocation2 + $0xb8] sm:$0x3] %vm2358, 0.0
      %2381 = vst.msk [vmem:[#allocation2 + $0xc0] sm:$0xff] %vm387, 0.0
      %2382 = vst.msk [vmem:[#allocation2 + $0xc8] sm:$0xff] %vm387, 0.0
      %2383 = vst.msk [vmem:[#allocation2 + $0xd0] sm:$0x3] %vm2358, 0.0
      %2384 = vst.msk [vmem:[#allocation2 + $0xd8] sm:$0xff] %vm387, 0.0
      %2385 = vst.msk [vmem:[#allocation2 + $0xe0] sm:$0xff] %vm387, 0.0
      %2386 = vst.msk [vmem:[#allocation2 + $0xe8] sm:$0x3] %vm2358, 0.0
      %2387 = vst.msk [vmem:[#allocation2 + $0xf0] sm:$0xff] %vm387, 0.0
      %2388 = vst.msk [vmem:[#allocation2 + $0xf8] sm:$0xff] %vm387, 0.0
      %2389 = vst.msk [vmem:[#allocation2 + $0x100] sm:$0x3] %vm2358, 0.0
      %2390 = vst.msk [vmem:[#allocation2 + $0x108] sm:$0xff] %vm387, 0.0
      %2391 = vst.msk [vmem:[#allocation2 + $0x110] sm:$0xff] %vm387, 0.0
      %2392 = vst.msk [vmem:[#allocation2 + $0x118] sm:$0x3] %vm2358, 0.0
      %2393 = vst.msk [vmem:[#allocation2 + $0x120] sm:$0xff] %vm387, 0.0
      %2394 = vst.msk [vmem:[#allocation2 + $0x128] sm:$0xff] %vm387, 0.0
      %2395 = vst.msk [vmem:[#allocation2 + $0x130] sm:$0x3] %vm2358, 0.0
      %2396 = vst.msk [vmem:[#allocation2 + $0x138] sm:$0xff] %vm387, 0.0
      %2397 = vst.msk [vmem:[#allocation2 + $0x140] sm:$0xff] %vm387, 0.0
      %2398 = vst.msk [vmem:[#allocation2 + $0x148] sm:$0x3] %vm2358, 0.0
      %2399 = vst.msk [vmem:[#allocation2 + $0x150] sm:$0xff] %vm387, 0.0
      %2400 = vst.msk [vmem:[#allocation2 + $0x158] sm:$0xff] %vm387, 0.0
      %2401 = vst.msk [vmem:[#allocation2 + $0x160] sm:$0x3] %vm2358, 0.0
      %2402 = vst.msk [vmem:[#allocation2 + $0x168] sm:$0xff] %vm387, 0.0
      %2403 = vst.msk [vmem:[#allocation2 + $0x170] sm:$0xff] %vm387, 0.0
      %2404 = vst.msk [vmem:[#allocation2 + $0x178] sm:$0x3] %vm2358, 0.0
      %2405 = vst.msk [vmem:[#allocation2 + $0x180] sm:$0xff] %vm387, 0.0
      %2406 = vst.msk [vmem:[#allocation2 + $0x188] sm:$0xff] %vm387, 0.0
      %2407 = vst.msk [vmem:[#allocation2 + $0x190] sm:$0x3] %vm2358, 0.0
      %2408 = vst.msk [vmem:[#allocation2 + $0x198] sm:$0xff] %vm387, 0.0
      %2409 = vst.msk [vmem:[#allocation2 + $0x1a0] sm:$0xff] %vm387, 0.0
      %2410 = vst.msk [vmem:[#allocation2 + $0x1a8] sm:$0x3] %vm2358, 0.0
      %s2411 = scalar_lea.vmem [#allocation2], 24
      %2412 = vst.msk [vmem:[%s2411 + $0x1] sm:$0xff] %vm387, %v2324
      %2413 = vst.msk [vmem:[%s2411 + $0x9] sm:$0xff] %vm387, %v2325
      %2414 = vst.msk [vmem:[%s2411 + $0x19] sm:$0xff] %vm387, %v2326
      %2415 = vst.msk [vmem:[%s2411 + $0x21] sm:$0xff] %vm387, %v2327
      %2416 = vst.msk [vmem:[%s2411 + $0x31] sm:$0xff] %vm387, %v2328
      %2417 = vst.msk [vmem:[%s2411 + $0x39] sm:$0xff] %vm387, %v2329
      %2418 = vst.msk [vmem:[%s2411 + $0x49] sm:$0xff] %vm387, %v2330
      %2419 = vst.msk [vmem:[%s2411 + $0x51] sm:$0xff] %vm387, %v2331
      %2420 = vst.msk [vmem:[%s2411 + $0x61] sm:$0xff] %vm387, %v2332
      %2421 = vst.msk [vmem:[%s2411 + $0x69] sm:$0xff] %vm387, %v2333
      %2422 = vst.msk [vmem:[%s2411 + $0x79] sm:$0xff] %vm387, %v2334
      %2423 = vst.msk [vmem:[%s2411 + $0x81] sm:$0xff] %vm387, %v2335
      %2424 = vst.msk [vmem:[%s2411 + $0x91] sm:$0xff] %vm387, %v2336
      %2425 = vst.msk [vmem:[%s2411 + $0x99] sm:$0xff] %vm387, %v2337
      %2426 = vst.msk [vmem:[%s2411 + $0xa9] sm:$0xff] %vm387, %v2338
      %2427 = vst.msk [vmem:[%s2411 + $0xb1] sm:$0xff] %vm387, %v2339
      %2428 = vst.msk [vmem:[%s2411 + $0xc1] sm:$0xff] %vm387, %v2340
      %2429 = vst.msk [vmem:[%s2411 + $0xc9] sm:$0xff] %vm387, %v2341
      %2430 = vst.msk [vmem:[%s2411 + $0xd9] sm:$0xff] %vm387, %v2342
      %2431 = vst.msk [vmem:[%s2411 + $0xe1] sm:$0xff] %vm387, %v2343
      %2432 = vst.msk [vmem:[%s2411 + $0xf1] sm:$0xff] %vm387, %v2344
      %2433 = vst.msk [vmem:[%s2411 + $0xf9] sm:$0xff] %vm387, %v2345
      %2434 = vst.msk [vmem:[%s2411 + $0x109] sm:$0xff] %vm387, %v2346
      %2435 = vst.msk [vmem:[%s2411 + $0x111] sm:$0xff] %vm387, %v2347
      %2436 = vst.msk [vmem:[%s2411 + $0x121] sm:$0xff] %vm387, %v2348
      %2437 = vst.msk [vmem:[%s2411 + $0x129] sm:$0xff] %vm387, %v2349
      %2438 = vst.msk [vmem:[%s2411 + $0x139] sm:$0xff] %vm387, %v2350
      %2439 = vst.msk [vmem:[%s2411 + $0x141] sm:$0xff] %vm387, %v2351
      %2440 = vst.msk [vmem:[%s2411 + $0x151] sm:$0xff] %vm387, %v2352
      %2441 = vst.msk [vmem:[%s2411 + $0x159] sm:$0xff] %vm387, %v2353
      %2442 = vst.msk [vmem:[%s2411 + $0x169] sm:$0xff] %vm387, %v2354
      %2443 = vst.msk [vmem:[%s2411 + $0x171] sm:$0xff] %vm387, %v2355
      %v2444 = vld [vmem:[#allocation2] sm:$0xff]
      %v2445 = vld [vmem:[#allocation2 + $0x8] sm:$0xff]
      %v2446 = vld [vmem:[#allocation2 + $0x18] sm:$0xff]
      %v2447 = vld [vmem:[#allocation2 + $0x20] sm:$0xff]
      %v2448 = vld [vmem:[#allocation2 + $0x30] sm:$0xff]
      %v2449 = vld [vmem:[#allocation2 + $0x38] sm:$0xff]
      %v2450 = vld [vmem:[#allocation2 + $0x48] sm:$0xff]
      %v2451 = vld [vmem:[#allocation2 + $0x50] sm:$0xff]
      %v2452 = vld [vmem:[#allocation2 + $0x60] sm:$0xff]
      %v2453 = vld [vmem:[#allocation2 + $0x68] sm:$0xff]
      %v2454 = vld [vmem:[#allocation2 + $0x78] sm:$0xff]
      %v2455 = vld [vmem:[#allocation2 + $0x80] sm:$0xff]
      %v2456 = vld [vmem:[#allocation2 + $0x90] sm:$0xff]
      %v2457 = vld [vmem:[#allocation2 + $0x98] sm:$0xff]
      %v2458 = vld [vmem:[#allocation2 + $0xa8] sm:$0xff]
      %v2459 = vld [vmem:[#allocation2 + $0xb0] sm:$0xff]
      %v2460 = vld [vmem:[#allocation2 + $0xc0] sm:$0xff]
      %v2461 = vld [vmem:[#allocation2 + $0xc8] sm:$0xff]
      %v2462 = vld [vmem:[#allocation2 + $0xd8] sm:$0xff]
      %v2463 = vld [vmem:[#allocation2 + $0xe0] sm:$0xff]
      %v2464 = vld [vmem:[#allocation2 + $0xf0] sm:$0xff]
      %v2465 = vld [vmem:[#allocation2 + $0xf8] sm:$0xff]
      %v2466 = vld [vmem:[#allocation2 + $0x108] sm:$0xff]
      %v2467 = vld [vmem:[#allocation2 + $0x110] sm:$0xff]
      %v2468 = vld [vmem:[#allocation2 + $0x120] sm:$0xff]
      %v2469 = vld [vmem:[#allocation2 + $0x128] sm:$0xff]
      %v2470 = vld [vmem:[#allocation2 + $0x138] sm:$0xff]
      %v2471 = vld [vmem:[#allocation2 + $0x140] sm:$0xff]
      %v2472 = vld [vmem:[#allocation2 + $0x150] sm:$0xff]
      %v2473 = vld [vmem:[#allocation2 + $0x158] sm:$0xff]
      %v2474 = vld [vmem:[#allocation2 + $0x168] sm:$0xff]
      %v2475 = vld [vmem:[#allocation2 + $0x170] sm:$0xff]
      %v2476 = vpack.c.bf16 %v2445, %v2444
      %v2477 = vpack.c.bf16 %v2447, %v2446
      %v2478 = vpack.c.bf16 %v2449, %v2448
      %v2479 = vpack.c.bf16 %v2451, %v2450
      %v2480 = vpack.c.bf16 %v2453, %v2452
      %v2481 = vpack.c.bf16 %v2455, %v2454
      %v2482 = vpack.c.bf16 %v2457, %v2456
      %v2483 = vpack.c.bf16 %v2459, %v2458
      %v2484 = vpack.c.bf16 %v2461, %v2460
      %v2485 = vpack.c.bf16 %v2463, %v2462
      %v2486 = vpack.c.bf16 %v2465, %v2464
      %v2487 = vpack.c.bf16 %v2467, %v2466
      %v2488 = vpack.c.bf16 %v2469, %v2468
      %v2489 = vpack.c.bf16 %v2471, %v2470
      %v2490 = vpack.c.bf16 %v2473, %v2472
      %v2491 = vpack.c.bf16 %v2475, %v2474
      %v2492 = vld [vmem:[%s4] sm:$0xf]
      %v2493 = vld [vmem:[%s4 + $0x4] sm:$0xf]
      %v2494 = vld [vmem:[#allocation2 + $0x1] sm:$0xff]
      %v2495 = vld [vmem:[#allocation2 + $0x9] sm:$0xff]
      %v2496 = vld [vmem:[#allocation2 + $0x19] sm:$0xff]
      %v2497 = vld [vmem:[#allocation2 + $0x21] sm:$0xff]
      %v2498 = vld [vmem:[#allocation2 + $0x31] sm:$0xff]
      %v2499 = vld [vmem:[#allocation2 + $0x39] sm:$0xff]
      %v2500 = vld [vmem:[#allocation2 + $0x49] sm:$0xff]
      %v2501 = vld [vmem:[#allocation2 + $0x51] sm:$0xff]
      %v2502 = vld [vmem:[#allocation2 + $0x61] sm:$0xff]
      %v2503 = vld [vmem:[#allocation2 + $0x69] sm:$0xff]
      %v2504 = vld [vmem:[#allocation2 + $0x79] sm:$0xff]
      %v2505 = vld [vmem:[#allocation2 + $0x81] sm:$0xff]
      %v2506 = vld [vmem:[#allocation2 + $0x91] sm:$0xff]
      %v2507 = vld [vmem:[#allocation2 + $0x99] sm:$0xff]
      %v2508 = vld [vmem:[#allocation2 + $0xa9] sm:$0xff]
      %v2509 = vld [vmem:[#allocation2 + $0xb1] sm:$0xff]
      %v2510 = vld [vmem:[#allocation2 + $0xc1] sm:$0xff]
      %v2511 = vld [vmem:[#allocation2 + $0xc9] sm:$0xff]
      %v2512 = vld [vmem:[#allocation2 + $0xd9] sm:$0xff]
      %v2513 = vld [vmem:[#allocation2 + $0xe1] sm:$0xff]
      %v2514 = vld [vmem:[#allocation2 + $0xf1] sm:$0xff]
      %v2515 = vld [vmem:[#allocation2 + $0xf9] sm:$0xff]
      %v2516 = vld [vmem:[#allocation2 + $0x109] sm:$0xff]
      %v2517 = vld [vmem:[#allocation2 + $0x111] sm:$0xff]
      %v2518 = vld [vmem:[#allocation2 + $0x121] sm:$0xff]
      %v2519 = vld [vmem:[#allocation2 + $0x129] sm:$0xff]
      %v2520 = vld [vmem:[#allocation2 + $0x139] sm:$0xff]
      %v2521 = vld [vmem:[#allocation2 + $0x141] sm:$0xff]
      %v2522 = vld [vmem:[#allocation2 + $0x151] sm:$0xff]
      %v2523 = vld [vmem:[#allocation2 + $0x159] sm:$0xff]
      %v2524 = vld [vmem:[#allocation2 + $0x169] sm:$0xff]
      %v2525 = vld [vmem:[#allocation2 + $0x171] sm:$0xff]
      %v2526 = vpack.c.bf16 %v2495, %v2494
      %v2527 = vpack.c.bf16 %v2497, %v2496
      %v2528 = vpack.c.bf16 %v2499, %v2498
      %v2529 = vpack.c.bf16 %v2501, %v2500
      %v2530 = vpack.c.bf16 %v2503, %v2502
      %v2531 = vpack.c.bf16 %v2505, %v2504
      %v2532 = vpack.c.bf16 %v2507, %v2506
      %v2533 = vpack.c.bf16 %v2509, %v2508
      %v2534 = vpack.c.bf16 %v2511, %v2510
      %v2535 = vpack.c.bf16 %v2513, %v2512
      %v2536 = vpack.c.bf16 %v2515, %v2514
      %v2537 = vpack.c.bf16 %v2517, %v2516
      %v2538 = vpack.c.bf16 %v2519, %v2518
      %v2539 = vpack.c.bf16 %v2521, %v2520
      %v2540 = vpack.c.bf16 %v2523, %v2522
      %v2541 = vpack.c.bf16 %v2525, %v2524
      %s2542 = scalar_lea.vmem %s4, 8
      %v2543 = vld [vmem:[%s2542] sm:$0xf]
      %v2544 = vld [vmem:[%s2542 + $0x4] sm:$0xf]
      %v2547 = vunpack.c.l.b16 %v2543
      %v2548 = vunpack.c.l.b16 %v2544
      %v2549 = vpack.c.b16 %v2548, %v2547
      %v2552 = vsel %vm387, %v2526, 0
      %v2555 = vsel %vm387, %v2527, 0
      %v2558 = vsel %vm387, %v2528, 0
      %v2561 = vsel %vm387, %v2529, 0
      %v2564 = vsel %vm387, %v2530, 0
      %v2567 = vsel %vm387, %v2531, 0
      %v2570 = vsel %vm387, %v2532, 0
      %v2573 = vsel %vm387, %v2533, 0
      %v2576 = vsel %vm387, %v2534, 0
      %v2579 = vsel %vm387, %v2535, 0
      %v2582 = vsel %vm387, %v2536, 0
      %v2585 = vsel %vm387, %v2537, 0
      %v2588 = vsel %vm387, %v2538, 0
      %v2591 = vsel %vm387, %v2539, 0
      %v2594 = vsel %vm387, %v2540, 0
      %v2597 = vsel %vm387, %v2541, 0
      %2599 = vmatpush.bf16.msra.mxu0 0
      %2600 = vmatpush.bf16.msra.mxu0 0
      %2601 = vmatpush.bf16.msra.mxu0 0
      %2602 = vmatpush.bf16.msra.mxu0 0
      %2603 = vmatpush.bf16.msra.mxu0 0
      %2604 = vmatpush.bf16.msra.mxu0 0
      %2605 = vmatpush.bf16.msra.mxu0 0
      %2606 = vmatpush.bf16.msra.mxu0 %v2549
      %2607 = vmatmul.bf16.gmra.mxu0 %v2552
      %v2608 = vpop.f32.mrf.mxu0
      %v2609 = vadd.f32 0.0, %v2608
      %v2610 = vpop.f32.mrf.mxu0
      %v2611 = vadd.f32 0.0, %v2610
      %2612 = vmatmul.bf16.gmra.mxu0 %v2555
      %v2613 = vpop.f32.mrf.mxu0
      %v2614 = vadd.f32 0.0, %v2613
      %v2615 = vpop.f32.mrf.mxu0
      %v2616 = vadd.f32 0.0, %v2615
      %2617 = vmatmul.bf16.gmra.mxu0 %v2558
      %v2618 = vpop.f32.mrf.mxu0
      %v2619 = vadd.f32 0.0, %v2618
      %v2620 = vpop.f32.mrf.mxu0
      %v2621 = vadd.f32 0.0, %v2620
      %2622 = vmatmul.bf16.gmra.mxu0 %v2561
      %v2623 = vpop.f32.mrf.mxu0
      %v2624 = vadd.f32 0.0, %v2623
      %v2625 = vpop.f32.mrf.mxu0
      %v2626 = vadd.f32 0.0, %v2625
      %2627 = vmatmul.bf16.gmra.mxu0 %v2564
      %v2628 = vpop.f32.mrf.mxu0
      %v2629 = vadd.f32 0.0, %v2628
      %v2630 = vpop.f32.mrf.mxu0
      %v2631 = vadd.f32 0.0, %v2630
      %2632 = vmatmul.bf16.gmra.mxu0 %v2567
      %v2633 = vpop.f32.mrf.mxu0
      %v2634 = vadd.f32 0.0, %v2633
      %v2635 = vpop.f32.mrf.mxu0
      %v2636 = vadd.f32 0.0, %v2635
      %2637 = vmatmul.bf16.gmra.mxu0 %v2570
      %v2638 = vpop.f32.mrf.mxu0
      %v2639 = vadd.f32 0.0, %v2638
      %v2640 = vpop.f32.mrf.mxu0
      %v2641 = vadd.f32 0.0, %v2640
      %2642 = vmatmul.bf16.gmra.mxu0 %v2573
      %v2643 = vpop.f32.mrf.mxu0
      %v2644 = vadd.f32 0.0, %v2643
      %v2645 = vpop.f32.mrf.mxu0
      %v2646 = vadd.f32 0.0, %v2645
      %2647 = vmatmul.bf16.gmra.mxu0 %v2576
      %v2648 = vpop.f32.mrf.mxu0
      %v2649 = vadd.f32 0.0, %v2648
      %v2650 = vpop.f32.mrf.mxu0
      %v2651 = vadd.f32 0.0, %v2650
      %2652 = vmatmul.bf16.gmra.mxu0 %v2579
      %v2653 = vpop.f32.mrf.mxu0
      %v2654 = vadd.f32 0.0, %v2653
      %v2655 = vpop.f32.mrf.mxu0
      %v2656 = vadd.f32 0.0, %v2655
      %2657 = vmatmul.bf16.gmra.mxu0 %v2582
      %v2658 = vpop.f32.mrf.mxu0
      %v2659 = vadd.f32 0.0, %v2658
      %v2660 = vpop.f32.mrf.mxu0
      %v2661 = vadd.f32 0.0, %v2660
      %2662 = vmatmul.bf16.gmra.mxu0 %v2585
      %v2663 = vpop.f32.mrf.mxu0
      %v2664 = vadd.f32 0.0, %v2663
      %v2665 = vpop.f32.mrf.mxu0
      %v2666 = vadd.f32 0.0, %v2665
      %2667 = vmatmul.bf16.gmra.mxu0 %v2588
      %v2668 = vpop.f32.mrf.mxu0
      %v2669 = vadd.f32 0.0, %v2668
      %v2670 = vpop.f32.mrf.mxu0
      %v2671 = vadd.f32 0.0, %v2670
      %2672 = vmatmul.bf16.gmra.mxu0 %v2591
      %v2673 = vpop.f32.mrf.mxu0
      %v2674 = vadd.f32 0.0, %v2673
      %v2675 = vpop.f32.mrf.mxu0
      %v2676 = vadd.f32 0.0, %v2675
      %2677 = vmatmul.bf16.gmra.mxu0 %v2594
      %v2678 = vpop.f32.mrf.mxu0
      %v2679 = vadd.f32 0.0, %v2678
      %v2680 = vpop.f32.mrf.mxu0
      %v2681 = vadd.f32 0.0, %v2680
      %2682 = vmatmul.bf16.gmra.mxu0 %v2597
      %v2683 = vpop.f32.mrf.mxu0
      %v2684 = vadd.f32 0.0, %v2683
      %v2685 = vpop.f32.mrf.mxu0
      %v2686 = vadd.f32 0.0, %v2685
      %2687 = vdwg.mxu0
      %v2690 = vunpack.c.l.b16 %v2492
      %v2691 = vunpack.c.l.b16 %v2493
      %v2692 = vpack.c.b16 %v2691, %v2690
      %v2695 = vsel %vm387, %v2476, 0
      %v2698 = vsel %vm387, %v2477, 0
      %v2701 = vsel %vm387, %v2478, 0
      %v2704 = vsel %vm387, %v2479, 0
      %v2707 = vsel %vm387, %v2480, 0
      %v2710 = vsel %vm387, %v2481, 0
      %v2713 = vsel %vm387, %v2482, 0
      %v2716 = vsel %vm387, %v2483, 0
      %v2719 = vsel %vm387, %v2484, 0
      %v2722 = vsel %vm387, %v2485, 0
      %v2725 = vsel %vm387, %v2486, 0
      %v2728 = vsel %vm387, %v2487, 0
      %v2731 = vsel %vm387, %v2488, 0
      %v2734 = vsel %vm387, %v2489, 0
      %v2737 = vsel %vm387, %v2490, 0
      %v2740 = vsel %vm387, %v2491, 0
      %2742 = vmatpush.bf16.msra.mxu0 0
      %2743 = vmatpush.bf16.msra.mxu0 0
      %2744 = vmatpush.bf16.msra.mxu0 0
      %2745 = vmatpush.bf16.msra.mxu0 0
      %2746 = vmatpush.bf16.msra.mxu0 0
      %2747 = vmatpush.bf16.msra.mxu0 0
      %2748 = vmatpush.bf16.msra.mxu0 0
      %2749 = vmatpush.bf16.msra.mxu0 %v2692
      %2750 = vmatmul.bf16.gmra.mxu0 %v2695
      %v2751 = vpop.f32.mrf.mxu0
      %v2752 = vadd.f32 %v2609, %v2751
      %v2753 = vpop.f32.mrf.mxu0
      %v2754 = vadd.f32 %v2611, %v2753
      %2755 = vmatmul.bf16.gmra.mxu0 %v2698
      %v2756 = vpop.f32.mrf.mxu0
      %v2757 = vadd.f32 %v2614, %v2756
      %v2758 = vpop.f32.mrf.mxu0
      %v2759 = vadd.f32 %v2616, %v2758
      %2760 = vmatmul.bf16.gmra.mxu0 %v2701
      %v2761 = vpop.f32.mrf.mxu0
      %v2762 = vadd.f32 %v2619, %v2761
      %v2763 = vpop.f32.mrf.mxu0
      %v2764 = vadd.f32 %v2621, %v2763
      %2765 = vmatmul.bf16.gmra.mxu0 %v2704
      %v2766 = vpop.f32.mrf.mxu0
      %v2767 = vadd.f32 %v2624, %v2766
      %v2768 = vpop.f32.mrf.mxu0
      %v2769 = vadd.f32 %v2626, %v2768
      %2770 = vmatmul.bf16.gmra.mxu0 %v2707
      %v2771 = vpop.f32.mrf.mxu0
      %v2772 = vadd.f32 %v2629, %v2771
      %v2773 = vpop.f32.mrf.mxu0
      %v2774 = vadd.f32 %v2631, %v2773
      %2775 = vmatmul.bf16.gmra.mxu0 %v2710
      %v2776 = vpop.f32.mrf.mxu0
      %v2777 = vadd.f32 %v2634, %v2776
      %v2778 = vpop.f32.mrf.mxu0
      %v2779 = vadd.f32 %v2636, %v2778
      %2780 = vmatmul.bf16.gmra.mxu0 %v2713
      %v2781 = vpop.f32.mrf.mxu0
      %v2782 = vadd.f32 %v2639, %v2781
      %v2783 = vpop.f32.mrf.mxu0
      %v2784 = vadd.f32 %v2641, %v2783
      %2785 = vmatmul.bf16.gmra.mxu0 %v2716
      %v2786 = vpop.f32.mrf.mxu0
      %v2787 = vadd.f32 %v2644, %v2786
      %v2788 = vpop.f32.mrf.mxu0
      %v2789 = vadd.f32 %v2646, %v2788
      %2790 = vmatmul.bf16.gmra.mxu0 %v2719
      %v2791 = vpop.f32.mrf.mxu0
      %v2792 = vadd.f32 %v2649, %v2791
      %v2793 = vpop.f32.mrf.mxu0
      %v2794 = vadd.f32 %v2651, %v2793
      %2795 = vmatmul.bf16.gmra.mxu0 %v2722
      %v2796 = vpop.f32.mrf.mxu0
      %v2797 = vadd.f32 %v2654, %v2796
      %v2798 = vpop.f32.mrf.mxu0
      %v2799 = vadd.f32 %v2656, %v2798
      %2800 = vmatmul.bf16.gmra.mxu0 %v2725
      %v2801 = vpop.f32.mrf.mxu0
      %v2802 = vadd.f32 %v2659, %v2801
      %v2803 = vpop.f32.mrf.mxu0
      %v2804 = vadd.f32 %v2661, %v2803
      %2805 = vmatmul.bf16.gmra.mxu0 %v2728
      %v2806 = vpop.f32.mrf.mxu0
      %v2807 = vadd.f32 %v2664, %v2806
      %v2808 = vpop.f32.mrf.mxu0
      %v2809 = vadd.f32 %v2666, %v2808
      %2810 = vmatmul.bf16.gmra.mxu0 %v2731
      %v2811 = vpop.f32.mrf.mxu0
      %v2812 = vadd.f32 %v2669, %v2811
      %v2813 = vpop.f32.mrf.mxu0
      %v2814 = vadd.f32 %v2671, %v2813
      %2815 = vmatmul.bf16.gmra.mxu0 %v2734
      %v2816 = vpop.f32.mrf.mxu0
      %v2817 = vadd.f32 %v2674, %v2816
      %v2818 = vpop.f32.mrf.mxu0
      %v2819 = vadd.f32 %v2676, %v2818
      %2820 = vmatmul.bf16.gmra.mxu0 %v2737
      %v2821 = vpop.f32.mrf.mxu0
      %v2822 = vadd.f32 %v2679, %v2821
      %v2823 = vpop.f32.mrf.mxu0
      %v2824 = vadd.f32 %v2681, %v2823
      %2825 = vmatmul.bf16.gmra.mxu0 %v2740
      %v2826 = vpop.f32.mrf.mxu0
      %v2827 = vadd.f32 %v2684, %v2826
      %v2828 = vpop.f32.mrf.mxu0
      %v2829 = vadd.f32 %v2686, %v2828
      %2830 = vdwg.mxu0
      %v2831 = vld [vmem:[#allocation2 + $0x2] sm:$0xff]
      %v2832 = vld [vmem:[#allocation2 + $0xa] sm:$0xff]
      %v2833 = vld [vmem:[#allocation2 + $0x1a] sm:$0xff]
      %v2834 = vld [vmem:[#allocation2 + $0x22] sm:$0xff]
      %v2835 = vld [vmem:[#allocation2 + $0x32] sm:$0xff]
      %v2836 = vld [vmem:[#allocation2 + $0x3a] sm:$0xff]
      %v2837 = vld [vmem:[#allocation2 + $0x4a] sm:$0xff]
      %v2838 = vld [vmem:[#allocation2 + $0x52] sm:$0xff]
      %v2839 = vld [vmem:[#allocation2 + $0x62] sm:$0xff]
      %v2840 = vld [vmem:[#allocation2 + $0x6a] sm:$0xff]
      %v2841 = vld [vmem:[#allocation2 + $0x7a] sm:$0xff]
      %v2842 = vld [vmem:[#allocation2 + $0x82] sm:$0xff]
      %v2843 = vld [vmem:[#allocation2 + $0x92] sm:$0xff]
      %v2844 = vld [vmem:[#allocation2 + $0x9a] sm:$0xff]
      %v2845 = vld [vmem:[#allocation2 + $0xaa] sm:$0xff]
      %v2846 = vld [vmem:[#allocation2 + $0xb2] sm:$0xff]
      %v2847 = vld [vmem:[#allocation2 + $0xc2] sm:$0xff]
      %v2848 = vld [vmem:[#allocation2 + $0xca] sm:$0xff]
      %v2849 = vld [vmem:[#allocation2 + $0xda] sm:$0xff]
      %v2850 = vld [vmem:[#allocation2 + $0xe2] sm:$0xff]
      %v2851 = vld [vmem:[#allocation2 + $0xf2] sm:$0xff]
      %v2852 = vld [vmem:[#allocation2 + $0xfa] sm:$0xff]
      %v2853 = vld [vmem:[#allocation2 + $0x10a] sm:$0xff]
      %v2854 = vld [vmem:[#allocation2 + $0x112] sm:$0xff]
      %v2855 = vld [vmem:[#allocation2 + $0x122] sm:$0xff]
      %v2856 = vld [vmem:[#allocation2 + $0x12a] sm:$0xff]
      %v2857 = vld [vmem:[#allocation2 + $0x13a] sm:$0xff]
      %v2858 = vld [vmem:[#allocation2 + $0x142] sm:$0xff]
      %v2859 = vld [vmem:[#allocation2 + $0x152] sm:$0xff]
      %v2860 = vld [vmem:[#allocation2 + $0x15a] sm:$0xff]
      %v2861 = vld [vmem:[#allocation2 + $0x16a] sm:$0xff]
      %v2862 = vld [vmem:[#allocation2 + $0x172] sm:$0xff]
      %v2863 = vpack.c.bf16 %v2832, %v2831
      %v2864 = vpack.c.bf16 %v2834, %v2833
      %v2865 = vpack.c.bf16 %v2836, %v2835
      %v2866 = vpack.c.bf16 %v2838, %v2837
      %v2867 = vpack.c.bf16 %v2840, %v2839
      %v2868 = vpack.c.bf16 %v2842, %v2841
      %v2869 = vpack.c.bf16 %v2844, %v2843
      %v2870 = vpack.c.bf16 %v2846, %v2845
      %v2871 = vpack.c.bf16 %v2848, %v2847
      %v2872 = vpack.c.bf16 %v2850, %v2849
      %v2873 = vpack.c.bf16 %v2852, %v2851
      %v2874 = vpack.c.bf16 %v2854, %v2853
      %v2875 = vpack.c.bf16 %v2856, %v2855
      %v2876 = vpack.c.bf16 %v2858, %v2857
      %v2877 = vpack.c.bf16 %v2860, %v2859
      %v2878 = vpack.c.bf16 %v2862, %v2861
      %s2879 = scalar_lea.vmem %s4, 16
      %v2880 = vld [vmem:[%s2879] sm:$0xf]
      %v2881 = vld [vmem:[%s2879 + $0x4] sm:$0xf]
      %v2884 = vunpack.c.l.b16 %v2880
      %v2885 = vunpack.c.l.b16 %v2881
      %v2886 = vpack.c.b16 %v2885, %v2884
      %v2889 = vsel %vm387, %v2863, 0
      %v2892 = vsel %vm387, %v2864, 0
      %v2895 = vsel %vm387, %v2865, 0
      %v2898 = vsel %vm387, %v2866, 0
      %v2901 = vsel %vm387, %v2867, 0
      %v2904 = vsel %vm387, %v2868, 0
      %v2907 = vsel %vm387, %v2869, 0
      %v2910 = vsel %vm387, %v2870, 0
      %v2913 = vsel %vm387, %v2871, 0
      %v2916 = vsel %vm387, %v2872, 0
      %v2919 = vsel %vm387, %v2873, 0
      %v2922 = vsel %vm387, %v2874, 0
      %v2925 = vsel %vm387, %v2875, 0
      %v2928 = vsel %vm387, %v2876, 0
      %v2931 = vsel %vm387, %v2877, 0
      %v2934 = vsel %vm387, %v2878, 0
      %2936 = vmatpush.bf16.msra.mxu0 0
      %2937 = vmatpush.bf16.msra.mxu0 0
      %2938 = vmatpush.bf16.msra.mxu0 0
      %2939 = vmatpush.bf16.msra.mxu0 0
      %2940 = vmatpush.bf16.msra.mxu0 0
      %2941 = vmatpush.bf16.msra.mxu0 0
      %2942 = vmatpush.bf16.msra.mxu0 0
      %2943 = vmatpush.bf16.msra.mxu0 %v2886
      %2944 = vmatmul.bf16.gmra.mxu0 %v2889
      %v2945 = vpop.f32.mrf.mxu0
      %v2946 = vadd.f32 0.0, %v2945
      %v2947 = vpop.f32.mrf.mxu0
      %v2948 = vadd.f32 0.0, %v2947
      %2949 = vmatmul.bf16.gmra.mxu0 %v2892
      %v2950 = vpop.f32.mrf.mxu0
      %v2951 = vadd.f32 0.0, %v2950
      %v2952 = vpop.f32.mrf.mxu0
      %v2953 = vadd.f32 0.0, %v2952
      %2954 = vmatmul.bf16.gmra.mxu0 %v2895
      %v2955 = vpop.f32.mrf.mxu0
      %v2956 = vadd.f32 0.0, %v2955
      %v2957 = vpop.f32.mrf.mxu0
      %v2958 = vadd.f32 0.0, %v2957
      %2959 = vmatmul.bf16.gmra.mxu0 %v2898
      %v2960 = vpop.f32.mrf.mxu0
      %v2961 = vadd.f32 0.0, %v2960
      %v2962 = vpop.f32.mrf.mxu0
      %v2963 = vadd.f32 0.0, %v2962
      %2964 = vmatmul.bf16.gmra.mxu0 %v2901
      %v2965 = vpop.f32.mrf.mxu0
      %v2966 = vadd.f32 0.0, %v2965
      %v2967 = vpop.f32.mrf.mxu0
      %v2968 = vadd.f32 0.0, %v2967
      %2969 = vmatmul.bf16.gmra.mxu0 %v2904
      %v2970 = vpop.f32.mrf.mxu0
      %v2971 = vadd.f32 0.0, %v2970
      %v2972 = vpop.f32.mrf.mxu0
      %v2973 = vadd.f32 0.0, %v2972
      %2974 = vmatmul.bf16.gmra.mxu0 %v2907
      %v2975 = vpop.f32.mrf.mxu0
      %v2976 = vadd.f32 0.0, %v2975
      %v2977 = vpop.f32.mrf.mxu0
      %v2978 = vadd.f32 0.0, %v2977
      %2979 = vmatmul.bf16.gmra.mxu0 %v2910
      %v2980 = vpop.f32.mrf.mxu0
      %v2981 = vadd.f32 0.0, %v2980
      %v2982 = vpop.f32.mrf.mxu0
      %v2983 = vadd.f32 0.0, %v2982
      %2984 = vmatmul.bf16.gmra.mxu0 %v2913
      %v2985 = vpop.f32.mrf.mxu0
      %v2986 = vadd.f32 0.0, %v2985
      %v2987 = vpop.f32.mrf.mxu0
      %v2988 = vadd.f32 0.0, %v2987
      %2989 = vmatmul.bf16.gmra.mxu0 %v2916
      %v2990 = vpop.f32.mrf.mxu0
      %v2991 = vadd.f32 0.0, %v2990
      %v2992 = vpop.f32.mrf.mxu0
      %v2993 = vadd.f32 0.0, %v2992
      %2994 = vmatmul.bf16.gmra.mxu0 %v2919
      %v2995 = vpop.f32.mrf.mxu0
      %v2996 = vadd.f32 0.0, %v2995
      %v2997 = vpop.f32.mrf.mxu0
      %v2998 = vadd.f32 0.0, %v2997
      %2999 = vmatmul.bf16.gmra.mxu0 %v2922
      %v3000 = vpop.f32.mrf.mxu0
      %v3001 = vadd.f32 0.0, %v3000
      %v3002 = vpop.f32.mrf.mxu0
      %v3003 = vadd.f32 0.0, %v3002
      %3004 = vmatmul.bf16.gmra.mxu0 %v2925
      %v3005 = vpop.f32.mrf.mxu0
      %v3006 = vadd.f32 0.0, %v3005
      %v3007 = vpop.f32.mrf.mxu0
      %v3008 = vadd.f32 0.0, %v3007
      %3009 = vmatmul.bf16.gmra.mxu0 %v2928
      %v3010 = vpop.f32.mrf.mxu0
      %v3011 = vadd.f32 0.0, %v3010
      %v3012 = vpop.f32.mrf.mxu0
      %v3013 = vadd.f32 0.0, %v3012
      %3014 = vmatmul.bf16.gmra.mxu0 %v2931
      %v3015 = vpop.f32.mrf.mxu0
      %v3016 = vadd.f32 0.0, %v3015
      %v3017 = vpop.f32.mrf.mxu0
      %v3018 = vadd.f32 0.0, %v3017
      %3019 = vmatmul.bf16.gmra.mxu0 %v2934
      %v3020 = vpop.f32.mrf.mxu0
      %v3021 = vadd.f32 0.0, %v3020
      %v3022 = vpop.f32.mrf.mxu0
      %v3023 = vadd.f32 0.0, %v3022
      %3024 = vdwg.mxu0
      %v3025 = vadd.f32 %v2752, %v2946
      %v3026 = vadd.f32 %v2754, %v2948
      %v3027 = vadd.f32 %v2757, %v2951
      %v3028 = vadd.f32 %v2759, %v2953
      %v3029 = vadd.f32 %v2762, %v2956
      %v3030 = vadd.f32 %v2764, %v2958
      %v3031 = vadd.f32 %v2767, %v2961
      %v3032 = vadd.f32 %v2769, %v2963
      %v3033 = vadd.f32 %v2772, %v2966
      %v3034 = vadd.f32 %v2774, %v2968
      %v3035 = vadd.f32 %v2777, %v2971
      %v3036 = vadd.f32 %v2779, %v2973
      %v3037 = vadd.f32 %v2782, %v2976
      %v3038 = vadd.f32 %v2784, %v2978
      %v3039 = vadd.f32 %v2787, %v2981
      %v3040 = vadd.f32 %v2789, %v2983
      %v3041 = vadd.f32 %v2792, %v2986
      %v3042 = vadd.f32 %v2794, %v2988
      %v3043 = vadd.f32 %v2797, %v2991
      %v3044 = vadd.f32 %v2799, %v2993
      %v3045 = vadd.f32 %v2802, %v2996
      %v3046 = vadd.f32 %v2804, %v2998
      %v3047 = vadd.f32 %v2807, %v3001
      %v3048 = vadd.f32 %v2809, %v3003
      %v3049 = vadd.f32 %v2812, %v3006
      %v3050 = vadd.f32 %v2814, %v3008
      %v3051 = vadd.f32 %v2817, %v3011
      %v3052 = vadd.f32 %v2819, %v3013
      %v3053 = vadd.f32 %v2822, %v3016
      %v3054 = vadd.f32 %v2824, %v3018
      %v3055 = vadd.f32 %v2827, %v3021
      %v3056 = vadd.f32 %v2829, %v3023
      %v3057 = vld [vmem:[%s2411] sm:$0xff]
      %v3058 = vld [vmem:[%s2411 + $0x8] sm:$0xff]
      %v3059 = vld [vmem:[%s2411 + $0x18] sm:$0xff]
      %v3060 = vld [vmem:[%s2411 + $0x20] sm:$0xff]
      %v3061 = vld [vmem:[%s2411 + $0x30] sm:$0xff]
      %v3062 = vld [vmem:[%s2411 + $0x38] sm:$0xff]
      %v3063 = vld [vmem:[%s2411 + $0x48] sm:$0xff]
      %v3064 = vld [vmem:[%s2411 + $0x50] sm:$0xff]
      %v3065 = vld [vmem:[%s2411 + $0x60] sm:$0xff]
      %v3066 = vld [vmem:[%s2411 + $0x68] sm:$0xff]
      %v3067 = vld [vmem:[%s2411 + $0x78] sm:$0xff]
      %v3068 = vld [vmem:[%s2411 + $0x80] sm:$0xff]
      %v3069 = vld [vmem:[%s2411 + $0x90] sm:$0xff]
      %v3070 = vld [vmem:[%s2411 + $0x98] sm:$0xff]
      %v3071 = vld [vmem:[%s2411 + $0xa8] sm:$0xff]
      %v3072 = vld [vmem:[%s2411 + $0xb0] sm:$0xff]
      %v3073 = vld [vmem:[%s2411 + $0xc0] sm:$0xff]
      %v3074 = vld [vmem:[%s2411 + $0xc8] sm:$0xff]
      %v3075 = vld [vmem:[%s2411 + $0xd8] sm:$0xff]
      %v3076 = vld [vmem:[%s2411 + $0xe0] sm:$0xff]
      %v3077 = vld [vmem:[%s2411 + $0xf0] sm:$0xff]
      %v3078 = vld [vmem:[%s2411 + $0xf8] sm:$0xff]
      %v3079 = vld [vmem:[%s2411 + $0x108] sm:$0xff]
      %v3080 = vld [vmem:[%s2411 + $0x110] sm:$0xff]
      %v3081 = vld [vmem:[%s2411 + $0x120] sm:$0xff]
      %v3082 = vld [vmem:[%s2411 + $0x128] sm:$0xff]
      %v3083 = vld [vmem:[%s2411 + $0x138] sm:$0xff]
      %v3084 = vld [vmem:[%s2411 + $0x140] sm:$0xff]
      %v3085 = vld [vmem:[%s2411 + $0x150] sm:$0xff]
      %v3086 = vld [vmem:[%s2411 + $0x158] sm:$0xff]
      %v3087 = vld [vmem:[%s2411 + $0x168] sm:$0xff]
      %v3088 = vld [vmem:[%s2411 + $0x170] sm:$0xff]
      %v3089 = vpack.c.bf16 %v3058, %v3057
      %v3090 = vpack.c.bf16 %v3060, %v3059
      %v3091 = vpack.c.bf16 %v3062, %v3061
      %v3092 = vpack.c.bf16 %v3064, %v3063
      %v3093 = vpack.c.bf16 %v3066, %v3065
      %v3094 = vpack.c.bf16 %v3068, %v3067
      %v3095 = vpack.c.bf16 %v3070, %v3069
      %v3096 = vpack.c.bf16 %v3072, %v3071
      %v3097 = vpack.c.bf16 %v3074, %v3073
      %v3098 = vpack.c.bf16 %v3076, %v3075
      %v3099 = vpack.c.bf16 %v3078, %v3077
      %v3100 = vpack.c.bf16 %v3080, %v3079
      %v3101 = vpack.c.bf16 %v3082, %v3081
      %v3102 = vpack.c.bf16 %v3084, %v3083
      %v3103 = vpack.c.bf16 %v3086, %v3085
      %v3104 = vpack.c.bf16 %v3088, %v3087
      %s3105 = scalar_lea.vmem %s4, 24
      %v3106 = vld [vmem:[%s3105] sm:$0xf]
      %v3107 = vld [vmem:[%s3105 + $0x4] sm:$0xf]
      %v3110 = vunpack.c.l.b16 %v3106
      %v3111 = vunpack.c.l.b16 %v3107
      %v3112 = vpack.c.b16 %v3111, %v3110
      %v3115 = vsel %vm387, %v3089, 0
      %v3118 = vsel %vm387, %v3090, 0
      %v3121 = vsel %vm387, %v3091, 0
      %v3124 = vsel %vm387, %v3092, 0
      %v3127 = vsel %vm387, %v3093, 0
      %v3130 = vsel %vm387, %v3094, 0
      %v3133 = vsel %vm387, %v3095, 0
      %v3136 = vsel %vm387, %v3096, 0
      %v3139 = vsel %vm387, %v3097, 0
      %v3142 = vsel %vm387, %v3098, 0
      %v3145 = vsel %vm387, %v3099, 0
      %v3148 = vsel %vm387, %v3100, 0
      %v3151 = vsel %vm387, %v3101, 0
      %v3154 = vsel %vm387, %v3102, 0
      %v3157 = vsel %vm387, %v3103, 0
      %v3160 = vsel %vm387, %v3104, 0
      %3162 = vmatpush.bf16.msra.mxu0 0
      %3163 = vmatpush.bf16.msra.mxu0 0
      %3164 = vmatpush.bf16.msra.mxu0 0
      %3165 = vmatpush.bf16.msra.mxu0 0
      %3166 = vmatpush.bf16.msra.mxu0 0
      %3167 = vmatpush.bf16.msra.mxu0 0
      %3168 = vmatpush.bf16.msra.mxu0 0
      %3169 = vmatpush.bf16.msra.mxu0 %v3112
      %3170 = vmatmul.bf16.gmra.mxu0 %v3115
      %v3171 = vpop.f32.mrf.mxu0
      %v3172 = vadd.f32 0.0, %v3171
      %v3173 = vpop.f32.mrf.mxu0
      %v3174 = vadd.f32 0.0, %v3173
      %3175 = vmatmul.bf16.gmra.mxu0 %v3118
      %v3176 = vpop.f32.mrf.mxu0
      %v3177 = vadd.f32 0.0, %v3176
      %v3178 = vpop.f32.mrf.mxu0
      %v3179 = vadd.f32 0.0, %v3178
      %3180 = vmatmul.bf16.gmra.mxu0 %v3121
      %v3181 = vpop.f32.mrf.mxu0
      %v3182 = vadd.f32 0.0, %v3181
      %v3183 = vpop.f32.mrf.mxu0
      %v3184 = vadd.f32 0.0, %v3183
      %3185 = vmatmul.bf16.gmra.mxu0 %v3124
      %v3186 = vpop.f32.mrf.mxu0
      %v3187 = vadd.f32 0.0, %v3186
      %v3188 = vpop.f32.mrf.mxu0
      %v3189 = vadd.f32 0.0, %v3188
      %3190 = vmatmul.bf16.gmra.mxu0 %v3127
      %v3191 = vpop.f32.mrf.mxu0
      %v3192 = vadd.f32 0.0, %v3191
      %v3193 = vpop.f32.mrf.mxu0
      %v3194 = vadd.f32 0.0, %v3193
      %3195 = vmatmul.bf16.gmra.mxu0 %v3130
      %v3196 = vpop.f32.mrf.mxu0
      %v3197 = vadd.f32 0.0, %v3196
      %v3198 = vpop.f32.mrf.mxu0
      %v3199 = vadd.f32 0.0, %v3198
      %3200 = vmatmul.bf16.gmra.mxu0 %v3133
      %v3201 = vpop.f32.mrf.mxu0
      %v3202 = vadd.f32 0.0, %v3201
      %v3203 = vpop.f32.mrf.mxu0
      %v3204 = vadd.f32 0.0, %v3203
      %3205 = vmatmul.bf16.gmra.mxu0 %v3136
      %v3206 = vpop.f32.mrf.mxu0
      %v3207 = vadd.f32 0.0, %v3206
      %v3208 = vpop.f32.mrf.mxu0
      %v3209 = vadd.f32 0.0, %v3208
      %3210 = vmatmul.bf16.gmra.mxu0 %v3139
      %v3211 = vpop.f32.mrf.mxu0
      %v3212 = vadd.f32 0.0, %v3211
      %v3213 = vpop.f32.mrf.mxu0
      %v3214 = vadd.f32 0.0, %v3213
      %3215 = vmatmul.bf16.gmra.mxu0 %v3142
      %v3216 = vpop.f32.mrf.mxu0
      %v3217 = vadd.f32 0.0, %v3216
      %v3218 = vpop.f32.mrf.mxu0
      %v3219 = vadd.f32 0.0, %v3218
      %3220 = vmatmul.bf16.gmra.mxu0 %v3145
      %v3221 = vpop.f32.mrf.mxu0
      %v3222 = vadd.f32 0.0, %v3221
      %v3223 = vpop.f32.mrf.mxu0
      %v3224 = vadd.f32 0.0, %v3223
      %3225 = vmatmul.bf16.gmra.mxu0 %v3148
      %v3226 = vpop.f32.mrf.mxu0
      %v3227 = vadd.f32 0.0, %v3226
      %v3228 = vpop.f32.mrf.mxu0
      %v3229 = vadd.f32 0.0, %v3228
      %3230 = vmatmul.bf16.gmra.mxu0 %v3151
      %v3231 = vpop.f32.mrf.mxu0
      %v3232 = vadd.f32 0.0, %v3231
      %v3233 = vpop.f32.mrf.mxu0
      %v3234 = vadd.f32 0.0, %v3233
      %3235 = vmatmul.bf16.gmra.mxu0 %v3154
      %v3236 = vpop.f32.mrf.mxu0
      %v3237 = vadd.f32 0.0, %v3236
      %v3238 = vpop.f32.mrf.mxu0
      %v3239 = vadd.f32 0.0, %v3238
      %3240 = vmatmul.bf16.gmra.mxu0 %v3157
      %v3241 = vpop.f32.mrf.mxu0
      %v3242 = vadd.f32 0.0, %v3241
      %v3243 = vpop.f32.mrf.mxu0
      %v3244 = vadd.f32 0.0, %v3243
      %3245 = vmatmul.bf16.gmra.mxu0 %v3160
      %v3246 = vpop.f32.mrf.mxu0
      %v3247 = vadd.f32 0.0, %v3246
      %v3248 = vpop.f32.mrf.mxu0
      %v3249 = vadd.f32 0.0, %v3248
      %3250 = vdwg.mxu0
      %v3251 = vadd.f32 %v3025, %v3172
      %v3252 = vadd.f32 %v3026, %v3174
      %v3253 = vadd.f32 %v3027, %v3177
      %v3254 = vadd.f32 %v3028, %v3179
      %v3255 = vadd.f32 %v3029, %v3182
      %v3256 = vadd.f32 %v3030, %v3184
      %v3257 = vadd.f32 %v3031, %v3187
      %v3258 = vadd.f32 %v3032, %v3189
      %v3259 = vadd.f32 %v3033, %v3192
      %v3260 = vadd.f32 %v3034, %v3194
      %v3261 = vadd.f32 %v3035, %v3197
      %v3262 = vadd.f32 %v3036, %v3199
      %v3263 = vadd.f32 %v3037, %v3202
      %v3264 = vadd.f32 %v3038, %v3204
      %v3265 = vadd.f32 %v3039, %v3207
      %v3266 = vadd.f32 %v3040, %v3209
      %v3267 = vadd.f32 %v3041, %v3212
      %v3268 = vadd.f32 %v3042, %v3214
      %v3269 = vadd.f32 %v3043, %v3217
      %v3270 = vadd.f32 %v3044, %v3219
      %v3271 = vadd.f32 %v3045, %v3222
      %v3272 = vadd.f32 %v3046, %v3224
      %v3273 = vadd.f32 %v3047, %v3227
      %v3274 = vadd.f32 %v3048, %v3229
      %v3275 = vadd.f32 %v3049, %v3232
      %v3276 = vadd.f32 %v3050, %v3234
      %v3277 = vadd.f32 %v3051, %v3237
      %v3278 = vadd.f32 %v3052, %v3239
      %v3279 = vadd.f32 %v3053, %v3242
      %v3280 = vadd.f32 %v3054, %v3244
      %v3281 = vadd.f32 %v3055, %v3247
      %v3282 = vadd.f32 %v3056, %v3249
      %v3283 = vld [vmem:[%s2411 + $0x1] sm:$0xff]
      %v3284 = vld [vmem:[%s2411 + $0x9] sm:$0xff]
      %v3285 = vld [vmem:[%s2411 + $0x19] sm:$0xff]
      %v3286 = vld [vmem:[%s2411 + $0x21] sm:$0xff]
      %v3287 = vld [vmem:[%s2411 + $0x31] sm:$0xff]
      %v3288 = vld [vmem:[%s2411 + $0x39] sm:$0xff]
      %v3289 = vld [vmem:[%s2411 + $0x49] sm:$0xff]
      %v3290 = vld [vmem:[%s2411 + $0x51] sm:$0xff]
      %v3291 = vld [vmem:[%s2411 + $0x61] sm:$0xff]
      %v3292 = vld [vmem:[%s2411 + $0x69] sm:$0xff]
      %v3293 = vld [vmem:[%s2411 + $0x79] sm:$0xff]
      %v3294 = vld [vmem:[%s2411 + $0x81] sm:$0xff]
      %v3295 = vld [vmem:[%s2411 + $0x91] sm:$0xff]
      %v3296 = vld [vmem:[%s2411 + $0x99] sm:$0xff]
      %v3297 = vld [vmem:[%s2411 + $0xa9] sm:$0xff]
      %v3298 = vld [vmem:[%s2411 + $0xb1] sm:$0xff]
      %v3299 = vld [vmem:[%s2411 + $0xc1] sm:$0xff]
      %v3300 = vld [vmem:[%s2411 + $0xc9] sm:$0xff]
      %v3301 = vld [vmem:[%s2411 + $0xd9] sm:$0xff]
      %v3302 = vld [vmem:[%s2411 + $0xe1] sm:$0xff]
      %v3303 = vld [vmem:[%s2411 + $0xf1] sm:$0xff]
      %v3304 = vld [vmem:[%s2411 + $0xf9] sm:$0xff]
      %v3305 = vld [vmem:[%s2411 + $0x109] sm:$0xff]
      %v3306 = vld [vmem:[%s2411 + $0x111] sm:$0xff]
      %v3307 = vld [vmem:[%s2411 + $0x121] sm:$0xff]
      %v3308 = vld [vmem:[%s2411 + $0x129] sm:$0xff]
      %v3309 = vld [vmem:[%s2411 + $0x139] sm:$0xff]
      %v3310 = vld [vmem:[%s2411 + $0x141] sm:$0xff]
      %v3311 = vld [vmem:[%s2411 + $0x151] sm:$0xff]
      %v3312 = vld [vmem:[%s2411 + $0x159] sm:$0xff]
      %v3313 = vld [vmem:[%s2411 + $0x169] sm:$0xff]
      %v3314 = vld [vmem:[%s2411 + $0x171] sm:$0xff]
      %v3315 = vpack.c.bf16 %v3284, %v3283
      %v3316 = vpack.c.bf16 %v3286, %v3285
      %v3317 = vpack.c.bf16 %v3288, %v3287
      %v3318 = vpack.c.bf16 %v3290, %v3289
      %v3319 = vpack.c.bf16 %v3292, %v3291
      %v3320 = vpack.c.bf16 %v3294, %v3293
      %v3321 = vpack.c.bf16 %v3296, %v3295
      %v3322 = vpack.c.bf16 %v3298, %v3297
      %v3323 = vpack.c.bf16 %v3300, %v3299
      %v3324 = vpack.c.bf16 %v3302, %v3301
      %v3325 = vpack.c.bf16 %v3304, %v3303
      %v3326 = vpack.c.bf16 %v3306, %v3305
      %v3327 = vpack.c.bf16 %v3308, %v3307
      %v3328 = vpack.c.bf16 %v3310, %v3309
      %v3329 = vpack.c.bf16 %v3312, %v3311
      %v3330 = vpack.c.bf16 %v3314, %v3313
      %s3331 = scalar_lea.vmem %s4, 32
      %v3332 = vld [vmem:[%s3331] sm:$0xf]
      %v3333 = vld [vmem:[%s3331 + $0x4] sm:$0xf]
      %v3336 = vunpack.c.l.b16 %v3332
      %v3337 = vunpack.c.l.b16 %v3333
      %v3338 = vpack.c.b16 %v3337, %v3336
      %v3341 = vsel %vm387, %v3315, 0
      %v3344 = vsel %vm387, %v3316, 0
      %v3347 = vsel %vm387, %v3317, 0
      %v3350 = vsel %vm387, %v3318, 0
      %v3353 = vsel %vm387, %v3319, 0
      %v3356 = vsel %vm387, %v3320, 0
      %v3359 = vsel %vm387, %v3321, 0
      %v3362 = vsel %vm387, %v3322, 0
      %v3365 = vsel %vm387, %v3323, 0
      %v3368 = vsel %vm387, %v3324, 0
      %v3371 = vsel %vm387, %v3325, 0
      %v3374 = vsel %vm387, %v3326, 0
      %v3377 = vsel %vm387, %v3327, 0
      %v3380 = vsel %vm387, %v3328, 0
      %v3383 = vsel %vm387, %v3329, 0
      %v3386 = vsel %vm387, %v3330, 0
      %3388 = vmatpush.bf16.msra.mxu0 0
      %3389 = vmatpush.bf16.msra.mxu0 0
      %3390 = vmatpush.bf16.msra.mxu0 0
      %3391 = vmatpush.bf16.msra.mxu0 0
      %3392 = vmatpush.bf16.msra.mxu0 0
      %3393 = vmatpush.bf16.msra.mxu0 0
      %3394 = vmatpush.bf16.msra.mxu0 0
      %3395 = vmatpush.bf16.msra.mxu0 %v3338
      %3396 = vmatmul.bf16.gmra.mxu0 %v3341
      %v3397 = vpop.f32.mrf.mxu0
      %v3398 = vadd.f32 0.0, %v3397
      %v3399 = vpop.f32.mrf.mxu0
      %v3400 = vadd.f32 0.0, %v3399
      %3401 = vmatmul.bf16.gmra.mxu0 %v3344
      %v3402 = vpop.f32.mrf.mxu0
      %v3403 = vadd.f32 0.0, %v3402
      %v3404 = vpop.f32.mrf.mxu0
      %v3405 = vadd.f32 0.0, %v3404
      %3406 = vmatmul.bf16.gmra.mxu0 %v3347
      %v3407 = vpop.f32.mrf.mxu0
      %v3408 = vadd.f32 0.0, %v3407
      %v3409 = vpop.f32.mrf.mxu0
      %v3410 = vadd.f32 0.0, %v3409
      %3411 = vmatmul.bf16.gmra.mxu0 %v3350
      %v3412 = vpop.f32.mrf.mxu0
      %v3413 = vadd.f32 0.0, %v3412
      %v3414 = vpop.f32.mrf.mxu0
      %v3415 = vadd.f32 0.0, %v3414
      %3416 = vmatmul.bf16.gmra.mxu0 %v3353
      %v3417 = vpop.f32.mrf.mxu0
      %v3418 = vadd.f32 0.0, %v3417
      %v3419 = vpop.f32.mrf.mxu0
      %v3420 = vadd.f32 0.0, %v3419
      %3421 = vmatmul.bf16.gmra.mxu0 %v3356
      %v3422 = vpop.f32.mrf.mxu0
      %v3423 = vadd.f32 0.0, %v3422
      %v3424 = vpop.f32.mrf.mxu0
      %v3425 = vadd.f32 0.0, %v3424
      %3426 = vmatmul.bf16.gmra.mxu0 %v3359
      %v3427 = vpop.f32.mrf.mxu0
      %v3428 = vadd.f32 0.0, %v3427
      %v3429 = vpop.f32.mrf.mxu0
      %v3430 = vadd.f32 0.0, %v3429
      %3431 = vmatmul.bf16.gmra.mxu0 %v3362
      %v3432 = vpop.f32.mrf.mxu0
      %v3433 = vadd.f32 0.0, %v3432
      %v3434 = vpop.f32.mrf.mxu0
      %v3435 = vadd.f32 0.0, %v3434
      %3436 = vmatmul.bf16.gmra.mxu0 %v3365
      %v3437 = vpop.f32.mrf.mxu0
      %v3438 = vadd.f32 0.0, %v3437
      %v3439 = vpop.f32.mrf.mxu0
      %v3440 = vadd.f32 0.0, %v3439
      %3441 = vmatmul.bf16.gmra.mxu0 %v3368
      %v3442 = vpop.f32.mrf.mxu0
      %v3443 = vadd.f32 0.0, %v3442
      %v3444 = vpop.f32.mrf.mxu0
      %v3445 = vadd.f32 0.0, %v3444
      %3446 = vmatmul.bf16.gmra.mxu0 %v3371
      %v3447 = vpop.f32.mrf.mxu0
      %v3448 = vadd.f32 0.0, %v3447
      %v3449 = vpop.f32.mrf.mxu0
      %v3450 = vadd.f32 0.0, %v3449
      %3451 = vmatmul.bf16.gmra.mxu0 %v3374
      %v3452 = vpop.f32.mrf.mxu0
      %v3453 = vadd.f32 0.0, %v3452
      %v3454 = vpop.f32.mrf.mxu0
      %v3455 = vadd.f32 0.0, %v3454
      %3456 = vmatmul.bf16.gmra.mxu0 %v3377
      %v3457 = vpop.f32.mrf.mxu0
      %v3458 = vadd.f32 0.0, %v3457
      %v3459 = vpop.f32.mrf.mxu0
      %v3460 = vadd.f32 0.0, %v3459
      %3461 = vmatmul.bf16.gmra.mxu0 %v3380
      %v3462 = vpop.f32.mrf.mxu0
      %v3463 = vadd.f32 0.0, %v3462
      %v3464 = vpop.f32.mrf.mxu0
      %v3465 = vadd.f32 0.0, %v3464
      %3466 = vmatmul.bf16.gmra.mxu0 %v3383
      %v3467 = vpop.f32.mrf.mxu0
      %v3468 = vadd.f32 0.0, %v3467
      %v3469 = vpop.f32.mrf.mxu0
      %v3470 = vadd.f32 0.0, %v3469
      %3471 = vmatmul.bf16.gmra.mxu0 %v3386
      %v3472 = vpop.f32.mrf.mxu0
      %v3473 = vadd.f32 0.0, %v3472
      %v3474 = vpop.f32.mrf.mxu0
      %v3475 = vadd.f32 0.0, %v3474
      %3476 = vdwg.mxu0
      %v3477 = vadd.f32 %v3251, %v3398
      %v3478 = vadd.f32 %v3252, %v3400
      %v3479 = vadd.f32 %v3253, %v3403
      %v3480 = vadd.f32 %v3254, %v3405
      %v3481 = vadd.f32 %v3255, %v3408
      %v3482 = vadd.f32 %v3256, %v3410
      %v3483 = vadd.f32 %v3257, %v3413
      %v3484 = vadd.f32 %v3258, %v3415
      %v3485 = vadd.f32 %v3259, %v3418
      %v3486 = vadd.f32 %v3260, %v3420
      %v3487 = vadd.f32 %v3261, %v3423
      %v3488 = vadd.f32 %v3262, %v3425
      %v3489 = vadd.f32 %v3263, %v3428
      %v3490 = vadd.f32 %v3264, %v3430
      %v3491 = vadd.f32 %v3265, %v3433
      %v3492 = vadd.f32 %v3266, %v3435
      %v3493 = vadd.f32 %v3267, %v3438
      %v3494 = vadd.f32 %v3268, %v3440
      %v3495 = vadd.f32 %v3269, %v3443
      %v3496 = vadd.f32 %v3270, %v3445
      %v3497 = vadd.f32 %v3271, %v3448
      %v3498 = vadd.f32 %v3272, %v3450
      %v3499 = vadd.f32 %v3273, %v3453
      %v3500 = vadd.f32 %v3274, %v3455
      %v3501 = vadd.f32 %v3275, %v3458
      %v3502 = vadd.f32 %v3276, %v3460
      %v3503 = vadd.f32 %v3277, %v3463
      %v3504 = vadd.f32 %v3278, %v3465
      %v3505 = vadd.f32 %v3279, %v3468
      %v3506 = vadd.f32 %v3280, %v3470
      %v3507 = vadd.f32 %v3281, %v3473
      %v3508 = vadd.f32 %v3282, %v3475
      %v3509 = vld [vmem:[%s2411 + $0x2] sm:$0xff]
      %v3510 = vld [vmem:[%s2411 + $0xa] sm:$0xff]
      %v3511 = vld [vmem:[%s2411 + $0x1a] sm:$0xff]
      %v3512 = vld [vmem:[%s2411 + $0x22] sm:$0xff]
      %v3513 = vld [vmem:[%s2411 + $0x32] sm:$0xff]
      %v3514 = vld [vmem:[%s2411 + $0x3a] sm:$0xff]
      %v3515 = vld [vmem:[%s2411 + $0x4a] sm:$0xff]
      %v3516 = vld [vmem:[%s2411 + $0x52] sm:$0xff]
      %v3517 = vld [vmem:[%s2411 + $0x62] sm:$0xff]
      %v3518 = vld [vmem:[%s2411 + $0x6a] sm:$0xff]
      %v3519 = vld [vmem:[%s2411 + $0x7a] sm:$0xff]
      %v3520 = vld [vmem:[%s2411 + $0x82] sm:$0xff]
      %v3521 = vld [vmem:[%s2411 + $0x92] sm:$0xff]
      %v3522 = vld [vmem:[%s2411 + $0x9a] sm:$0xff]
      %v3523 = vld [vmem:[%s2411 + $0xaa] sm:$0xff]
      %v3524 = vld [vmem:[%s2411 + $0xb2] sm:$0xff]
      %v3525 = vld [vmem:[%s2411 + $0xc2] sm:$0xff]
      %v3526 = vld [vmem:[%s2411 + $0xca] sm:$0xff]
      %v3527 = vld [vmem:[%s2411 + $0xda] sm:$0xff]
      %v3528 = vld [vmem:[%s2411 + $0xe2] sm:$0xff]
      %v3529 = vld [vmem:[%s2411 + $0xf2] sm:$0xff]
      %v3530 = vld [vmem:[%s2411 + $0xfa] sm:$0xff]
      %v3531 = vld [vmem:[%s2411 + $0x10a] sm:$0xff]
      %v3532 = vld [vmem:[%s2411 + $0x112] sm:$0xff]
      %v3533 = vld [vmem:[%s2411 + $0x122] sm:$0xff]
      %v3534 = vld [vmem:[%s2411 + $0x12a] sm:$0xff]
      %v3535 = vld [vmem:[%s2411 + $0x13a] sm:$0xff]
      %v3536 = vld [vmem:[%s2411 + $0x142] sm:$0xff]
      %v3537 = vld [vmem:[%s2411 + $0x152] sm:$0xff]
      %v3538 = vld [vmem:[%s2411 + $0x15a] sm:$0xff]
      %v3539 = vld [vmem:[%s2411 + $0x16a] sm:$0xff]
      %v3540 = vld [vmem:[%s2411 + $0x172] sm:$0xff]
      %v3541 = vpack.c.bf16 %v3510, %v3509
      %v3542 = vpack.c.bf16 %v3512, %v3511
      %v3543 = vpack.c.bf16 %v3514, %v3513
      %v3544 = vpack.c.bf16 %v3516, %v3515
      %v3545 = vpack.c.bf16 %v3518, %v3517
      %v3546 = vpack.c.bf16 %v3520, %v3519
      %v3547 = vpack.c.bf16 %v3522, %v3521
      %v3548 = vpack.c.bf16 %v3524, %v3523
      %v3549 = vpack.c.bf16 %v3526, %v3525
      %v3550 = vpack.c.bf16 %v3528, %v3527
      %v3551 = vpack.c.bf16 %v3530, %v3529
      %v3552 = vpack.c.bf16 %v3532, %v3531
      %v3553 = vpack.c.bf16 %v3534, %v3533
      %v3554 = vpack.c.bf16 %v3536, %v3535
      %v3555 = vpack.c.bf16 %v3538, %v3537
      %v3556 = vpack.c.bf16 %v3540, %v3539
      %s3557 = scalar_lea.vmem %s4, 40
      %v3558 = vld [vmem:[%s3557] sm:$0xf]
      %v3559 = vld [vmem:[%s3557 + $0x4] sm:$0xf]
      %v3562 = vunpack.c.l.b16 %v3558
      %v3563 = vunpack.c.l.b16 %v3559
      %v3564 = vpack.c.b16 %v3563, %v3562
      %v3567 = vsel %vm387, %v3541, 0
      %v3570 = vsel %vm387, %v3542, 0
      %v3573 = vsel %vm387, %v3543, 0
      %v3576 = vsel %vm387, %v3544, 0
      %v3579 = vsel %vm387, %v3545, 0
      %v3582 = vsel %vm387, %v3546, 0
      %v3585 = vsel %vm387, %v3547, 0
      %v3588 = vsel %vm387, %v3548, 0
      %v3591 = vsel %vm387, %v3549, 0
      %v3594 = vsel %vm387, %v3550, 0
      %v3597 = vsel %vm387, %v3551, 0
      %v3600 = vsel %vm387, %v3552, 0
      %v3603 = vsel %vm387, %v3553, 0
      %v3606 = vsel %vm387, %v3554, 0
      %v3609 = vsel %vm387, %v3555, 0
      %v3612 = vsel %vm387, %v3556, 0
      %3614 = vmatpush.bf16.msra.mxu0 0
      %3615 = vmatpush.bf16.msra.mxu0 0
      %3616 = vmatpush.bf16.msra.mxu0 0
      %3617 = vmatpush.bf16.msra.mxu0 0
      %3618 = vmatpush.bf16.msra.mxu0 0
      %3619 = vmatpush.bf16.msra.mxu0 0
      %3620 = vmatpush.bf16.msra.mxu0 0
      %3621 = vmatpush.bf16.msra.mxu0 %v3564
      %3622 = vmatmul.bf16.gmra.mxu0 %v3567
      %v3623 = vpop.f32.mrf.mxu0
      %v3624 = vadd.f32 0.0, %v3623
      %v3625 = vpop.f32.mrf.mxu0
      %v3626 = vadd.f32 0.0, %v3625
      %3627 = vmatmul.bf16.gmra.mxu0 %v3570
      %v3628 = vpop.f32.mrf.mxu0
      %v3629 = vadd.f32 0.0, %v3628
      %v3630 = vpop.f32.mrf.mxu0
      %v3631 = vadd.f32 0.0, %v3630
      %3632 = vmatmul.bf16.gmra.mxu0 %v3573
      %v3633 = vpop.f32.mrf.mxu0
      %v3634 = vadd.f32 0.0, %v3633
      %v3635 = vpop.f32.mrf.mxu0
      %v3636 = vadd.f32 0.0, %v3635
      %3637 = vmatmul.bf16.gmra.mxu0 %v3576
      %v3638 = vpop.f32.mrf.mxu0
      %v3639 = vadd.f32 0.0, %v3638
      %v3640 = vpop.f32.mrf.mxu0
      %v3641 = vadd.f32 0.0, %v3640
      %3642 = vmatmul.bf16.gmra.mxu0 %v3579
      %v3643 = vpop.f32.mrf.mxu0
      %v3644 = vadd.f32 0.0, %v3643
      %v3645 = vpop.f32.mrf.mxu0
      %v3646 = vadd.f32 0.0, %v3645
      %3647 = vmatmul.bf16.gmra.mxu0 %v3582
      %v3648 = vpop.f32.mrf.mxu0
      %v3649 = vadd.f32 0.0, %v3648
      %v3650 = vpop.f32.mrf.mxu0
      %v3651 = vadd.f32 0.0, %v3650
      %3652 = vmatmul.bf16.gmra.mxu0 %v3585
      %v3653 = vpop.f32.mrf.mxu0
      %v3654 = vadd.f32 0.0, %v3653
      %v3655 = vpop.f32.mrf.mxu0
      %v3656 = vadd.f32 0.0, %v3655
      %3657 = vmatmul.bf16.gmra.mxu0 %v3588
      %v3658 = vpop.f32.mrf.mxu0
      %v3659 = vadd.f32 0.0, %v3658
      %v3660 = vpop.f32.mrf.mxu0
      %v3661 = vadd.f32 0.0, %v3660
      %3662 = vmatmul.bf16.gmra.mxu0 %v3591
      %v3663 = vpop.f32.mrf.mxu0
      %v3664 = vadd.f32 0.0, %v3663
      %v3665 = vpop.f32.mrf.mxu0
      %v3666 = vadd.f32 0.0, %v3665
      %3667 = vmatmul.bf16.gmra.mxu0 %v3594
      %v3668 = vpop.f32.mrf.mxu0
      %v3669 = vadd.f32 0.0, %v3668
      %v3670 = vpop.f32.mrf.mxu0
      %v3671 = vadd.f32 0.0, %v3670
      %3672 = vmatmul.bf16.gmra.mxu0 %v3597
      %v3673 = vpop.f32.mrf.mxu0
      %v3674 = vadd.f32 0.0, %v3673
      %v3675 = vpop.f32.mrf.mxu0
      %v3676 = vadd.f32 0.0, %v3675
      %3677 = vmatmul.bf16.gmra.mxu0 %v3600
      %v3678 = vpop.f32.mrf.mxu0
      %v3679 = vadd.f32 0.0, %v3678
      %v3680 = vpop.f32.mrf.mxu0
      %v3681 = vadd.f32 0.0, %v3680
      %3682 = vmatmul.bf16.gmra.mxu0 %v3603
      %v3683 = vpop.f32.mrf.mxu0
      %v3684 = vadd.f32 0.0, %v3683
      %v3685 = vpop.f32.mrf.mxu0
      %v3686 = vadd.f32 0.0, %v3685
      %3687 = vmatmul.bf16.gmra.mxu0 %v3606
      %v3688 = vpop.f32.mrf.mxu0
      %v3689 = vadd.f32 0.0, %v3688
      %v3690 = vpop.f32.mrf.mxu0
      %v3691 = vadd.f32 0.0, %v3690
      %3692 = vmatmul.bf16.gmra.mxu0 %v3609
      %v3693 = vpop.f32.mrf.mxu0
      %v3694 = vadd.f32 0.0, %v3693
      %v3695 = vpop.f32.mrf.mxu0
      %v3696 = vadd.f32 0.0, %v3695
      %3697 = vmatmul.bf16.gmra.mxu0 %v3612
      %v3698 = vpop.f32.mrf.mxu0
      %v3699 = vadd.f32 0.0, %v3698
      %v3700 = vpop.f32.mrf.mxu0
      %v3701 = vadd.f32 0.0, %v3700
      %3702 = vdwg.mxu0
      %v3703 = vadd.f32 %v3477, %v3624
      %v3704 = vadd.f32 %v3478, %v3626
      %v3705 = vadd.f32 %v3479, %v3629
      %v3706 = vadd.f32 %v3480, %v3631
      %v3707 = vadd.f32 %v3481, %v3634
      %v3708 = vadd.f32 %v3482, %v3636
      %v3709 = vadd.f32 %v3483, %v3639
      %v3710 = vadd.f32 %v3484, %v3641
      %v3711 = vadd.f32 %v3485, %v3644
      %v3712 = vadd.f32 %v3486, %v3646
      %v3713 = vadd.f32 %v3487, %v3649
      %v3714 = vadd.f32 %v3488, %v3651
      %v3715 = vadd.f32 %v3489, %v3654
      %v3716 = vadd.f32 %v3490, %v3656
      %v3717 = vadd.f32 %v3491, %v3659
      %v3718 = vadd.f32 %v3492, %v3661
      %v3719 = vadd.f32 %v3493, %v3664
      %v3720 = vadd.f32 %v3494, %v3666
      %v3721 = vadd.f32 %v3495, %v3669
      %v3722 = vadd.f32 %v3496, %v3671
      %v3723 = vadd.f32 %v3497, %v3674
      %v3724 = vadd.f32 %v3498, %v3676
      %v3725 = vadd.f32 %v3499, %v3679
      %v3726 = vadd.f32 %v3500, %v3681
      %v3727 = vadd.f32 %v3501, %v3684
      %v3728 = vadd.f32 %v3502, %v3686
      %v3729 = vadd.f32 %v3503, %v3689
      %v3730 = vadd.f32 %v3504, %v3691
      %v3731 = vadd.f32 %v3505, %v3694
      %v3732 = vadd.f32 %v3506, %v3696
      %v3733 = vadd.f32 %v3507, %v3699
      %v3734 = vadd.f32 %v3508, %v3701
      %s3735 = scalar_lea.vmem [#allocation2], 48
      %v3736 = vld [vmem:[%s3735] sm:$0xff]
      %v3737 = vld [vmem:[%s3735 + $0x8] sm:$0xff]
      %v3738 = vld [vmem:[%s3735 + $0x18] sm:$0xff]
      %v3739 = vld [vmem:[%s3735 + $0x20] sm:$0xff]
      %v3740 = vld [vmem:[%s3735 + $0x30] sm:$0xff]
      %v3741 = vld [vmem:[%s3735 + $0x38] sm:$0xff]
      %v3742 = vld [vmem:[%s3735 + $0x48] sm:$0xff]
      %v3743 = vld [vmem:[%s3735 + $0x50] sm:$0xff]
      %v3744 = vld [vmem:[%s3735 + $0x60] sm:$0xff]
      %v3745 = vld [vmem:[%s3735 + $0x68] sm:$0xff]
      %v3746 = vld [vmem:[%s3735 + $0x78] sm:$0xff]
      %v3747 = vld [vmem:[%s3735 + $0x80] sm:$0xff]
      %v3748 = vld [vmem:[%s3735 + $0x90] sm:$0xff]
      %v3749 = vld [vmem:[%s3735 + $0x98] sm:$0xff]
      %v3750 = vld [vmem:[%s3735 + $0xa8] sm:$0xff]
      %v3751 = vld [vmem:[%s3735 + $0xb0] sm:$0xff]
      %v3752 = vld [vmem:[%s3735 + $0xc0] sm:$0xff]
      %v3753 = vld [vmem:[%s3735 + $0xc8] sm:$0xff]
      %v3754 = vld [vmem:[%s3735 + $0xd8] sm:$0xff]
      %v3755 = vld [vmem:[%s3735 + $0xe0] sm:$0xff]
      %v3756 = vld [vmem:[%s3735 + $0xf0] sm:$0xff]
      %v3757 = vld [vmem:[%s3735 + $0xf8] sm:$0xff]
      %v3758 = vld [vmem:[%s3735 + $0x108] sm:$0xff]
      %v3759 = vld [vmem:[%s3735 + $0x110] sm:$0xff]
      %v3760 = vld [vmem:[%s3735 + $0x120] sm:$0xff]
      %v3761 = vld [vmem:[%s3735 + $0x128] sm:$0xff]
      %v3762 = vld [vmem:[%s3735 + $0x138] sm:$0xff]
      %v3763 = vld [vmem:[%s3735 + $0x140] sm:$0xff]
      %v3764 = vld [vmem:[%s3735 + $0x150] sm:$0xff]
      %v3765 = vld [vmem:[%s3735 + $0x158] sm:$0xff]
      %v3766 = vld [vmem:[%s3735 + $0x168] sm:$0xff]
      %v3767 = vld [vmem:[%s3735 + $0x170] sm:$0xff]
      %v3768 = vpack.c.bf16 %v3737, %v3736
      %v3769 = vpack.c.bf16 %v3739, %v3738
      %v3770 = vpack.c.bf16 %v3741, %v3740
      %v3771 = vpack.c.bf16 %v3743, %v3742
      %v3772 = vpack.c.bf16 %v3745, %v3744
      %v3773 = vpack.c.bf16 %v3747, %v3746
      %v3774 = vpack.c.bf16 %v3749, %v3748
      %v3775 = vpack.c.bf16 %v3751, %v3750
      %v3776 = vpack.c.bf16 %v3753, %v3752
      %v3777 = vpack.c.bf16 %v3755, %v3754
      %v3778 = vpack.c.bf16 %v3757, %v3756
      %v3779 = vpack.c.bf16 %v3759, %v3758
      %v3780 = vpack.c.bf16 %v3761, %v3760
      %v3781 = vpack.c.bf16 %v3763, %v3762
      %v3782 = vpack.c.bf16 %v3765, %v3764
      %v3783 = vpack.c.bf16 %v3767, %v3766
      %s3784 = scalar_lea.vmem %s4, 48
      %v3785 = vld [vmem:[%s3784] sm:$0xf]
      %v3786 = vld [vmem:[%s3784 + $0x4] sm:$0xf]
      %v3789 = vunpack.c.l.b16 %v3785
      %v3790 = vunpack.c.l.b16 %v3786
      %v3791 = vpack.c.b16 %v3790, %v3789
      %v3794 = vsel %vm387, %v3768, 0
      %v3797 = vsel %vm387, %v3769, 0
      %v3800 = vsel %vm387, %v3770, 0
      %v3803 = vsel %vm387, %v3771, 0
      %v3806 = vsel %vm387, %v3772, 0
      %v3809 = vsel %vm387, %v3773, 0
      %v3812 = vsel %vm387, %v3774, 0
      %v3815 = vsel %vm387, %v3775, 0
      %v3818 = vsel %vm387, %v3776, 0
      %v3821 = vsel %vm387, %v3777, 0
      %v3824 = vsel %vm387, %v3778, 0
      %v3827 = vsel %vm387, %v3779, 0
      %v3830 = vsel %vm387, %v3780, 0
      %v3833 = vsel %vm387, %v3781, 0
      %v3836 = vsel %vm387, %v3782, 0
      %v3839 = vsel %vm387, %v3783, 0
      %3841 = vmatpush.bf16.msra.mxu0 0
      %3842 = vmatpush.bf16.msra.mxu0 0
      %3843 = vmatpush.bf16.msra.mxu0 0
      %3844 = vmatpush.bf16.msra.mxu0 0
      %3845 = vmatpush.bf16.msra.mxu0 0
      %3846 = vmatpush.bf16.msra.mxu0 0
      %3847 = vmatpush.bf16.msra.mxu0 0
      %3848 = vmatpush.bf16.msra.mxu0 %v3791
      %3849 = vmatmul.bf16.gmra.mxu0 %v3794
      %v3850 = vpop.f32.mrf.mxu0
      %v3851 = vadd.f32 0.0, %v3850
      %v3852 = vpop.f32.mrf.mxu0
      %v3853 = vadd.f32 0.0, %v3852
      %3854 = vmatmul.bf16.gmra.mxu0 %v3797
      %v3855 = vpop.f32.mrf.mxu0
      %v3856 = vadd.f32 0.0, %v3855
      %v3857 = vpop.f32.mrf.mxu0
      %v3858 = vadd.f32 0.0, %v3857
      %3859 = vmatmul.bf16.gmra.mxu0 %v3800
      %v3860 = vpop.f32.mrf.mxu0
      %v3861 = vadd.f32 0.0, %v3860
      %v3862 = vpop.f32.mrf.mxu0
      %v3863 = vadd.f32 0.0, %v3862
      %3864 = vmatmul.bf16.gmra.mxu0 %v3803
      %v3865 = vpop.f32.mrf.mxu0
      %v3866 = vadd.f32 0.0, %v3865
      %v3867 = vpop.f32.mrf.mxu0
      %v3868 = vadd.f32 0.0, %v3867
      %3869 = vmatmul.bf16.gmra.mxu0 %v3806
      %v3870 = vpop.f32.mrf.mxu0
      %v3871 = vadd.f32 0.0, %v3870
      %v3872 = vpop.f32.mrf.mxu0
      %v3873 = vadd.f32 0.0, %v3872
      %3874 = vmatmul.bf16.gmra.mxu0 %v3809
      %v3875 = vpop.f32.mrf.mxu0
      %v3876 = vadd.f32 0.0, %v3875
      %v3877 = vpop.f32.mrf.mxu0
      %v3878 = vadd.f32 0.0, %v3877
      %3879 = vmatmul.bf16.gmra.mxu0 %v3812
      %v3880 = vpop.f32.mrf.mxu0
      %v3881 = vadd.f32 0.0, %v3880
      %v3882 = vpop.f32.mrf.mxu0
      %v3883 = vadd.f32 0.0, %v3882
      %3884 = vmatmul.bf16.gmra.mxu0 %v3815
      %v3885 = vpop.f32.mrf.mxu0
      %v3886 = vadd.f32 0.0, %v3885
      %v3887 = vpop.f32.mrf.mxu0
      %v3888 = vadd.f32 0.0, %v3887
      %3889 = vmatmul.bf16.gmra.mxu0 %v3818
      %v3890 = vpop.f32.mrf.mxu0
      %v3891 = vadd.f32 0.0, %v3890
      %v3892 = vpop.f32.mrf.mxu0
      %v3893 = vadd.f32 0.0, %v3892
      %3894 = vmatmul.bf16.gmra.mxu0 %v3821
      %v3895 = vpop.f32.mrf.mxu0
      %v3896 = vadd.f32 0.0, %v3895
      %v3897 = vpop.f32.mrf.mxu0
      %v3898 = vadd.f32 0.0, %v3897
      %3899 = vmatmul.bf16.gmra.mxu0 %v3824
      %v3900 = vpop.f32.mrf.mxu0
      %v3901 = vadd.f32 0.0, %v3900
      %v3902 = vpop.f32.mrf.mxu0
      %v3903 = vadd.f32 0.0, %v3902
      %3904 = vmatmul.bf16.gmra.mxu0 %v3827
      %v3905 = vpop.f32.mrf.mxu0
      %v3906 = vadd.f32 0.0, %v3905
      %v3907 = vpop.f32.mrf.mxu0
      %v3908 = vadd.f32 0.0, %v3907
      %3909 = vmatmul.bf16.gmra.mxu0 %v3830
      %v3910 = vpop.f32.mrf.mxu0
      %v3911 = vadd.f32 0.0, %v3910
      %v3912 = vpop.f32.mrf.mxu0
      %v3913 = vadd.f32 0.0, %v3912
      %3914 = vmatmul.bf16.gmra.mxu0 %v3833
      %v3915 = vpop.f32.mrf.mxu0
      %v3916 = vadd.f32 0.0, %v3915
      %v3917 = vpop.f32.mrf.mxu0
      %v3918 = vadd.f32 0.0, %v3917
      %3919 = vmatmul.bf16.gmra.mxu0 %v3836
      %v3920 = vpop.f32.mrf.mxu0
      %v3921 = vadd.f32 0.0, %v3920
      %v3922 = vpop.f32.mrf.mxu0
      %v3923 = vadd.f32 0.0, %v3922
      %3924 = vmatmul.bf16.gmra.mxu0 %v3839
      %v3925 = vpop.f32.mrf.mxu0
      %v3926 = vadd.f32 0.0, %v3925
      %v3927 = vpop.f32.mrf.mxu0
      %v3928 = vadd.f32 0.0, %v3927
      %3929 = vdwg.mxu0
      %v3930 = vadd.f32 %v3703, %v3851
      %v3931 = vadd.f32 %v3704, %v3853
      %v3932 = vadd.f32 %v3705, %v3856
      %v3933 = vadd.f32 %v3706, %v3858
      %v3934 = vadd.f32 %v3707, %v3861
      %v3935 = vadd.f32 %v3708, %v3863
      %v3936 = vadd.f32 %v3709, %v3866
      %v3937 = vadd.f32 %v3710, %v3868
      %v3938 = vadd.f32 %v3711, %v3871
      %v3939 = vadd.f32 %v3712, %v3873
      %v3940 = vadd.f32 %v3713, %v3876
      %v3941 = vadd.f32 %v3714, %v3878
      %v3942 = vadd.f32 %v3715, %v3881
      %v3943 = vadd.f32 %v3716, %v3883
      %v3944 = vadd.f32 %v3717, %v3886
      %v3945 = vadd.f32 %v3718, %v3888
      %v3946 = vadd.f32 %v3719, %v3891
      %v3947 = vadd.f32 %v3720, %v3893
      %v3948 = vadd.f32 %v3721, %v3896
      %v3949 = vadd.f32 %v3722, %v3898
      %v3950 = vadd.f32 %v3723, %v3901
      %v3951 = vadd.f32 %v3724, %v3903
      %v3952 = vadd.f32 %v3725, %v3906
      %v3953 = vadd.f32 %v3726, %v3908
      %v3954 = vadd.f32 %v3727, %v3911
      %v3955 = vadd.f32 %v3728, %v3913
      %v3956 = vadd.f32 %v3729, %v3916
      %v3957 = vadd.f32 %v3730, %v3918
      %v3958 = vadd.f32 %v3731, %v3921
      %v3959 = vadd.f32 %v3732, %v3923
      %v3960 = vadd.f32 %v3733, %v3926
      %v3961 = vadd.f32 %v3734, %v3928
      %v3962 = vld [vmem:[%s3735 + $0x1] sm:$0xff]
      %v3963 = vld [vmem:[%s3735 + $0x9] sm:$0xff]
      %v3964 = vld [vmem:[%s3735 + $0x19] sm:$0xff]
      %v3965 = vld [vmem:[%s3735 + $0x21] sm:$0xff]
      %v3966 = vld [vmem:[%s3735 + $0x31] sm:$0xff]
      %v3967 = vld [vmem:[%s3735 + $0x39] sm:$0xff]
      %v3968 = vld [vmem:[%s3735 + $0x49] sm:$0xff]
      %v3969 = vld [vmem:[%s3735 + $0x51] sm:$0xff]
      %v3970 = vld [vmem:[%s3735 + $0x61] sm:$0xff]
      %v3971 = vld [vmem:[%s3735 + $0x69] sm:$0xff]
      %v3972 = vld [vmem:[%s3735 + $0x79] sm:$0xff]
      %v3973 = vld [vmem:[%s3735 + $0x81] sm:$0xff]
      %v3974 = vld [vmem:[%s3735 + $0x91] sm:$0xff]
      %v3975 = vld [vmem:[%s3735 + $0x99] sm:$0xff]
      %v3976 = vld [vmem:[%s3735 + $0xa9] sm:$0xff]
      %v3977 = vld [vmem:[%s3735 + $0xb1] sm:$0xff]
      %v3978 = vld [vmem:[%s3735 + $0xc1] sm:$0xff]
      %v3979 = vld [vmem:[%s3735 + $0xc9] sm:$0xff]
      %v3980 = vld [vmem:[%s3735 + $0xd9] sm:$0xff]
      %v3981 = vld [vmem:[%s3735 + $0xe1] sm:$0xff]
      %v3982 = vld [vmem:[%s3735 + $0xf1] sm:$0xff]
      %v3983 = vld [vmem:[%s3735 + $0xf9] sm:$0xff]
      %v3984 = vld [vmem:[%s3735 + $0x109] sm:$0xff]
      %v3985 = vld [vmem:[%s3735 + $0x111] sm:$0xff]
      %v3986 = vld [vmem:[%s3735 + $0x121] sm:$0xff]
      %v3987 = vld [vmem:[%s3735 + $0x129] sm:$0xff]
      %v3988 = vld [vmem:[%s3735 + $0x139] sm:$0xff]
      %v3989 = vld [vmem:[%s3735 + $0x141] sm:$0xff]
      %v3990 = vld [vmem:[%s3735 + $0x151] sm:$0xff]
      %v3991 = vld [vmem:[%s3735 + $0x159] sm:$0xff]
      %v3992 = vld [vmem:[%s3735 + $0x169] sm:$0xff]
      %v3993 = vld [vmem:[%s3735 + $0x171] sm:$0xff]
      %v3994 = vpack.c.bf16 %v3963, %v3962
      %v3995 = vpack.c.bf16 %v3965, %v3964
      %v3996 = vpack.c.bf16 %v3967, %v3966
      %v3997 = vpack.c.bf16 %v3969, %v3968
      %v3998 = vpack.c.bf16 %v3971, %v3970
      %v3999 = vpack.c.bf16 %v3973, %v3972
      %v4000 = vpack.c.bf16 %v3975, %v3974
      %v4001 = vpack.c.bf16 %v3977, %v3976
      %v4002 = vpack.c.bf16 %v3979, %v3978
      %v4003 = vpack.c.bf16 %v3981, %v3980
      %v4004 = vpack.c.bf16 %v3983, %v3982
      %v4005 = vpack.c.bf16 %v3985, %v3984
      %v4006 = vpack.c.bf16 %v3987, %v3986
      %v4007 = vpack.c.bf16 %v3989, %v3988
      %v4008 = vpack.c.bf16 %v3991, %v3990
      %v4009 = vpack.c.bf16 %v3993, %v3992
      %s4010 = scalar_lea.vmem %s4, 56
      %v4011 = vld [vmem:[%s4010] sm:$0xf]
      %v4012 = vld [vmem:[%s4010 + $0x4] sm:$0xf]
      %v4015 = vunpack.c.l.b16 %v4011
      %v4016 = vunpack.c.l.b16 %v4012
      %v4017 = vpack.c.b16 %v4016, %v4015
      %v4020 = vsel %vm387, %v3994, 0
      %v4023 = vsel %vm387, %v3995, 0
      %v4026 = vsel %vm387, %v3996, 0
      %v4029 = vsel %vm387, %v3997, 0
      %v4032 = vsel %vm387, %v3998, 0
      %v4035 = vsel %vm387, %v3999, 0
      %v4038 = vsel %vm387, %v4000, 0
      %v4041 = vsel %vm387, %v4001, 0
      %v4044 = vsel %vm387, %v4002, 0
      %v4047 = vsel %vm387, %v4003, 0
      %v4050 = vsel %vm387, %v4004, 0
      %v4053 = vsel %vm387, %v4005, 0
      %v4056 = vsel %vm387, %v4006, 0
      %v4059 = vsel %vm387, %v4007, 0
      %v4062 = vsel %vm387, %v4008, 0
      %v4065 = vsel %vm387, %v4009, 0
      %4067 = vmatpush.bf16.msra.mxu0 0
      %4068 = vmatpush.bf16.msra.mxu0 0
      %4069 = vmatpush.bf16.msra.mxu0 0
      %4070 = vmatpush.bf16.msra.mxu0 0
      %4071 = vmatpush.bf16.msra.mxu0 0
      %4072 = vmatpush.bf16.msra.mxu0 0
      %4073 = vmatpush.bf16.msra.mxu0 0
      %4074 = vmatpush.bf16.msra.mxu0 %v4017
      %4075 = vmatmul.bf16.gmra.mxu0 %v4020
      %v4076 = vpop.f32.mrf.mxu0
      %v4077 = vadd.f32 0.0, %v4076
      %v4078 = vpop.f32.mrf.mxu0
      %v4079 = vadd.f32 0.0, %v4078
      %4080 = vmatmul.bf16.gmra.mxu0 %v4023
      %v4081 = vpop.f32.mrf.mxu0
      %v4082 = vadd.f32 0.0, %v4081
      %v4083 = vpop.f32.mrf.mxu0
      %v4084 = vadd.f32 0.0, %v4083
      %4085 = vmatmul.bf16.gmra.mxu0 %v4026
      %v4086 = vpop.f32.mrf.mxu0
      %v4087 = vadd.f32 0.0, %v4086
      %v4088 = vpop.f32.mrf.mxu0
      %v4089 = vadd.f32 0.0, %v4088
      %4090 = vmatmul.bf16.gmra.mxu0 %v4029
      %v4091 = vpop.f32.mrf.mxu0
      %v4092 = vadd.f32 0.0, %v4091
      %v4093 = vpop.f32.mrf.mxu0
      %v4094 = vadd.f32 0.0, %v4093
      %4095 = vmatmul.bf16.gmra.mxu0 %v4032
      %v4096 = vpop.f32.mrf.mxu0
      %v4097 = vadd.f32 0.0, %v4096
      %v4098 = vpop.f32.mrf.mxu0
      %v4099 = vadd.f32 0.0, %v4098
      %4100 = vmatmul.bf16.gmra.mxu0 %v4035
      %v4101 = vpop.f32.mrf.mxu0
      %v4102 = vadd.f32 0.0, %v4101
      %v4103 = vpop.f32.mrf.mxu0
      %v4104 = vadd.f32 0.0, %v4103
      %4105 = vmatmul.bf16.gmra.mxu0 %v4038
      %v4106 = vpop.f32.mrf.mxu0
      %v4107 = vadd.f32 0.0, %v4106
      %v4108 = vpop.f32.mrf.mxu0
      %v4109 = vadd.f32 0.0, %v4108
      %4110 = vmatmul.bf16.gmra.mxu0 %v4041
      %v4111 = vpop.f32.mrf.mxu0
      %v4112 = vadd.f32 0.0, %v4111
      %v4113 = vpop.f32.mrf.mxu0
      %v4114 = vadd.f32 0.0, %v4113
      %4115 = vmatmul.bf16.gmra.mxu0 %v4044
      %v4116 = vpop.f32.mrf.mxu0
      %v4117 = vadd.f32 0.0, %v4116
      %v4118 = vpop.f32.mrf.mxu0
      %v4119 = vadd.f32 0.0, %v4118
      %4120 = vmatmul.bf16.gmra.mxu0 %v4047
      %v4121 = vpop.f32.mrf.mxu0
      %v4122 = vadd.f32 0.0, %v4121
      %v4123 = vpop.f32.mrf.mxu0
      %v4124 = vadd.f32 0.0, %v4123
      %4125 = vmatmul.bf16.gmra.mxu0 %v4050
      %v4126 = vpop.f32.mrf.mxu0
      %v4127 = vadd.f32 0.0, %v4126
      %v4128 = vpop.f32.mrf.mxu0
      %v4129 = vadd.f32 0.0, %v4128
      %4130 = vmatmul.bf16.gmra.mxu0 %v4053
      %v4131 = vpop.f32.mrf.mxu0
      %v4132 = vadd.f32 0.0, %v4131
      %v4133 = vpop.f32.mrf.mxu0
      %v4134 = vadd.f32 0.0, %v4133
      %4135 = vmatmul.bf16.gmra.mxu0 %v4056
      %v4136 = vpop.f32.mrf.mxu0
      %v4137 = vadd.f32 0.0, %v4136
      %v4138 = vpop.f32.mrf.mxu0
      %v4139 = vadd.f32 0.0, %v4138
      %4140 = vmatmul.bf16.gmra.mxu0 %v4059
      %v4141 = vpop.f32.mrf.mxu0
      %v4142 = vadd.f32 0.0, %v4141
      %v4143 = vpop.f32.mrf.mxu0
      %v4144 = vadd.f32 0.0, %v4143
      %4145 = vmatmul.bf16.gmra.mxu0 %v4062
      %v4146 = vpop.f32.mrf.mxu0
      %v4147 = vadd.f32 0.0, %v4146
      %v4148 = vpop.f32.mrf.mxu0
      %v4149 = vadd.f32 0.0, %v4148
      %4150 = vmatmul.bf16.gmra.mxu0 %v4065
      %v4151 = vpop.f32.mrf.mxu0
      %v4152 = vadd.f32 0.0, %v4151
      %v4153 = vpop.f32.mrf.mxu0
      %v4154 = vadd.f32 0.0, %v4153
      %4155 = vdwg.mxu0
      %v4156 = vadd.f32 %v3930, %v4077
      %v4157 = vadd.f32 %v3931, %v4079
      %v4158 = vadd.f32 %v3932, %v4082
      %v4159 = vadd.f32 %v3933, %v4084
      %v4160 = vadd.f32 %v3934, %v4087
      %v4161 = vadd.f32 %v3935, %v4089
      %v4162 = vadd.f32 %v3936, %v4092
      %v4163 = vadd.f32 %v3937, %v4094
      %v4164 = vadd.f32 %v3938, %v4097
      %v4165 = vadd.f32 %v3939, %v4099
      %v4166 = vadd.f32 %v3940, %v4102
      %v4167 = vadd.f32 %v3941, %v4104
      %v4168 = vadd.f32 %v3942, %v4107
      %v4169 = vadd.f32 %v3943, %v4109
      %v4170 = vadd.f32 %v3944, %v4112
      %v4171 = vadd.f32 %v3945, %v4114
      %v4172 = vadd.f32 %v3946, %v4117
      %v4173 = vadd.f32 %v3947, %v4119
      %v4174 = vadd.f32 %v3948, %v4122
      %v4175 = vadd.f32 %v3949, %v4124
      %v4176 = vadd.f32 %v3950, %v4127
      %v4177 = vadd.f32 %v3951, %v4129
      %v4178 = vadd.f32 %v3952, %v4132
      %v4179 = vadd.f32 %v3953, %v4134
      %v4180 = vadd.f32 %v3954, %v4137
      %v4181 = vadd.f32 %v3955, %v4139
      %v4182 = vadd.f32 %v3956, %v4142
      %v4183 = vadd.f32 %v3957, %v4144
      %v4184 = vadd.f32 %v3958, %v4147
      %v4185 = vadd.f32 %v3959, %v4149
      %v4186 = vadd.f32 %v3960, %v4152
      %v4187 = vadd.f32 %v3961, %v4154
      %v4188 = vld [vmem:[%s3735 + $0x2] sm:$0xff]
      %v4189 = vld [vmem:[%s3735 + $0xa] sm:$0xff]
      %v4190 = vld [vmem:[%s3735 + $0x1a] sm:$0xff]
      %v4191 = vld [vmem:[%s3735 + $0x22] sm:$0xff]
      %v4192 = vld [vmem:[%s3735 + $0x32] sm:$0xff]
      %v4193 = vld [vmem:[%s3735 + $0x3a] sm:$0xff]
      %v4194 = vld [vmem:[%s3735 + $0x4a] sm:$0xff]
      %v4195 = vld [vmem:[%s3735 + $0x52] sm:$0xff]
      %v4196 = vld [vmem:[%s3735 + $0x62] sm:$0xff]
      %v4197 = vld [vmem:[%s3735 + $0x6a] sm:$0xff]
      %v4198 = vld [vmem:[%s3735 + $0x7a] sm:$0xff]
      %v4199 = vld [vmem:[%s3735 + $0x82] sm:$0xff]
      %v4200 = vld [vmem:[%s3735 + $0x92] sm:$0xff]
      %v4201 = vld [vmem:[%s3735 + $0x9a] sm:$0xff]
      %v4202 = vld [vmem:[%s3735 + $0xaa] sm:$0xff]
      %v4203 = vld [vmem:[%s3735 + $0xb2] sm:$0xff]
      %v4204 = vld [vmem:[%s3735 + $0xc2] sm:$0xff]
      %v4205 = vld [vmem:[%s3735 + $0xca] sm:$0xff]
      %v4206 = vld [vmem:[%s3735 + $0xda] sm:$0xff]
      %v4207 = vld [vmem:[%s3735 + $0xe2] sm:$0xff]
      %v4208 = vld [vmem:[%s3735 + $0xf2] sm:$0xff]
      %v4209 = vld [vmem:[%s3735 + $0xfa] sm:$0xff]
      %v4210 = vld [vmem:[%s3735 + $0x10a] sm:$0xff]
      %v4211 = vld [vmem:[%s3735 + $0x112] sm:$0xff]
      %v4212 = vld [vmem:[%s3735 + $0x122] sm:$0xff]
      %v4213 = vld [vmem:[%s3735 + $0x12a] sm:$0xff]
      %v4214 = vld [vmem:[%s3735 + $0x13a] sm:$0xff]
      %v4215 = vld [vmem:[%s3735 + $0x142] sm:$0xff]
      %v4216 = vld [vmem:[%s3735 + $0x152] sm:$0xff]
      %v4217 = vld [vmem:[%s3735 + $0x15a] sm:$0xff]
      %v4218 = vld [vmem:[%s3735 + $0x16a] sm:$0xff]
      %v4219 = vld [vmem:[%s3735 + $0x172] sm:$0xff]
      %v4220 = vpack.c.bf16 %v4189, %v4188
      %v4221 = vpack.c.bf16 %v4191, %v4190
      %v4222 = vpack.c.bf16 %v4193, %v4192
      %v4223 = vpack.c.bf16 %v4195, %v4194
      %v4224 = vpack.c.bf16 %v4197, %v4196
      %v4225 = vpack.c.bf16 %v4199, %v4198
      %v4226 = vpack.c.bf16 %v4201, %v4200
      %v4227 = vpack.c.bf16 %v4203, %v4202
      %v4228 = vpack.c.bf16 %v4205, %v4204
      %v4229 = vpack.c.bf16 %v4207, %v4206
      %v4230 = vpack.c.bf16 %v4209, %v4208
      %v4231 = vpack.c.bf16 %v4211, %v4210
      %v4232 = vpack.c.bf16 %v4213, %v4212
      %v4233 = vpack.c.bf16 %v4215, %v4214
      %v4234 = vpack.c.bf16 %v4217, %v4216
      %v4235 = vpack.c.bf16 %v4219, %v4218
      %s4236 = scalar_lea.vmem %s4, 64
      %v4237 = vld [vmem:[%s4236] sm:$0xf]
      %v4238 = vld [vmem:[%s4236 + $0x4] sm:$0xf]
      %v4241 = vunpack.c.l.b16 %v4237
      %v4242 = vunpack.c.l.b16 %v4238
      %v4243 = vpack.c.b16 %v4242, %v4241
      %v4246 = vsel %vm387, %v4220, 0
      %v4249 = vsel %vm387, %v4221, 0
      %v4252 = vsel %vm387, %v4222, 0
      %v4255 = vsel %vm387, %v4223, 0
      %v4258 = vsel %vm387, %v4224, 0
      %v4261 = vsel %vm387, %v4225, 0
      %v4264 = vsel %vm387, %v4226, 0
      %v4267 = vsel %vm387, %v4227, 0
      %v4270 = vsel %vm387, %v4228, 0
      %v4273 = vsel %vm387, %v4229, 0
      %v4276 = vsel %vm387, %v4230, 0
      %v4279 = vsel %vm387, %v4231, 0
      %v4282 = vsel %vm387, %v4232, 0
      %v4285 = vsel %vm387, %v4233, 0
      %v4288 = vsel %vm387, %v4234, 0
      %v4291 = vsel %vm387, %v4235, 0
      %4293 = vmatpush.bf16.msra.mxu0 0
      %4294 = vmatpush.bf16.msra.mxu0 0
      %4295 = vmatpush.bf16.msra.mxu0 0
      %4296 = vmatpush.bf16.msra.mxu0 0
      %4297 = vmatpush.bf16.msra.mxu0 0
      %4298 = vmatpush.bf16.msra.mxu0 0
      %4299 = vmatpush.bf16.msra.mxu0 0
      %4300 = vmatpush.bf16.msra.mxu0 %v4243
      %4301 = vmatmul.bf16.gmra.mxu0 %v4246
      %v4302 = vpop.f32.mrf.mxu0
      %v4303 = vadd.f32 0.0, %v4302
      %v4304 = vpop.f32.mrf.mxu0
      %v4305 = vadd.f32 0.0, %v4304
      %4306 = vmatmul.bf16.gmra.mxu0 %v4249
      %v4307 = vpop.f32.mrf.mxu0
      %v4308 = vadd.f32 0.0, %v4307
      %v4309 = vpop.f32.mrf.mxu0
      %v4310 = vadd.f32 0.0, %v4309
      %4311 = vmatmul.bf16.gmra.mxu0 %v4252
      %v4312 = vpop.f32.mrf.mxu0
      %v4313 = vadd.f32 0.0, %v4312
      %v4314 = vpop.f32.mrf.mxu0
      %v4315 = vadd.f32 0.0, %v4314
      %4316 = vmatmul.bf16.gmra.mxu0 %v4255
      %v4317 = vpop.f32.mrf.mxu0
      %v4318 = vadd.f32 0.0, %v4317
      %v4319 = vpop.f32.mrf.mxu0
      %v4320 = vadd.f32 0.0, %v4319
      %4321 = vmatmul.bf16.gmra.mxu0 %v4258
      %v4322 = vpop.f32.mrf.mxu0
      %v4323 = vadd.f32 0.0, %v4322
      %v4324 = vpop.f32.mrf.mxu0
      %v4325 = vadd.f32 0.0, %v4324
      %4326 = vmatmul.bf16.gmra.mxu0 %v4261
      %v4327 = vpop.f32.mrf.mxu0
      %v4328 = vadd.f32 0.0, %v4327
      %v4329 = vpop.f32.mrf.mxu0
      %v4330 = vadd.f32 0.0, %v4329
      %4331 = vmatmul.bf16.gmra.mxu0 %v4264
      %v4332 = vpop.f32.mrf.mxu0
      %v4333 = vadd.f32 0.0, %v4332
      %v4334 = vpop.f32.mrf.mxu0
      %v4335 = vadd.f32 0.0, %v4334
      %4336 = vmatmul.bf16.gmra.mxu0 %v4267
      %v4337 = vpop.f32.mrf.mxu0
      %v4338 = vadd.f32 0.0, %v4337
      %v4339 = vpop.f32.mrf.mxu0
      %v4340 = vadd.f32 0.0, %v4339
      %4341 = vmatmul.bf16.gmra.mxu0 %v4270
      %v4342 = vpop.f32.mrf.mxu0
      %v4343 = vadd.f32 0.0, %v4342
      %v4344 = vpop.f32.mrf.mxu0
      %v4345 = vadd.f32 0.0, %v4344
      %4346 = vmatmul.bf16.gmra.mxu0 %v4273
      %v4347 = vpop.f32.mrf.mxu0
      %v4348 = vadd.f32 0.0, %v4347
      %v4349 = vpop.f32.mrf.mxu0
      %v4350 = vadd.f32 0.0, %v4349
      %4351 = vmatmul.bf16.gmra.mxu0 %v4276
      %v4352 = vpop.f32.mrf.mxu0
      %v4353 = vadd.f32 0.0, %v4352
      %v4354 = vpop.f32.mrf.mxu0
      %v4355 = vadd.f32 0.0, %v4354
      %4356 = vmatmul.bf16.gmra.mxu0 %v4279
      %v4357 = vpop.f32.mrf.mxu0
      %v4358 = vadd.f32 0.0, %v4357
      %v4359 = vpop.f32.mrf.mxu0
      %v4360 = vadd.f32 0.0, %v4359
      %4361 = vmatmul.bf16.gmra.mxu0 %v4282
      %v4362 = vpop.f32.mrf.mxu0
      %v4363 = vadd.f32 0.0, %v4362
      %v4364 = vpop.f32.mrf.mxu0
      %v4365 = vadd.f32 0.0, %v4364
      %4366 = vmatmul.bf16.gmra.mxu0 %v4285
      %v4367 = vpop.f32.mrf.mxu0
      %v4368 = vadd.f32 0.0, %v4367
      %v4369 = vpop.f32.mrf.mxu0
      %v4370 = vadd.f32 0.0, %v4369
      %4371 = vmatmul.bf16.gmra.mxu0 %v4288
      %v4372 = vpop.f32.mrf.mxu0
      %v4373 = vadd.f32 0.0, %v4372
      %v4374 = vpop.f32.mrf.mxu0
      %v4375 = vadd.f32 0.0, %v4374
      %4376 = vmatmul.bf16.gmra.mxu0 %v4291
      %v4377 = vpop.f32.mrf.mxu0
      %v4378 = vadd.f32 0.0, %v4377
      %v4379 = vpop.f32.mrf.mxu0
      %v4380 = vadd.f32 0.0, %v4379
      %4381 = vdwg.mxu0
      %v4382 = vadd.f32 %v4156, %v4303
      %v4383 = vadd.f32 %v4157, %v4305
      %v4384 = vadd.f32 %v4158, %v4308
      %v4385 = vadd.f32 %v4159, %v4310
      %v4386 = vadd.f32 %v4160, %v4313
      %v4387 = vadd.f32 %v4161, %v4315
      %v4388 = vadd.f32 %v4162, %v4318
      %v4389 = vadd.f32 %v4163, %v4320
      %v4390 = vadd.f32 %v4164, %v4323
      %v4391 = vadd.f32 %v4165, %v4325
      %v4392 = vadd.f32 %v4166, %v4328
      %v4393 = vadd.f32 %v4167, %v4330
      %v4394 = vadd.f32 %v4168, %v4333
      %v4395 = vadd.f32 %v4169, %v4335
      %v4396 = vadd.f32 %v4170, %v4338
      %v4397 = vadd.f32 %v4171, %v4340
      %v4398 = vadd.f32 %v4172, %v4343
      %v4399 = vadd.f32 %v4173, %v4345
      %v4400 = vadd.f32 %v4174, %v4348
      %v4401 = vadd.f32 %v4175, %v4350
      %v4402 = vadd.f32 %v4176, %v4353
      %v4403 = vadd.f32 %v4177, %v4355
      %v4404 = vadd.f32 %v4178, %v4358
      %v4405 = vadd.f32 %v4179, %v4360
      %v4406 = vadd.f32 %v4180, %v4363
      %v4407 = vadd.f32 %v4181, %v4365
      %v4408 = vadd.f32 %v4182, %v4368
      %v4409 = vadd.f32 %v4183, %v4370
      %v4410 = vadd.f32 %v4184, %v4373
      %v4411 = vadd.f32 %v4185, %v4375
      %v4412 = vadd.f32 %v4186, %v4378
      %v4413 = vadd.f32 %v4187, %v4380
      %v4414 = vld [vmem:[%s5] sm:$0x1]
      %v4416 = vperm.slane %v4414, 0
      %v4418 = vmul.f32 %v4382, %v4416
      %v4419 = vmul.f32 %v4383, %v4416
      %v4420 = vmul.f32 %v4384, %v4416
      %v4421 = vmul.f32 %v4385, %v4416
      %v4422 = vmul.f32 %v4386, %v4416
      %v4423 = vmul.f32 %v4387, %v4416
      %v4424 = vmul.f32 %v4388, %v4416
      %v4425 = vmul.f32 %v4389, %v4416
      %v4426 = vmul.f32 %v4390, %v4416
      %v4427 = vmul.f32 %v4391, %v4416
      %v4428 = vmul.f32 %v4392, %v4416
      %v4429 = vmul.f32 %v4393, %v4416
      %v4430 = vmul.f32 %v4394, %v4416
      %v4431 = vmul.f32 %v4395, %v4416
      %v4432 = vmul.f32 %v4396, %v4416
      %v4433 = vmul.f32 %v4397, %v4416
      %v4434 = vmul.f32 %v4398, %v4416
      %v4435 = vmul.f32 %v4399, %v4416
      %v4436 = vmul.f32 %v4400, %v4416
      %v4437 = vmul.f32 %v4401, %v4416
      %v4438 = vmul.f32 %v4402, %v4416
      %v4439 = vmul.f32 %v4403, %v4416
      %v4440 = vmul.f32 %v4404, %v4416
      %v4441 = vmul.f32 %v4405, %v4416
      %v4442 = vmul.f32 %v4406, %v4416
      %v4443 = vmul.f32 %v4407, %v4416
      %v4444 = vmul.f32 %v4408, %v4416
      %v4445 = vmul.f32 %v4409, %v4416
      %v4446 = vmul.f32 %v4410, %v4416
      %v4447 = vmul.f32 %v4411, %v4416
      %v4448 = vmul.f32 %v4412, %v4416
      %v4449 = vmul.f32 %v4413, %v4416
      %v4450 = vld [vmem:[%s6] sm:$0x1]
      %v4452 = vperm.slane %v4450, 0
      %v4454 = vadd.f32 %v4418, %v4452
      %v4455 = vadd.f32 %v4419, %v4452
      %v4456 = vadd.f32 %v4420, %v4452
      %v4457 = vadd.f32 %v4421, %v4452
      %v4458 = vadd.f32 %v4422, %v4452
      %v4459 = vadd.f32 %v4423, %v4452
      %v4460 = vadd.f32 %v4424, %v4452
      %v4461 = vadd.f32 %v4425, %v4452
      %v4462 = vadd.f32 %v4426, %v4452
      %v4463 = vadd.f32 %v4427, %v4452
      %v4464 = vadd.f32 %v4428, %v4452
      %v4465 = vadd.f32 %v4429, %v4452
      %v4466 = vadd.f32 %v4430, %v4452
      %v4467 = vadd.f32 %v4431, %v4452
      %v4468 = vadd.f32 %v4432, %v4452
      %v4469 = vadd.f32 %v4433, %v4452
      %v4470 = vadd.f32 %v4434, %v4452
      %v4471 = vadd.f32 %v4435, %v4452
      %v4472 = vadd.f32 %v4436, %v4452
      %v4473 = vadd.f32 %v4437, %v4452
      %v4474 = vadd.f32 %v4438, %v4452
      %v4475 = vadd.f32 %v4439, %v4452
      %v4476 = vadd.f32 %v4440, %v4452
      %v4477 = vadd.f32 %v4441, %v4452
      %v4478 = vadd.f32 %v4442, %v4452
      %v4479 = vadd.f32 %v4443, %v4452
      %v4480 = vadd.f32 %v4444, %v4452
      %v4481 = vadd.f32 %v4445, %v4452
      %v4482 = vadd.f32 %v4446, %v4452
      %v4483 = vadd.f32 %v4447, %v4452
      %v4484 = vadd.f32 %v4448, %v4452
      %v4485 = vadd.f32 %v4449, %v4452
      %v4486 = vld [vmem:[%s894 + $0x1] sm:$0xff]
      %v4487 = vld [vmem:[%s894 + $0x9] sm:$0xff]
      %v4488 = vld [vmem:[%s894 + $0x19] sm:$0xff]
      %v4489 = vld [vmem:[%s894 + $0x21] sm:$0xff]
      %v4490 = vld [vmem:[%s894 + $0x31] sm:$0xff]
      %v4491 = vld [vmem:[%s894 + $0x39] sm:$0xff]
      %v4492 = vld [vmem:[%s894 + $0x49] sm:$0xff]
      %v4493 = vld [vmem:[%s894 + $0x51] sm:$0xff]
      %v4494 = vld [vmem:[%s894 + $0x61] sm:$0xff]
      %v4495 = vld [vmem:[%s894 + $0x69] sm:$0xff]
      %v4496 = vld [vmem:[%s894 + $0x79] sm:$0xff]
      %v4497 = vld [vmem:[%s894 + $0x81] sm:$0xff]
      %v4498 = vld [vmem:[%s894 + $0x91] sm:$0xff]
      %v4499 = vld [vmem:[%s894 + $0x99] sm:$0xff]
      %v4500 = vld [vmem:[%s894 + $0xa9] sm:$0xff]
      %v4501 = vld [vmem:[%s894 + $0xb1] sm:$0xff]
      %v4502 = vld [vmem:[%s894 + $0xc1] sm:$0xff]
      %v4503 = vld [vmem:[%s894 + $0xc9] sm:$0xff]
      %v4504 = vld [vmem:[%s894 + $0xd9] sm:$0xff]
      %v4505 = vld [vmem:[%s894 + $0xe1] sm:$0xff]
      %v4506 = vld [vmem:[%s894 + $0xf1] sm:$0xff]
      %v4507 = vld [vmem:[%s894 + $0xf9] sm:$0xff]
      %v4508 = vld [vmem:[%s894 + $0x109] sm:$0xff]
      %v4509 = vld [vmem:[%s894 + $0x111] sm:$0xff]
      %v4510 = vld [vmem:[%s894 + $0x121] sm:$0xff]
      %v4511 = vld [vmem:[%s894 + $0x129] sm:$0xff]
      %v4512 = vld [vmem:[%s894 + $0x139] sm:$0xff]
      %v4513 = vld [vmem:[%s894 + $0x141] sm:$0xff]
      %v4514 = vld [vmem:[%s894 + $0x151] sm:$0xff]
      %v4515 = vld [vmem:[%s894 + $0x159] sm:$0xff]
      %v4516 = vld [vmem:[%s894 + $0x169] sm:$0xff]
      %v4517 = vld [vmem:[%s894 + $0x171] sm:$0xff]
      %v4518 = vadd.f32 %v4454, %v4486
      %v4519 = vadd.f32 %v4455, %v4487
      %v4520 = vadd.f32 %v4456, %v4488
      %v4521 = vadd.f32 %v4457, %v4489
      %v4522 = vadd.f32 %v4458, %v4490
      %v4523 = vadd.f32 %v4459, %v4491
      %v4524 = vadd.f32 %v4460, %v4492
      %v4525 = vadd.f32 %v4461, %v4493
      %v4526 = vadd.f32 %v4462, %v4494
      %v4527 = vadd.f32 %v4463, %v4495
      %v4528 = vadd.f32 %v4464, %v4496
      %v4529 = vadd.f32 %v4465, %v4497
      %v4530 = vadd.f32 %v4466, %v4498
      %v4531 = vadd.f32 %v4467, %v4499
      %v4532 = vadd.f32 %v4468, %v4500
      %v4533 = vadd.f32 %v4469, %v4501
      %v4534 = vadd.f32 %v4470, %v4502
      %v4535 = vadd.f32 %v4471, %v4503
      %v4536 = vadd.f32 %v4472, %v4504
      %v4537 = vadd.f32 %v4473, %v4505
      %v4538 = vadd.f32 %v4474, %v4506
      %v4539 = vadd.f32 %v4475, %v4507
      %v4540 = vadd.f32 %v4476, %v4508
      %v4541 = vadd.f32 %v4477, %v4509
      %v4542 = vadd.f32 %v4478, %v4510
      %v4543 = vadd.f32 %v4479, %v4511
      %v4544 = vadd.f32 %v4480, %v4512
      %v4545 = vadd.f32 %v4481, %v4513
      %v4546 = vadd.f32 %v4482, %v4514
      %v4547 = vadd.f32 %v4483, %v4515
      %v4548 = vadd.f32 %v4484, %v4516
      %v4549 = vadd.f32 %v4485, %v4517
      %v4550 = vmax.f32 %v4518, 0.0
      %v4551 = vmax.f32 %v4519, 0.0
      %v4552 = vmax.f32 %v4520, 0.0
      %v4553 = vmax.f32 %v4521, 0.0
      %v4554 = vmax.f32 %v4522, 0.0
      %v4555 = vmax.f32 %v4523, 0.0
      %v4556 = vmax.f32 %v4524, 0.0
      %v4557 = vmax.f32 %v4525, 0.0
      %v4558 = vmax.f32 %v4526, 0.0
      %v4559 = vmax.f32 %v4527, 0.0
      %v4560 = vmax.f32 %v4528, 0.0
      %v4561 = vmax.f32 %v4529, 0.0
      %v4562 = vmax.f32 %v4530, 0.0
      %v4563 = vmax.f32 %v4531, 0.0
      %v4564 = vmax.f32 %v4532, 0.0
      %v4565 = vmax.f32 %v4533, 0.0
      %v4566 = vmax.f32 %v4534, 0.0
      %v4567 = vmax.f32 %v4535, 0.0
      %v4568 = vmax.f32 %v4536, 0.0
      %v4569 = vmax.f32 %v4537, 0.0
      %v4570 = vmax.f32 %v4538, 0.0
      %v4571 = vmax.f32 %v4539, 0.0
      %v4572 = vmax.f32 %v4540, 0.0
      %v4573 = vmax.f32 %v4541, 0.0
      %v4574 = vmax.f32 %v4542, 0.0
      %v4575 = vmax.f32 %v4543, 0.0
      %v4576 = vmax.f32 %v4544, 0.0
      %v4577 = vmax.f32 %v4545, 0.0
      %v4578 = vmax.f32 %v4546, 0.0
      %v4579 = vmax.f32 %v4547, 0.0
      %v4580 = vmax.f32 %v4548, 0.0
      %v4581 = vmax.f32 %v4549, 0.0
      %4582 = vst.msk [vmem:[%s278] sm:$0xff] %vm387, %v4550
      %4583 = vst.msk [vmem:[%s278 + $0x8] sm:$0xff] %vm387, %v4551
      %4584 = vst.msk [vmem:[%s278 + $0x10] sm:$0xff] %vm387, %v4552
      %4585 = vst.msk [vmem:[%s278 + $0x18] sm:$0xff] %vm387, %v4553
      %4586 = vst.msk [vmem:[%s278 + $0x20] sm:$0xff] %vm387, %v4554
      %4587 = vst.msk [vmem:[%s278 + $0x28] sm:$0xff] %vm387, %v4555
      %4588 = vst.msk [vmem:[%s278 + $0x30] sm:$0xff] %vm387, %v4556
      %4589 = vst.msk [vmem:[%s278 + $0x38] sm:$0xff] %vm387, %v4557
      %4590 = vst.msk [vmem:[%s278 + $0x40] sm:$0xff] %vm387, %v4558
      %4591 = vst.msk [vmem:[%s278 + $0x48] sm:$0xff] %vm387, %v4559
      %4592 = vst.msk [vmem:[%s278 + $0x50] sm:$0xff] %vm387, %v4560
      %4593 = vst.msk [vmem:[%s278 + $0x58] sm:$0xff] %vm387, %v4561
      %4594 = vst.msk [vmem:[%s278 + $0x60] sm:$0xff] %vm387, %v4562
      %4595 = vst.msk [vmem:[%s278 + $0x68] sm:$0xff] %vm387, %v4563
      %4596 = vst.msk [vmem:[%s278 + $0x70] sm:$0xff] %vm387, %v4564
      %4597 = vst.msk [vmem:[%s278 + $0x78] sm:$0xff] %vm387, %v4565
      %4598 = vst.msk [vmem:[%s278 + $0x80] sm:$0xff] %vm387, %v4566
      %4599 = vst.msk [vmem:[%s278 + $0x88] sm:$0xff] %vm387, %v4567
      %4600 = vst.msk [vmem:[%s278 + $0x90] sm:$0xff] %vm387, %v4568
      %4601 = vst.msk [vmem:[%s278 + $0x98] sm:$0xff] %vm387, %v4569
      %4602 = vst.msk [vmem:[%s278 + $0xa0] sm:$0xff] %vm387, %v4570
      %4603 = vst.msk [vmem:[%s278 + $0xa8] sm:$0xff] %vm387, %v4571
      %4604 = vst.msk [vmem:[%s278 + $0xb0] sm:$0xff] %vm387, %v4572
      %4605 = vst.msk [vmem:[%s278 + $0xb8] sm:$0xff] %vm387, %v4573
      %4606 = vst.msk [vmem:[%s278 + $0xc0] sm:$0xff] %vm387, %v4574
      %4607 = vst.msk [vmem:[%s278 + $0xc8] sm:$0xff] %vm387, %v4575
      %4608 = vst.msk [vmem:[%s278 + $0xd0] sm:$0xff] %vm387, %v4576
      %4609 = vst.msk [vmem:[%s278 + $0xd8] sm:$0xff] %vm387, %v4577
      %4610 = vst.msk [vmem:[%s278 + $0xe0] sm:$0xff] %vm387, %v4578
      %4611 = vst.msk [vmem:[%s278 + $0xe8] sm:$0xff] %vm387, %v4579
      %4612 = vst.msk [vmem:[%s278 + $0xf0] sm:$0xff] %vm387, %v4580
      %4613 = vst.msk [vmem:[%s278 + $0xf8] sm:$0xff] %vm387, %v4581
      %p4614 = scmp.lt.s32.totalorder %s18, 1
      %s4615 = scalar_select %p4614, %s18, 1
      %s4616 = smul.addr %s4615, 32
      %s4617 = smul.addr %s4616, 8
      %s4618 = scalar_lea.vmem %s7, %s4617
      // Predicated region
      $region49: #{tpu_custom_call.1} parent=47 // pred_check
        %p4619 = pneg %p188
      $region50: #{tpu_custom_call.1} parent=47 // pred_check_branch
        %4621 = sbr.rel (%p4619) target = $region52
      $region51: #{tpu_custom_call.1} parent=47 // pred_region
        _
      $region52: #{tpu_custom_call.1} parent=47 // pred_fallthru
        _
    $region48: #{tpu_custom_call.1} parent=5 // pred_fallthru
      _
    %p4622 = scmp.le.s32.totalorder 2, %s13
    // Predicated region
    $region53: #{tpu_custom_call.1} parent=5 // pred_check
      %p4623 = pneg %p4622
    $region54: #{tpu_custom_call.1} parent=5 // pred_check_branch
      %4625 = sbr.rel (%p4623) target = $region56
    $region55: #{tpu_custom_call.1} parent=5 // pred_region
      %s4626 = ssub.s32 %s13, 2
      // Predicated region
      $region57: #{tpu_custom_call.1} parent=55 // pred_check
        %p4627 = pneg %p194
      $region58: #{tpu_custom_call.1} parent=55 // pred_check_branch
        %4629 = sbr.rel (%p4627) target = $region60
      $region59: #{tpu_custom_call.1} parent=55 // pred_region
        %p4630 = scmp.lt.s32.totalorder %s19, 1
        %s4631 = scalar_select %p4630, %s19, 1
        %s4632 = smul.addr %s4631, 32
        %s4633 = smul.addr %s4632, 8
        %s4634 = scalar_lea.vmem %s7, %s4633
      $region60: #{tpu_custom_call.1} parent=55 // pred_fallthru
        _
    $region56: #{tpu_custom_call.1} parent=5 // pred_fallthru
      _
  $region6: #{tpu_custom_call.1} parent=0 // loop_footer
    %s17 = sadd.s32 1, %s13
  $region7: #{tpu_custom_call.1} parent=0 // loop_footer_branch
    %12 = sbr.rel target = $region3
  $region8: #{tpu_custom_call.1} parent=0 // loop_exit
    _

</llo_original>
